<compile_context>
chip_gen: v5e
topology: v5e:2x2
jax: 0.10.0
libtpu: 0.0.40
codegen_flags: <defaults>
</compile_context>

<pallas_src>
import jax
import jax.numpy as jnp
from jax.experimental import pallas as pl
from jax.experimental.pallas import tpu as pltpu

HIDDEN = 768  # fixed by the module: nn.Linear(768, 768, bias=False)


def prepare_weight(weight, dtype=None):
    """One-time parameter prep (outside the hot path).

    weight: (out_features, in_features) = (N, K), PyTorch nn.Linear convention.
    Returns the (K, N) transposed weight, optionally cast (e.g. to bfloat16 to halve the
    dominant HBM weight fetch on v5e/v6e).
    """
    w_t = jnp.asarray(weight).T
    if dtype is not None:
        w_t = w_t.astype(dtype)
    return w_t


def _linear_kernel(x_ref, w_ref, o_ref):
    x = x_ref[...]
    w = w_ref[...]
    if w.dtype == jnp.bfloat16 and x.dtype == jnp.float32:
        # Keep the MXU on its native bf16 path when the bf16-weight option is used.
        x = x.astype(jnp.bfloat16)
    o_ref[...] = jnp.dot(x, w, preferred_element_type=jnp.float32).astype(o_ref.dtype)


def _tensorcores_per_device():
    """Best-effort count of TensorCores per JAX device (2 on v7x, 1 on v5e/v6e)."""
    try:
        dev = jax.devices()[0]
        kind = str(getattr(dev, "device_kind", "")).lower()
        if "v7" in kind or "7x" in kind:
            return 2
        num_cores = getattr(dev, "num_cores", None)
        if isinstance(num_cores, int) and num_cores > 1:
            return num_cores
    except Exception:
        pass
    return 1


def linear_transform(x, weight_t, *, tm=None, n_split=None):
    """y = x @ weight_t with weight_t = W.T of shape (K, N); i.e. PyTorch nn.Linear(bias=False).

    Run the PyTorch-layout weight through `prepare_weight` once (parameter prep), not per call.
    """
    orig_shape = x.shape
    K = orig_shape[-1]
    K_w, N = weight_t.shape
    assert K == K_w, f"feature mismatch: x has {K}, weight expects {K_w}"

    x2d = x.reshape(-1, K)
    M = x2d.shape[0]

    # Single-shot over M by default (one step per TensorCore, weight resident in VMEM).
    if tm is None:
        tm = M
    assert M % tm == 0, f"tm={tm} must divide M={M}"
    sublane = 8 if jnp.dtype(x2d.dtype).itemsize == 4 else 16
    assert tm == M or tm % sublane == 0, (
        f"tm={tm} must be a multiple of {sublane} (dtype {x2d.dtype}) or equal M={M}")

    # Split N across TensorCores only where there is more than one (v7x). Extra grid steps on
    # single-TC chips are pure per-step overhead (~0.35 us each), so keep a single step there.
    if n_split is None:
        n_split = _tensorcores_per_device()
    if n_split < 1 or N % (128 * n_split) != 0:
        n_split = 1
    tn = N // n_split

    grid = (M // tm, n_split)
    cost = pl.CostEstimate(
        flops=2 * M * K * N,
        transcendentals=0,
        bytes_accessed=(M * K * jnp.dtype(x2d.dtype).itemsize
                        + K * N * jnp.dtype(weight_t.dtype).itemsize
                        + M * N * jnp.dtype(x2d.dtype).itemsize),
    )

    def _call(single_buffer_weight):
        w_kwargs = {}
        if single_buffer_weight:
            # The weight block is grid-invariant per core, so its second pipeline buffer
            # (another 2.25 MiB of VMEM) is never used.
            w_kwargs["pipeline_mode"] = pl.Buffered(1)
        return pl.pallas_call(
            _linear_kernel,
            out_shape=jax.ShapeDtypeStruct((M, N), x.dtype),
            grid_spec=pltpu.PrefetchScalarGridSpec(
                num_scalar_prefetch=0,
                grid=grid,
                in_specs=[
                    # x tile: (tm, K) — full K, no reduction grid axis.
                    pl.BlockSpec((tm, K), lambda i, j: (i, 0)),
                    # weight: (K, tn) column slab, canonical (K, N) orientation for the MXU.
                    pl.BlockSpec((K, tn), lambda i, j: (0, j), **w_kwargs),
                ],
                # Lane-dense output slab: tn in {768, 384}, multiple of 128 -> unmasked stores.
                out_specs=pl.BlockSpec((tm, tn), lambda i, j: (i, j)),
            ),
            compiler_params=pltpu.CompilerParams(
                # M tiles and N halves are independent; on v7x the N axis shards across the
                # two TensorCores (on single-TC chips the grid is a single step anyway).
                dimension_semantics=("parallel", "parallel"),
            ),
            cost_estimate=cost,
        )(x2d, weight_t)

    try:
        out = _call(single_buffer_weight=True)
    except Exception:
        # pipeline_mode / Buffered(1) unsupported on this jax version: the double-buffered
        # weight still fits VMEM comfortably (~4.7 MiB total), so fall back cleanly.
        out = _call(single_buffer_weight=False)

    return out.reshape(*orig_shape[:-1], N)


if __name__ == "__main__":
    key = jax.random.PRNGKey(0)
    kx, kw = jax.random.split(key)

    # Small shapes consistent with the module: batch=2, seq=8, hidden=768 (fixed by nn.Linear).
    batch, seq = 2, 8
    x = jax.random.normal(kx, (batch, seq, HIDDEN), dtype=jnp.float32)

    # PyTorch-layout weight (out_features, in_features), U(-1/sqrt(K), 1/sqrt(K)) like nn.Linear.
    bound = 1.0 / jnp.sqrt(jnp.float32(HIDDEN))
    weight = jax.random.uniform(
        kw, (HIDDEN, HIDDEN), dtype=jnp.float32, minval=-bound, maxval=bound
    )

    # One-time parameter prep: transpose to (K, N) so the kernel runs a canonical MXU dot.
    # (Pass dtype=jnp.bfloat16 here to halve the weight HBM fetch on v5e/v6e; widen tolerances.)
    weight_t = prepare_weight(weight)

    y = linear_transform(x, weight_t)
    y = jax.block_until_ready(y)

    # Sanity check against plain JAX reference (nn.Linear: y = x @ W^T).
    y_ref = jnp.einsum("bsk,nk->bsn", x, weight)
    assert y.shape == (batch, seq, HIDDEN)
    assert jnp.allclose(y, y_ref, atol=1e-4, rtol=1e-4)

    print("KERNEL_OK")
</pallas_src>

<mosaic_0001>
module attributes {stable_mosaic.version = 11 : i64} {
  func.func @_linear_kernel(%arg0: i32, %arg1: i32, %arg2: memref<16x768xf32, #tpu.memory_space<vmem>>, %arg3: memref<768x768xf32, #tpu.memory_space<vmem>>, %arg4: memref<16x768xf32, #tpu.memory_space<vmem>>) attributes {dimension_semantics = [#tpu.dimension_semantics<parallel>, #tpu.dimension_semantics<parallel>], iteration_bounds = array<i64: 1, 1>, scalar_prefetch = 0 : i64, scratch_operands = 0 : i64, tpu.core_type = #tpu.core_type<tc>, window_params = [{transform_indices = @transform_0, window_bounds = array<i64: 16, 768>}, {pipeline_mode = #tpu.pipeline_mode<synchronous>, transform_indices = @transform_1, window_bounds = array<i64: 768, 768>}, {transform_indices = @transform_2, window_bounds = array<i64: 16, 768>}]} {
    %c0 = arith.constant 0 : index
    %c0_0 = arith.constant 0 : index
    %0 = vector.load %arg2[%c0, %c0_0] : memref<16x768xf32, #tpu.memory_space<vmem>>, vector<16x768xf32>
    %c0_1 = arith.constant 0 : index
    %c0_2 = arith.constant 0 : index
    %1 = vector.load %arg3[%c0_1, %c0_2] : memref<768x768xf32, #tpu.memory_space<vmem>>, vector<768x768xf32>
    %cst = arith.constant dense<0.000000e+00> : vector<16x768xf32>
    %2 = tpu.matmul %0, %1, %cst {dimension_numbers = #tpu.dot_dimension_numbers<[1], [0], [0], [1], [0, 0, 1, 1], [], []>} : vector<16x768xf32>, vector<768x768xf32>, vector<16x768xf32> -> vector<16x768xf32>
    %c0_3 = arith.constant 0 : index
    %c0_4 = arith.constant 0 : index
    %3 = vector.load %arg4[%c0_3, %c0_4] : memref<16x768xf32, #tpu.memory_space<vmem>>, vector<16x768xf32>
    tpu.vector_store %arg4[%c0_3, %c0_4], %2 {strides = array<i32>} : memref<16x768xf32, #tpu.memory_space<vmem>>, vector<16x768xf32>,
    return
  }
  func.func @transform_0(%arg0: i32, %arg1: i32) -> (i32, i32) {
    %c0_i32 = arith.constant 0 : i32
    %c0_i32_0 = arith.constant 0 : i32
    return %arg0, %c0_i32 : i32, i32
  }
  func.func @transform_1(%arg0: i32, %arg1: i32) -> (i32, i32) {
    %c0_i32 = arith.constant 0 : i32
    %c0_i32_0 = arith.constant 0 : i32
    return %c0_i32, %arg1 : i32, i32
  }
  func.func @transform_2(%arg0: i32, %arg1: i32) -> (i32, i32) {
    %c0_i32 = arith.constant 0 : i32
    return %arg0, %arg1 : i32, i32
  }
}

module attributes {stable_mosaic.version = 11 : i64} {
  func.func @_linear_kernel(%arg0: i32, %arg1: i32, %arg2: memref<16x768xf32, #tpu.memory_space<vmem>>, %arg3: memref<768x768xf32, #tpu.memory_space<vmem>>, %arg4: memref<16x768xf32, #tpu.memory_space<vmem>>) attributes {dimension_semantics = [#tpu.dimension_semantics<parallel>, #tpu.dimension_semantics<parallel>], iteration_bounds = array<i64: 1, 1>, scalar_prefetch = 0 : i64, scratch_operands = 0 : i64, tpu.core_type = #tpu.core_type<tc>, window_params = [{transform_indices = @transform_0, window_bounds = array<i64: 16, 768>}, {transform_indices = @transform_1, window_bounds = array<i64: 768, 768>}, {transform_indices = @transform_2, window_bounds = array<i64: 16, 768>}]} {
    %c0 = arith.constant 0 : index
    %c0_0 = arith.constant 0 : index
    %0 = vector.load %arg2[%c0, %c0_0] : memref<16x768xf32, #tpu.memory_space<vmem>>, vector<16x768xf32>
    %c0_1 = arith.constant 0 : index
    %c0_2 = arith.constant 0 : index
    %1 = vector.load %arg3[%c0_1, %c0_2] : memref<768x768xf32, #tpu.memory_space<vmem>>, vector<768x768xf32>
    %cst = arith.constant dense<0.000000e+00> : vector<16x768xf32>
    %2 = tpu.matmul %0, %1, %cst {dimension_numbers = #tpu.dot_dimension_numbers<[1], [0], [0], [1], [0, 0, 1, 1], [], []>} : vector<16x768xf32>, vector<768x768xf32>, vector<16x768xf32> -> vector<16x768xf32>
    %c0_3 = arith.constant 0 : index
    %c0_4 = arith.constant 0 : index
    %3 = vector.load %arg4[%c0_3, %c0_4] : memref<16x768xf32, #tpu.memory_space<vmem>>, vector<16x768xf32>
    tpu.vector_store %arg4[%c0_3, %c0_4], %2 {strides = array<i32>} : memref<16x768xf32, #tpu.memory_space<vmem>>, vector<16x768xf32>,
    return
  }
  func.func @transform_0(%arg0: i32, %arg1: i32) -> (i32, i32) {
    %c0_i32 = arith.constant 0 : i32
    %c0_i32_0 = arith.constant 0 : i32
    return %arg0, %c0_i32 : i32, i32
  }
  func.func @transform_1(%arg0: i32, %arg1: i32) -> (i32, i32) {
    %c0_i32 = arith.constant 0 : i32
    %c0_i32_0 = arith.constant 0 : i32
    return %c0_i32, %arg1 : i32, i32
  }
  func.func @transform_2(%arg0: i32, %arg1: i32) -> (i32, i32) {
    %c0_i32 = arith.constant 0 : i32
    return %arg0, %arg1 : i32, i32
  }
}

</mosaic_0001>

<llo_original>
// kernel: tpu_custom_call.1
$region0: #{tpu_custom_call.1}
  #allocation0 [shape = 'u32[]', space=smem, size = 0x4, offset = 0x4, fixed_abs, tag = 'smem constant byte address 0x4 - core index']
  #allocation1 [shape = 'u32[72,128]{1,0:T(1,128)}', space=vmem, size = 0x9000, scoped, tag = 'internal scratch']
  %s0 = inlined_call_operand.hbm [shape: f32[16,768], index: 0, kind: input, shape index: {}]
  %s1 = inlined_call_operand.hbm [shape: f32[768,768], index: 1, kind: input, shape index: {}]
  %s2 = inlined_call_operand.hbm [shape: f32[16,768], index: 2, kind: output, shape index: {}]
  %s3 = sld [smem:[#allocation0]]
  $region26: #{tpu_custom_call.1} parent=0
    _
  %s5 = ssub.s32 1, %s3
  %s6 = scalar_select 0, %s5, %s3
  $region1: #{tpu_custom_call.1} parent=0
    #allocation2 [shape = 'u8[49152]{0}', space=vmem, size = 0xc000, scoped, tag = 'input window, operand 0, single buffered']
    #allocation3 [shape = 's32[1]{0}', space=sflag, size = 0x4, scoped, tag = 'scoped memory for tpu_custom_call.1']
    #allocation4 [shape = 's32[1]{0}', space=sflag, size = 0x4, scoped, tag = 'scoped memory for tpu_custom_call.1']
    #allocation5 [shape = 'u8[2359296]{0}', space=vmem, size = 0x240000, scoped, tag = 'input window, operand 1, single buffered']
    #allocation6 [shape = 's32[1]{0}', space=sflag, size = 0x4, scoped, tag = 'scoped memory for tpu_custom_call.1']
    #allocation7 [shape = 'u8[49152]{0}', space=vmem, size = 0xc000, scoped, tag = 'output window, operand 0, single buffered']
    %7 = vsyncpa [#allocation3], 0
    %8 = vsyncpa [#allocation6], 0
    %9 = vsyncpa [#allocation4], 0
    // Predicated region
    $region2: #{tpu_custom_call.1} parent=1 // pred_check
      _
    $region3: #{tpu_custom_call.1} parent=1 // pred_check_branch
      %11 = sbr.rel (0) target = $region5
    $region4: #{tpu_custom_call.1} parent=1 // pred_region
      %13 = vsyncadd [#allocation3], 0
      %s14 = sshll.u32 %s0, 4
      %s15 = int_to_ptr.hbm [resolvable:$true] %s14
      %s16 = sshll.u32 [#allocation2], 4
      %s17 = int_to_ptr.vmem [resolvable:$true] %s16
      %22 = dma.hbm_to_vmem [thread:$0]  %s15, 1536, %s17, [#allocation3], 768, 768, 48
    $region5: #{tpu_custom_call.1} parent=1 // pred_fallthru
      _
    // Predicated region
    $region6: #{tpu_custom_call.1} parent=1 // pred_check
      _
    $region7: #{tpu_custom_call.1} parent=1 // pred_check_branch
      %24 = sbr.rel (0) target = $region9
    $region8: #{tpu_custom_call.1} parent=1 // pred_region
      %26 = vsyncadd [#allocation6], 0
      %s27 = sshll.u32 %s1, 4
      %s28 = int_to_ptr.hbm [resolvable:$true] %s27
      %s29 = sshll.u32 [#allocation5], 4
      %s30 = int_to_ptr.vmem [resolvable:$true] %s29
      %35 = dma.hbm_to_vmem [thread:$0]  %s28, 73728, %s30, [#allocation6], 768, 768, 48
    $region9: #{tpu_custom_call.1} parent=1 // pred_fallthru
      _
    // Predicated region
    $region10: #{tpu_custom_call.1} parent=1 // pred_check
      _
    $region11: #{tpu_custom_call.1} parent=1 // pred_check_branch
      %37 = sbr.rel (0) target = $region13
    $region12: #{tpu_custom_call.1} parent=1 // pred_region
      %39 = dma.done [#allocation3], 1536
    $region13: #{tpu_custom_call.1} parent=1 // pred_fallthru
      _
    // Predicated region
    $region14: #{tpu_custom_call.1} parent=1 // pred_check
      _
    $region15: #{tpu_custom_call.1} parent=1 // pred_check_branch
      %41 = sbr.rel (0) target = $region17
    $region16: #{tpu_custom_call.1} parent=1 // pred_region
      %43 = dma.done [#allocation6], 73728
    $region17: #{tpu_custom_call.1} parent=1 // pred_fallthru
      _
    %v44 = vld [vmem:[#allocation2] sm:$0xff]
    %v45 = vld [vmem:[#allocation2 + $0x8] sm:$0xff]
    %v46 = vld [vmem:[#allocation2 + $0x10] sm:$0xff]
    %v47 = vld [vmem:[#allocation2 + $0x18] sm:$0xff]
    %v48 = vld [vmem:[#allocation2 + $0x20] sm:$0xff]
    %v49 = vld [vmem:[#allocation2 + $0x28] sm:$0xff]
    %v50 = vld [vmem:[#allocation2 + $0x30] sm:$0xff]
    %v51 = vld [vmem:[#allocation2 + $0x38] sm:$0xff]
    %v52 = vld [vmem:[#allocation2 + $0x40] sm:$0xff]
    %v53 = vld [vmem:[#allocation2 + $0x48] sm:$0xff]
    %v54 = vld [vmem:[#allocation2 + $0x50] sm:$0xff]
    %v55 = vld [vmem:[#allocation2 + $0x58] sm:$0xff]
    %v56 = vld [vmem:[#allocation5] sm:$0xff]
    %v57 = vld [vmem:[#allocation5 + $0x8] sm:$0xff]
    %v58 = vld [vmem:[#allocation5 + $0x10] sm:$0xff]
    %v59 = vld [vmem:[#allocation5 + $0x18] sm:$0xff]
    %v60 = vld [vmem:[#allocation5 + $0x20] sm:$0xff]
    %v61 = vld [vmem:[#allocation5 + $0x28] sm:$0xff]
    %v62 = vld [vmem:[#allocation5 + $0x30] sm:$0xff]
    %v63 = vld [vmem:[#allocation5 + $0x38] sm:$0xff]
    %v64 = vld [vmem:[#allocation5 + $0x40] sm:$0xff]
    %v65 = vld [vmem:[#allocation5 + $0x48] sm:$0xff]
    %v66 = vld [vmem:[#allocation5 + $0x50] sm:$0xff]
    %v67 = vld [vmem:[#allocation5 + $0x58] sm:$0xff]
    %v68 = vld [vmem:[#allocation5 + $0x60] sm:$0xff]
    %v69 = vld [vmem:[#allocation5 + $0x68] sm:$0xff]
    %v70 = vld [vmem:[#allocation5 + $0x70] sm:$0xff]
    %v71 = vld [vmem:[#allocation5 + $0x78] sm:$0xff]
    %v72 = vld [vmem:[#allocation5 + $0x80] sm:$0xff]
    %v73 = vld [vmem:[#allocation5 + $0x88] sm:$0xff]
    %v74 = vld [vmem:[#allocation5 + $0x90] sm:$0xff]
    %v75 = vld [vmem:[#allocation5 + $0x98] sm:$0xff]
    %v76 = vld [vmem:[#allocation5 + $0xa0] sm:$0xff]
    %v77 = vld [vmem:[#allocation5 + $0xa8] sm:$0xff]
    %v78 = vld [vmem:[#allocation5 + $0xb0] sm:$0xff]
    %v79 = vld [vmem:[#allocation5 + $0xb8] sm:$0xff]
    %v80 = vld [vmem:[#allocation5 + $0xc0] sm:$0xff]
    %v81 = vld [vmem:[#allocation5 + $0xc8] sm:$0xff]
    %v82 = vld [vmem:[#allocation5 + $0xd0] sm:$0xff]
    %v83 = vld [vmem:[#allocation5 + $0xd8] sm:$0xff]
    %v84 = vld [vmem:[#allocation5 + $0xe0] sm:$0xff]
    %v85 = vld [vmem:[#allocation5 + $0xe8] sm:$0xff]
    %v86 = vld [vmem:[#allocation5 + $0xf0] sm:$0xff]
    %v87 = vld [vmem:[#allocation5 + $0xf8] sm:$0xff]
    %v88 = vld [vmem:[#allocation5 + $0x100] sm:$0xff]
    %v89 = vld [vmem:[#allocation5 + $0x108] sm:$0xff]
    %v90 = vld [vmem:[#allocation5 + $0x110] sm:$0xff]
    %v91 = vld [vmem:[#allocation5 + $0x118] sm:$0xff]
    %v92 = vld [vmem:[#allocation5 + $0x120] sm:$0xff]
    %v93 = vld [vmem:[#allocation5 + $0x128] sm:$0xff]
    %v94 = vld [vmem:[#allocation5 + $0x130] sm:$0xff]
    %v95 = vld [vmem:[#allocation5 + $0x138] sm:$0xff]
    %v96 = vld [vmem:[#allocation5 + $0x140] sm:$0xff]
    %v97 = vld [vmem:[#allocation5 + $0x148] sm:$0xff]
    %v98 = vld [vmem:[#allocation5 + $0x150] sm:$0xff]
    %v99 = vld [vmem:[#allocation5 + $0x158] sm:$0xff]
    %v100 = vld [vmem:[#allocation5 + $0x160] sm:$0xff]
    %v101 = vld [vmem:[#allocation5 + $0x168] sm:$0xff]
    %v102 = vld [vmem:[#allocation5 + $0x170] sm:$0xff]
    %v103 = vld [vmem:[#allocation5 + $0x178] sm:$0xff]
    %v104 = vld [vmem:[#allocation5 + $0x180] sm:$0xff]
    %v105 = vld [vmem:[#allocation5 + $0x188] sm:$0xff]
    %v106 = vld [vmem:[#allocation5 + $0x190] sm:$0xff]
    %v107 = vld [vmem:[#allocation5 + $0x198] sm:$0xff]
    %v108 = vld [vmem:[#allocation5 + $0x1a0] sm:$0xff]
    %v109 = vld [vmem:[#allocation5 + $0x1a8] sm:$0xff]
    %v110 = vld [vmem:[#allocation5 + $0x1b0] sm:$0xff]
    %v111 = vld [vmem:[#allocation5 + $0x1b8] sm:$0xff]
    %v112 = vld [vmem:[#allocation5 + $0x1c0] sm:$0xff]
    %v113 = vld [vmem:[#allocation5 + $0x1c8] sm:$0xff]
    %v114 = vld [vmem:[#allocation5 + $0x1d0] sm:$0xff]
    %v115 = vld [vmem:[#allocation5 + $0x1d8] sm:$0xff]
    %v116 = vld [vmem:[#allocation5 + $0x1e0] sm:$0xff]
    %v117 = vld [vmem:[#allocation5 + $0x1e8] sm:$0xff]
    %v118 = vld [vmem:[#allocation5 + $0x1f0] sm:$0xff]
    %v119 = vld [vmem:[#allocation5 + $0x1f8] sm:$0xff]
    %v120 = vld [vmem:[#allocation5 + $0x200] sm:$0xff]
    %v121 = vld [vmem:[#allocation5 + $0x208] sm:$0xff]
    %v122 = vld [vmem:[#allocation5 + $0x210] sm:$0xff]
    %v123 = vld [vmem:[#allocation5 + $0x218] sm:$0xff]
    %v124 = vld [vmem:[#allocation5 + $0x220] sm:$0xff]
    %v125 = vld [vmem:[#allocation5 + $0x228] sm:$0xff]
    %v126 = vld [vmem:[#allocation5 + $0x230] sm:$0xff]
    %v127 = vld [vmem:[#allocation5 + $0x238] sm:$0xff]
    %v128 = vld [vmem:[#allocation5 + $0x240] sm:$0xff]
    %v129 = vld [vmem:[#allocation5 + $0x248] sm:$0xff]
    %v130 = vld [vmem:[#allocation5 + $0x250] sm:$0xff]
    %v131 = vld [vmem:[#allocation5 + $0x258] sm:$0xff]
    %v132 = vld [vmem:[#allocation5 + $0x260] sm:$0xff]
    %v133 = vld [vmem:[#allocation5 + $0x268] sm:$0xff]
    %v134 = vld [vmem:[#allocation5 + $0x270] sm:$0xff]
    %v135 = vld [vmem:[#allocation5 + $0x278] sm:$0xff]
    %v136 = vld [vmem:[#allocation5 + $0x280] sm:$0xff]
    %v137 = vld [vmem:[#allocation5 + $0x288] sm:$0xff]
    %v138 = vld [vmem:[#allocation5 + $0x290] sm:$0xff]
    %v139 = vld [vmem:[#allocation5 + $0x298] sm:$0xff]
    %v140 = vld [vmem:[#allocation5 + $0x2a0] sm:$0xff]
    %v141 = vld [vmem:[#allocation5 + $0x2a8] sm:$0xff]
    %v142 = vld [vmem:[#allocation5 + $0x2b0] sm:$0xff]
    %v143 = vld [vmem:[#allocation5 + $0x2b8] sm:$0xff]
    %v144 = vld [vmem:[#allocation5 + $0x2c0] sm:$0xff]
    %v145 = vld [vmem:[#allocation5 + $0x2c8] sm:$0xff]
    %v146 = vld [vmem:[#allocation5 + $0x2d0] sm:$0xff]
    %v147 = vld [vmem:[#allocation5 + $0x2d8] sm:$0xff]
    %v148 = vld [vmem:[#allocation5 + $0x2e0] sm:$0xff]
    %v149 = vld [vmem:[#allocation5 + $0x2e8] sm:$0xff]
    %v150 = vld [vmem:[#allocation5 + $0x2f0] sm:$0xff]
    %v151 = vld [vmem:[#allocation5 + $0x2f8] sm:$0xff]
    %v152 = vld [vmem:[#allocation5 + $0x300] sm:$0xff]
    %v153 = vld [vmem:[#allocation5 + $0x308] sm:$0xff]
    %v154 = vld [vmem:[#allocation5 + $0x310] sm:$0xff]
    %v155 = vld [vmem:[#allocation5 + $0x318] sm:$0xff]
    %v156 = vld [vmem:[#allocation5 + $0x320] sm:$0xff]
    %v157 = vld [vmem:[#allocation5 + $0x328] sm:$0xff]
    %v158 = vld [vmem:[#allocation5 + $0x330] sm:$0xff]
    %v159 = vld [vmem:[#allocation5 + $0x338] sm:$0xff]
    %v160 = vld [vmem:[#allocation5 + $0x340] sm:$0xff]
    %v161 = vld [vmem:[#allocation5 + $0x348] sm:$0xff]
    %v162 = vld [vmem:[#allocation5 + $0x350] sm:$0xff]
    %v163 = vld [vmem:[#allocation5 + $0x358] sm:$0xff]
    %v164 = vld [vmem:[#allocation5 + $0x360] sm:$0xff]
    %v165 = vld [vmem:[#allocation5 + $0x368] sm:$0xff]
    %v166 = vld [vmem:[#allocation5 + $0x370] sm:$0xff]
    %v167 = vld [vmem:[#allocation5 + $0x378] sm:$0xff]
    %v168 = vld [vmem:[#allocation5 + $0x380] sm:$0xff]
    %v169 = vld [vmem:[#allocation5 + $0x388] sm:$0xff]
    %v170 = vld [vmem:[#allocation5 + $0x390] sm:$0xff]
    %v171 = vld [vmem:[#allocation5 + $0x398] sm:$0xff]
    %v172 = vld [vmem:[#allocation5 + $0x3a0] sm:$0xff]
    %v173 = vld [vmem:[#allocation5 + $0x3a8] sm:$0xff]
    %v174 = vld [vmem:[#allocation5 + $0x3b0] sm:$0xff]
    %v175 = vld [vmem:[#allocation5 + $0x3b8] sm:$0xff]
    %v176 = vld [vmem:[#allocation5 + $0x3c0] sm:$0xff]
    %v177 = vld [vmem:[#allocation5 + $0x3c8] sm:$0xff]
    %v178 = vld [vmem:[#allocation5 + $0x3d0] sm:$0xff]
    %v179 = vld [vmem:[#allocation5 + $0x3d8] sm:$0xff]
    %v180 = vld [vmem:[#allocation5 + $0x3e0] sm:$0xff]
    %v181 = vld [vmem:[#allocation5 + $0x3e8] sm:$0xff]
    %v182 = vld [vmem:[#allocation5 + $0x3f0] sm:$0xff]
    %v183 = vld [vmem:[#allocation5 + $0x3f8] sm:$0xff]
    %v184 = vld [vmem:[#allocation5 + $0x400] sm:$0xff]
    %v185 = vld [vmem:[#allocation5 + $0x408] sm:$0xff]
    %v186 = vld [vmem:[#allocation5 + $0x410] sm:$0xff]
    %v187 = vld [vmem:[#allocation5 + $0x418] sm:$0xff]
    %v188 = vld [vmem:[#allocation5 + $0x420] sm:$0xff]
    %v189 = vld [vmem:[#allocation5 + $0x428] sm:$0xff]
    %v190 = vld [vmem:[#allocation5 + $0x430] sm:$0xff]
    %v191 = vld [vmem:[#allocation5 + $0x438] sm:$0xff]
    %v192 = vld [vmem:[#allocation5 + $0x440] sm:$0xff]
    %v193 = vld [vmem:[#allocation5 + $0x448] sm:$0xff]
    %v194 = vld [vmem:[#allocation5 + $0x450] sm:$0xff]
    %v195 = vld [vmem:[#allocation5 + $0x458] sm:$0xff]
    %v196 = vld [vmem:[#allocation5 + $0x460] sm:$0xff]
    %v197 = vld [vmem:[#allocation5 + $0x468] sm:$0xff]
    %v198 = vld [vmem:[#allocation5 + $0x470] sm:$0xff]
    %v199 = vld [vmem:[#allocation5 + $0x478] sm:$0xff]
    %v200 = vld [vmem:[#allocation5 + $0x480] sm:$0xff]
    %v201 = vld [vmem:[#allocation5 + $0x488] sm:$0xff]
    %v202 = vld [vmem:[#allocation5 + $0x490] sm:$0xff]
    %v203 = vld [vmem:[#allocation5 + $0x498] sm:$0xff]
    %v204 = vld [vmem:[#allocation5 + $0x4a0] sm:$0xff]
    %v205 = vld [vmem:[#allocation5 + $0x4a8] sm:$0xff]
    %v206 = vld [vmem:[#allocation5 + $0x4b0] sm:$0xff]
    %v207 = vld [vmem:[#allocation5 + $0x4b8] sm:$0xff]
    %v208 = vld [vmem:[#allocation5 + $0x4c0] sm:$0xff]
    %v209 = vld [vmem:[#allocation5 + $0x4c8] sm:$0xff]
    %v210 = vld [vmem:[#allocation5 + $0x4d0] sm:$0xff]
    %v211 = vld [vmem:[#allocation5 + $0x4d8] sm:$0xff]
    %v212 = vld [vmem:[#allocation5 + $0x4e0] sm:$0xff]
    %v213 = vld [vmem:[#allocation5 + $0x4e8] sm:$0xff]
    %v214 = vld [vmem:[#allocation5 + $0x4f0] sm:$0xff]
    %v215 = vld [vmem:[#allocation5 + $0x4f8] sm:$0xff]
    %v216 = vld [vmem:[#allocation5 + $0x500] sm:$0xff]
    %v217 = vld [vmem:[#allocation5 + $0x508] sm:$0xff]
    %v218 = vld [vmem:[#allocation5 + $0x510] sm:$0xff]
    %v219 = vld [vmem:[#allocation5 + $0x518] sm:$0xff]
    %v220 = vld [vmem:[#allocation5 + $0x520] sm:$0xff]
    %v221 = vld [vmem:[#allocation5 + $0x528] sm:$0xff]
    %v222 = vld [vmem:[#allocation5 + $0x530] sm:$0xff]
    %v223 = vld [vmem:[#allocation5 + $0x538] sm:$0xff]
    %v224 = vld [vmem:[#allocation5 + $0x540] sm:$0xff]
    %v225 = vld [vmem:[#allocation5 + $0x548] sm:$0xff]
    %v226 = vld [vmem:[#allocation5 + $0x550] sm:$0xff]
    %v227 = vld [vmem:[#allocation5 + $0x558] sm:$0xff]
    %v228 = vld [vmem:[#allocation5 + $0x560] sm:$0xff]
    %v229 = vld [vmem:[#allocation5 + $0x568] sm:$0xff]
    %v230 = vld [vmem:[#allocation5 + $0x570] sm:$0xff]
    %v231 = vld [vmem:[#allocation5 + $0x578] sm:$0xff]
    %v232 = vld [vmem:[#allocation5 + $0x580] sm:$0xff]
    %v233 = vld [vmem:[#allocation5 + $0x588] sm:$0xff]
    %v234 = vld [vmem:[#allocation5 + $0x590] sm:$0xff]
    %v235 = vld [vmem:[#allocation5 + $0x598] sm:$0xff]
    %v236 = vld [vmem:[#allocation5 + $0x5a0] sm:$0xff]
    %v237 = vld [vmem:[#allocation5 + $0x5a8] sm:$0xff]
    %v238 = vld [vmem:[#allocation5 + $0x5b0] sm:$0xff]
    %v239 = vld [vmem:[#allocation5 + $0x5b8] sm:$0xff]
    %v240 = vld [vmem:[#allocation5 + $0x5c0] sm:$0xff]
    %v241 = vld [vmem:[#allocation5 + $0x5c8] sm:$0xff]
    %v242 = vld [vmem:[#allocation5 + $0x5d0] sm:$0xff]
    %v243 = vld [vmem:[#allocation5 + $0x5d8] sm:$0xff]
    %v244 = vld [vmem:[#allocation5 + $0x5e0] sm:$0xff]
    %v245 = vld [vmem:[#allocation5 + $0x5e8] sm:$0xff]
    %v246 = vld [vmem:[#allocation5 + $0x5f0] sm:$0xff]
    %v247 = vld [vmem:[#allocation5 + $0x5f8] sm:$0xff]
    %v248 = vld [vmem:[#allocation5 + $0x600] sm:$0xff]
    %v249 = vld [vmem:[#allocation5 + $0x608] sm:$0xff]
    %v250 = vld [vmem:[#allocation5 + $0x610] sm:$0xff]
    %v251 = vld [vmem:[#allocation5 + $0x618] sm:$0xff]
    %v252 = vld [vmem:[#allocation5 + $0x620] sm:$0xff]
    %v253 = vld [vmem:[#allocation5 + $0x628] sm:$0xff]
    %v254 = vld [vmem:[#allocation5 + $0x630] sm:$0xff]
    %v255 = vld [vmem:[#allocation5 + $0x638] sm:$0xff]
    %v256 = vld [vmem:[#allocation5 + $0x640] sm:$0xff]
    %v257 = vld [vmem:[#allocation5 + $0x648] sm:$0xff]
    %v258 = vld [vmem:[#allocation5 + $0x650] sm:$0xff]
    %v259 = vld [vmem:[#allocation5 + $0x658] sm:$0xff]
    %v260 = vld [vmem:[#allocation5 + $0x660] sm:$0xff]
    %v261 = vld [vmem:[#allocation5 + $0x668] sm:$0xff]
    %v262 = vld [vmem:[#allocation5 + $0x670] sm:$0xff]
    %v263 = vld [vmem:[#allocation5 + $0x678] sm:$0xff]
    %v264 = vld [vmem:[#allocation5 + $0x680] sm:$0xff]
    %v265 = vld [vmem:[#allocation5 + $0x688] sm:$0xff]
    %v266 = vld [vmem:[#allocation5 + $0x690] sm:$0xff]
    %v267 = vld [vmem:[#allocation5 + $0x698] sm:$0xff]
    %v268 = vld [vmem:[#allocation5 + $0x6a0] sm:$0xff]
    %v269 = vld [vmem:[#allocation5 + $0x6a8] sm:$0xff]
    %v270 = vld [vmem:[#allocation5 + $0x6b0] sm:$0xff]
    %v271 = vld [vmem:[#allocation5 + $0x6b8] sm:$0xff]
    %v272 = vld [vmem:[#allocation5 + $0x6c0] sm:$0xff]
    %v273 = vld [vmem:[#allocation5 + $0x6c8] sm:$0xff]
    %v274 = vld [vmem:[#allocation5 + $0x6d0] sm:$0xff]
    %v275 = vld [vmem:[#allocation5 + $0x6d8] sm:$0xff]
    %v276 = vld [vmem:[#allocation5 + $0x6e0] sm:$0xff]
    %v277 = vld [vmem:[#allocation5 + $0x6e8] sm:$0xff]
    %v278 = vld [vmem:[#allocation5 + $0x6f0] sm:$0xff]
    %v279 = vld [vmem:[#allocation5 + $0x6f8] sm:$0xff]
    %v280 = vld [vmem:[#allocation5 + $0x700] sm:$0xff]
    %v281 = vld [vmem:[#allocation5 + $0x708] sm:$0xff]
    %v282 = vld [vmem:[#allocation5 + $0x710] sm:$0xff]
    %v283 = vld [vmem:[#allocation5 + $0x718] sm:$0xff]
    %v284 = vld [vmem:[#allocation5 + $0x720] sm:$0xff]
    %v285 = vld [vmem:[#allocation5 + $0x728] sm:$0xff]
    %v286 = vld [vmem:[#allocation5 + $0x730] sm:$0xff]
    %v287 = vld [vmem:[#allocation5 + $0x738] sm:$0xff]
    %v288 = vld [vmem:[#allocation5 + $0x740] sm:$0xff]
    %v289 = vld [vmem:[#allocation5 + $0x748] sm:$0xff]
    %v290 = vld [vmem:[#allocation5 + $0x750] sm:$0xff]
    %v291 = vld [vmem:[#allocation5 + $0x758] sm:$0xff]
    %v292 = vld [vmem:[#allocation5 + $0x760] sm:$0xff]
    %v293 = vld [vmem:[#allocation5 + $0x768] sm:$0xff]
    %v294 = vld [vmem:[#allocation5 + $0x770] sm:$0xff]
    %v295 = vld [vmem:[#allocation5 + $0x778] sm:$0xff]
    %v296 = vld [vmem:[#allocation5 + $0x780] sm:$0xff]
    %v297 = vld [vmem:[#allocation5 + $0x788] sm:$0xff]
    %v298 = vld [vmem:[#allocation5 + $0x790] sm:$0xff]
    %v299 = vld [vmem:[#allocation5 + $0x798] sm:$0xff]
    %v300 = vld [vmem:[#allocation5 + $0x7a0] sm:$0xff]
    %v301 = vld [vmem:[#allocation5 + $0x7a8] sm:$0xff]
    %v302 = vld [vmem:[#allocation5 + $0x7b0] sm:$0xff]
    %v303 = vld [vmem:[#allocation5 + $0x7b8] sm:$0xff]
    %v304 = vld [vmem:[#allocation5 + $0x7c0] sm:$0xff]
    %v305 = vld [vmem:[#allocation5 + $0x7c8] sm:$0xff]
    %v306 = vld [vmem:[#allocation5 + $0x7d0] sm:$0xff]
    %v307 = vld [vmem:[#allocation5 + $0x7d8] sm:$0xff]
    %v308 = vld [vmem:[#allocation5 + $0x7e0] sm:$0xff]
    %v309 = vld [vmem:[#allocation5 + $0x7e8] sm:$0xff]
    %v310 = vld [vmem:[#allocation5 + $0x7f0] sm:$0xff]
    %v311 = vld [vmem:[#allocation5 + $0x7f8] sm:$0xff]
    %v312 = vld [vmem:[#allocation5 + $0x800] sm:$0xff]
    %v313 = vld [vmem:[#allocation5 + $0x808] sm:$0xff]
    %v314 = vld [vmem:[#allocation5 + $0x810] sm:$0xff]
    %v315 = vld [vmem:[#allocation5 + $0x818] sm:$0xff]
    %v316 = vld [vmem:[#allocation5 + $0x820] sm:$0xff]
    %v317 = vld [vmem:[#allocation5 + $0x828] sm:$0xff]
    %v318 = vld [vmem:[#allocation5 + $0x830] sm:$0xff]
    %v319 = vld [vmem:[#allocation5 + $0x838] sm:$0xff]
    %v320 = vld [vmem:[#allocation5 + $0x840] sm:$0xff]
    %v321 = vld [vmem:[#allocation5 + $0x848] sm:$0xff]
    %v322 = vld [vmem:[#allocation5 + $0x850] sm:$0xff]
    %v323 = vld [vmem:[#allocation5 + $0x858] sm:$0xff]
    %v324 = vld [vmem:[#allocation5 + $0x860] sm:$0xff]
    %v325 = vld [vmem:[#allocation5 + $0x868] sm:$0xff]
    %v326 = vld [vmem:[#allocation5 + $0x870] sm:$0xff]
    %v327 = vld [vmem:[#allocation5 + $0x878] sm:$0xff]
    %v328 = vld [vmem:[#allocation5 + $0x880] sm:$0xff]
    %v329 = vld [vmem:[#allocation5 + $0x888] sm:$0xff]
    %v330 = vld [vmem:[#allocation5 + $0x890] sm:$0xff]
    %v331 = vld [vmem:[#allocation5 + $0x898] sm:$0xff]
    %v332 = vld [vmem:[#allocation5 + $0x8a0] sm:$0xff]
    %v333 = vld [vmem:[#allocation5 + $0x8a8] sm:$0xff]
    %v334 = vld [vmem:[#allocation5 + $0x8b0] sm:$0xff]
    %v335 = vld [vmem:[#allocation5 + $0x8b8] sm:$0xff]
    %v336 = vld [vmem:[#allocation5 + $0x8c0] sm:$0xff]
    %v337 = vld [vmem:[#allocation5 + $0x8c8] sm:$0xff]
    %v338 = vld [vmem:[#allocation5 + $0x8d0] sm:$0xff]
    %v339 = vld [vmem:[#allocation5 + $0x8d8] sm:$0xff]
    %v340 = vld [vmem:[#allocation5 + $0x8e0] sm:$0xff]
    %v341 = vld [vmem:[#allocation5 + $0x8e8] sm:$0xff]
    %v342 = vld [vmem:[#allocation5 + $0x8f0] sm:$0xff]
    %v343 = vld [vmem:[#allocation5 + $0x8f8] sm:$0xff]
    %v344 = vld [vmem:[#allocation5 + $0x900] sm:$0xff]
    %v345 = vld [vmem:[#allocation5 + $0x908] sm:$0xff]
    %v346 = vld [vmem:[#allocation5 + $0x910] sm:$0xff]
    %v347 = vld [vmem:[#allocation5 + $0x918] sm:$0xff]
    %v348 = vld [vmem:[#allocation5 + $0x920] sm:$0xff]
    %v349 = vld [vmem:[#allocation5 + $0x928] sm:$0xff]
    %v350 = vld [vmem:[#allocation5 + $0x930] sm:$0xff]
    %v351 = vld [vmem:[#allocation5 + $0x938] sm:$0xff]
    %v352 = vld [vmem:[#allocation5 + $0x940] sm:$0xff]
    %v353 = vld [vmem:[#allocation5 + $0x948] sm:$0xff]
    %v354 = vld [vmem:[#allocation5 + $0x950] sm:$0xff]
    %v355 = vld [vmem:[#allocation5 + $0x958] sm:$0xff]
    %v356 = vld [vmem:[#allocation5 + $0x960] sm:$0xff]
    %v357 = vld [vmem:[#allocation5 + $0x968] sm:$0xff]
    %v358 = vld [vmem:[#allocation5 + $0x970] sm:$0xff]
    %v359 = vld [vmem:[#allocation5 + $0x978] sm:$0xff]
    %v360 = vld [vmem:[#allocation5 + $0x980] sm:$0xff]
    %v361 = vld [vmem:[#allocation5 + $0x988] sm:$0xff]
    %v362 = vld [vmem:[#allocation5 + $0x990] sm:$0xff]
    %v363 = vld [vmem:[#allocation5 + $0x998] sm:$0xff]
    %v364 = vld [vmem:[#allocation5 + $0x9a0] sm:$0xff]
    %v365 = vld [vmem:[#allocation5 + $0x9a8] sm:$0xff]
    %v366 = vld [vmem:[#allocation5 + $0x9b0] sm:$0xff]
    %v367 = vld [vmem:[#allocation5 + $0x9b8] sm:$0xff]
    %v368 = vld [vmem:[#allocation5 + $0x9c0] sm:$0xff]
    %v369 = vld [vmem:[#allocation5 + $0x9c8] sm:$0xff]
    %v370 = vld [vmem:[#allocation5 + $0x9d0] sm:$0xff]
    %v371 = vld [vmem:[#allocation5 + $0x9d8] sm:$0xff]
    %v372 = vld [vmem:[#allocation5 + $0x9e0] sm:$0xff]
    %v373 = vld [vmem:[#allocation5 + $0x9e8] sm:$0xff]
    %v374 = vld [vmem:[#allocation5 + $0x9f0] sm:$0xff]
    %v375 = vld [vmem:[#allocation5 + $0x9f8] sm:$0xff]
    %v376 = vld [vmem:[#allocation5 + $0xa00] sm:$0xff]
    %v377 = vld [vmem:[#allocation5 + $0xa08] sm:$0xff]
    %v378 = vld [vmem:[#allocation5 + $0xa10] sm:$0xff]
    %v379 = vld [vmem:[#allocation5 + $0xa18] sm:$0xff]
    %v380 = vld [vmem:[#allocation5 + $0xa20] sm:$0xff]
    %v381 = vld [vmem:[#allocation5 + $0xa28] sm:$0xff]
    %v382 = vld [vmem:[#allocation5 + $0xa30] sm:$0xff]
    %v383 = vld [vmem:[#allocation5 + $0xa38] sm:$0xff]
    %v384 = vld [vmem:[#allocation5 + $0xa40] sm:$0xff]
    %v385 = vld [vmem:[#allocation5 + $0xa48] sm:$0xff]
    %v386 = vld [vmem:[#allocation5 + $0xa50] sm:$0xff]
    %v387 = vld [vmem:[#allocation5 + $0xa58] sm:$0xff]
    %v388 = vld [vmem:[#allocation5 + $0xa60] sm:$0xff]
    %v389 = vld [vmem:[#allocation5 + $0xa68] sm:$0xff]
    %v390 = vld [vmem:[#allocation5 + $0xa70] sm:$0xff]
    %v391 = vld [vmem:[#allocation5 + $0xa78] sm:$0xff]
    %v392 = vld [vmem:[#allocation5 + $0xa80] sm:$0xff]
    %v393 = vld [vmem:[#allocation5 + $0xa88] sm:$0xff]
    %v394 = vld [vmem:[#allocation5 + $0xa90] sm:$0xff]
    %v395 = vld [vmem:[#allocation5 + $0xa98] sm:$0xff]
    %v396 = vld [vmem:[#allocation5 + $0xaa0] sm:$0xff]
    %v397 = vld [vmem:[#allocation5 + $0xaa8] sm:$0xff]
    %v398 = vld [vmem:[#allocation5 + $0xab0] sm:$0xff]
    %v399 = vld [vmem:[#allocation5 + $0xab8] sm:$0xff]
    %v400 = vld [vmem:[#allocation5 + $0xac0] sm:$0xff]
    %v401 = vld [vmem:[#allocation5 + $0xac8] sm:$0xff]
    %v402 = vld [vmem:[#allocation5 + $0xad0] sm:$0xff]
    %v403 = vld [vmem:[#allocation5 + $0xad8] sm:$0xff]
    %v404 = vld [vmem:[#allocation5 + $0xae0] sm:$0xff]
    %v405 = vld [vmem:[#allocation5 + $0xae8] sm:$0xff]
    %v406 = vld [vmem:[#allocation5 + $0xaf0] sm:$0xff]
    %v407 = vld [vmem:[#allocation5 + $0xaf8] sm:$0xff]
    %v408 = vld [vmem:[#allocation5 + $0xb00] sm:$0xff]
    %v409 = vld [vmem:[#allocation5 + $0xb08] sm:$0xff]
    %v410 = vld [vmem:[#allocation5 + $0xb10] sm:$0xff]
    %v411 = vld [vmem:[#allocation5 + $0xb18] sm:$0xff]
    %v412 = vld [vmem:[#allocation5 + $0xb20] sm:$0xff]
    %v413 = vld [vmem:[#allocation5 + $0xb28] sm:$0xff]
    %v414 = vld [vmem:[#allocation5 + $0xb30] sm:$0xff]
    %v415 = vld [vmem:[#allocation5 + $0xb38] sm:$0xff]
    %v416 = vld [vmem:[#allocation5 + $0xb40] sm:$0xff]
    %v417 = vld [vmem:[#allocation5 + $0xb48] sm:$0xff]
    %v418 = vld [vmem:[#allocation5 + $0xb50] sm:$0xff]
    %v419 = vld [vmem:[#allocation5 + $0xb58] sm:$0xff]
    %v420 = vld [vmem:[#allocation5 + $0xb60] sm:$0xff]
    %v421 = vld [vmem:[#allocation5 + $0xb68] sm:$0xff]
    %v422 = vld [vmem:[#allocation5 + $0xb70] sm:$0xff]
    %v423 = vld [vmem:[#allocation5 + $0xb78] sm:$0xff]
    %v424 = vld [vmem:[#allocation5 + $0xb80] sm:$0xff]
    %v425 = vld [vmem:[#allocation5 + $0xb88] sm:$0xff]
    %v426 = vld [vmem:[#allocation5 + $0xb90] sm:$0xff]
    %v427 = vld [vmem:[#allocation5 + $0xb98] sm:$0xff]
    %v428 = vld [vmem:[#allocation5 + $0xba0] sm:$0xff]
    %v429 = vld [vmem:[#allocation5 + $0xba8] sm:$0xff]
    %v430 = vld [vmem:[#allocation5 + $0xbb0] sm:$0xff]
    %v431 = vld [vmem:[#allocation5 + $0xbb8] sm:$0xff]
    %v432 = vld [vmem:[#allocation5 + $0xbc0] sm:$0xff]
    %v433 = vld [vmem:[#allocation5 + $0xbc8] sm:$0xff]
    %v434 = vld [vmem:[#allocation5 + $0xbd0] sm:$0xff]
    %v435 = vld [vmem:[#allocation5 + $0xbd8] sm:$0xff]
    %v436 = vld [vmem:[#allocation5 + $0xbe0] sm:$0xff]
    %v437 = vld [vmem:[#allocation5 + $0xbe8] sm:$0xff]
    %v438 = vld [vmem:[#allocation5 + $0xbf0] sm:$0xff]
    %v439 = vld [vmem:[#allocation5 + $0xbf8] sm:$0xff]
    %v440 = vld [vmem:[#allocation5 + $0xc00] sm:$0xff]
    %v441 = vld [vmem:[#allocation5 + $0xc08] sm:$0xff]
    %v442 = vld [vmem:[#allocation5 + $0xc10] sm:$0xff]
    %v443 = vld [vmem:[#allocation5 + $0xc18] sm:$0xff]
    %v444 = vld [vmem:[#allocation5 + $0xc20] sm:$0xff]
    %v445 = vld [vmem:[#allocation5 + $0xc28] sm:$0xff]
    %v446 = vld [vmem:[#allocation5 + $0xc30] sm:$0xff]
    %v447 = vld [vmem:[#allocation5 + $0xc38] sm:$0xff]
    %v448 = vld [vmem:[#allocation5 + $0xc40] sm:$0xff]
    %v449 = vld [vmem:[#allocation5 + $0xc48] sm:$0xff]
    %v450 = vld [vmem:[#allocation5 + $0xc50] sm:$0xff]
    %v451 = vld [vmem:[#allocation5 + $0xc58] sm:$0xff]
    %v452 = vld [vmem:[#allocation5 + $0xc60] sm:$0xff]
    %v453 = vld [vmem:[#allocation5 + $0xc68] sm:$0xff]
    %v454 = vld [vmem:[#allocation5 + $0xc70] sm:$0xff]
    %v455 = vld [vmem:[#allocation5 + $0xc78] sm:$0xff]
    %v456 = vld [vmem:[#allocation5 + $0xc80] sm:$0xff]
    %v457 = vld [vmem:[#allocation5 + $0xc88] sm:$0xff]
    %v458 = vld [vmem:[#allocation5 + $0xc90] sm:$0xff]
    %v459 = vld [vmem:[#allocation5 + $0xc98] sm:$0xff]
    %v460 = vld [vmem:[#allocation5 + $0xca0] sm:$0xff]
    %v461 = vld [vmem:[#allocation5 + $0xca8] sm:$0xff]
    %v462 = vld [vmem:[#allocation5 + $0xcb0] sm:$0xff]
    %v463 = vld [vmem:[#allocation5 + $0xcb8] sm:$0xff]
    %v464 = vld [vmem:[#allocation5 + $0xcc0] sm:$0xff]
    %v465 = vld [vmem:[#allocation5 + $0xcc8] sm:$0xff]
    %v466 = vld [vmem:[#allocation5 + $0xcd0] sm:$0xff]
    %v467 = vld [vmem:[#allocation5 + $0xcd8] sm:$0xff]
    %v468 = vld [vmem:[#allocation5 + $0xce0] sm:$0xff]
    %v469 = vld [vmem:[#allocation5 + $0xce8] sm:$0xff]
    %v470 = vld [vmem:[#allocation5 + $0xcf0] sm:$0xff]
    %v471 = vld [vmem:[#allocation5 + $0xcf8] sm:$0xff]
    %v472 = vld [vmem:[#allocation5 + $0xd00] sm:$0xff]
    %v473 = vld [vmem:[#allocation5 + $0xd08] sm:$0xff]
    %v474 = vld [vmem:[#allocation5 + $0xd10] sm:$0xff]
    %v475 = vld [vmem:[#allocation5 + $0xd18] sm:$0xff]
    %v476 = vld [vmem:[#allocation5 + $0xd20] sm:$0xff]
    %v477 = vld [vmem:[#allocation5 + $0xd28] sm:$0xff]
    %v478 = vld [vmem:[#allocation5 + $0xd30] sm:$0xff]
    %v479 = vld [vmem:[#allocation5 + $0xd38] sm:$0xff]
    %v480 = vld [vmem:[#allocation5 + $0xd40] sm:$0xff]
    %v481 = vld [vmem:[#allocation5 + $0xd48] sm:$0xff]
    %v482 = vld [vmem:[#allocation5 + $0xd50] sm:$0xff]
    %v483 = vld [vmem:[#allocation5 + $0xd58] sm:$0xff]
    %v484 = vld [vmem:[#allocation5 + $0xd60] sm:$0xff]
    %v485 = vld [vmem:[#allocation5 + $0xd68] sm:$0xff]
    %v486 = vld [vmem:[#allocation5 + $0xd70] sm:$0xff]
    %v487 = vld [vmem:[#allocation5 + $0xd78] sm:$0xff]
    %v488 = vld [vmem:[#allocation5 + $0xd80] sm:$0xff]
    %v489 = vld [vmem:[#allocation5 + $0xd88] sm:$0xff]
    %v490 = vld [vmem:[#allocation5 + $0xd90] sm:$0xff]
    %v491 = vld [vmem:[#allocation5 + $0xd98] sm:$0xff]
    %v492 = vld [vmem:[#allocation5 + $0xda0] sm:$0xff]
    %v493 = vld [vmem:[#allocation5 + $0xda8] sm:$0xff]
    %v494 = vld [vmem:[#allocation5 + $0xdb0] sm:$0xff]
    %v495 = vld [vmem:[#allocation5 + $0xdb8] sm:$0xff]
    %v496 = vld [vmem:[#allocation5 + $0xdc0] sm:$0xff]
    %v497 = vld [vmem:[#allocation5 + $0xdc8] sm:$0xff]
    %v498 = vld [vmem:[#allocation5 + $0xdd0] sm:$0xff]
    %v499 = vld [vmem:[#allocation5 + $0xdd8] sm:$0xff]
    %v500 = vld [vmem:[#allocation5 + $0xde0] sm:$0xff]
    %v501 = vld [vmem:[#allocation5 + $0xde8] sm:$0xff]
    %v502 = vld [vmem:[#allocation5 + $0xdf0] sm:$0xff]
    %v503 = vld [vmem:[#allocation5 + $0xdf8] sm:$0xff]
    %v504 = vld [vmem:[#allocation5 + $0xe00] sm:$0xff]
    %v505 = vld [vmem:[#allocation5 + $0xe08] sm:$0xff]
    %v506 = vld [vmem:[#allocation5 + $0xe10] sm:$0xff]
    %v507 = vld [vmem:[#allocation5 + $0xe18] sm:$0xff]
    %v508 = vld [vmem:[#allocation5 + $0xe20] sm:$0xff]
    %v509 = vld [vmem:[#allocation5 + $0xe28] sm:$0xff]
    %v510 = vld [vmem:[#allocation5 + $0xe30] sm:$0xff]
    %v511 = vld [vmem:[#allocation5 + $0xe38] sm:$0xff]
    %v512 = vld [vmem:[#allocation5 + $0xe40] sm:$0xff]
    %v513 = vld [vmem:[#allocation5 + $0xe48] sm:$0xff]
    %v514 = vld [vmem:[#allocation5 + $0xe50] sm:$0xff]
    %v515 = vld [vmem:[#allocation5 + $0xe58] sm:$0xff]
    %v516 = vld [vmem:[#allocation5 + $0xe60] sm:$0xff]
    %v517 = vld [vmem:[#allocation5 + $0xe68] sm:$0xff]
    %v518 = vld [vmem:[#allocation5 + $0xe70] sm:$0xff]
    %v519 = vld [vmem:[#allocation5 + $0xe78] sm:$0xff]
    %v520 = vld [vmem:[#allocation5 + $0xe80] sm:$0xff]
    %v521 = vld [vmem:[#allocation5 + $0xe88] sm:$0xff]
    %v522 = vld [vmem:[#allocation5 + $0xe90] sm:$0xff]
    %v523 = vld [vmem:[#allocation5 + $0xe98] sm:$0xff]
    %v524 = vld [vmem:[#allocation5 + $0xea0] sm:$0xff]
    %v525 = vld [vmem:[#allocation5 + $0xea8] sm:$0xff]
    %v526 = vld [vmem:[#allocation5 + $0xeb0] sm:$0xff]
    %v527 = vld [vmem:[#allocation5 + $0xeb8] sm:$0xff]
    %v528 = vld [vmem:[#allocation5 + $0xec0] sm:$0xff]
    %v529 = vld [vmem:[#allocation5 + $0xec8] sm:$0xff]
    %v530 = vld [vmem:[#allocation5 + $0xed0] sm:$0xff]
    %v531 = vld [vmem:[#allocation5 + $0xed8] sm:$0xff]
    %v532 = vld [vmem:[#allocation5 + $0xee0] sm:$0xff]
    %v533 = vld [vmem:[#allocation5 + $0xee8] sm:$0xff]
    %v534 = vld [vmem:[#allocation5 + $0xef0] sm:$0xff]
    %v535 = vld [vmem:[#allocation5 + $0xef8] sm:$0xff]
    %v536 = vld [vmem:[#allocation5 + $0xf00] sm:$0xff]
    %v537 = vld [vmem:[#allocation5 + $0xf08] sm:$0xff]
    %v538 = vld [vmem:[#allocation5 + $0xf10] sm:$0xff]
    %v539 = vld [vmem:[#allocation5 + $0xf18] sm:$0xff]
    %v540 = vld [vmem:[#allocation5 + $0xf20] sm:$0xff]
    %v541 = vld [vmem:[#allocation5 + $0xf28] sm:$0xff]
    %v542 = vld [vmem:[#allocation5 + $0xf30] sm:$0xff]
    %v543 = vld [vmem:[#allocation5 + $0xf38] sm:$0xff]
    %v544 = vld [vmem:[#allocation5 + $0xf40] sm:$0xff]
    %v545 = vld [vmem:[#allocation5 + $0xf48] sm:$0xff]
    %v546 = vld [vmem:[#allocation5 + $0xf50] sm:$0xff]
    %v547 = vld [vmem:[#allocation5 + $0xf58] sm:$0xff]
    %v548 = vld [vmem:[#allocation5 + $0xf60] sm:$0xff]
    %v549 = vld [vmem:[#allocation5 + $0xf68] sm:$0xff]
    %v550 = vld [vmem:[#allocation5 + $0xf70] sm:$0xff]
    %v551 = vld [vmem:[#allocation5 + $0xf78] sm:$0xff]
    %v552 = vld [vmem:[#allocation5 + $0xf80] sm:$0xff]
    %v553 = vld [vmem:[#allocation5 + $0xf88] sm:$0xff]
    %v554 = vld [vmem:[#allocation5 + $0xf90] sm:$0xff]
    %v555 = vld [vmem:[#allocation5 + $0xf98] sm:$0xff]
    %v556 = vld [vmem:[#allocation5 + $0xfa0] sm:$0xff]
    %v557 = vld [vmem:[#allocation5 + $0xfa8] sm:$0xff]
    %v558 = vld [vmem:[#allocation5 + $0xfb0] sm:$0xff]
    %v559 = vld [vmem:[#allocation5 + $0xfb8] sm:$0xff]
    %v560 = vld [vmem:[#allocation5 + $0xfc0] sm:$0xff]
    %v561 = vld [vmem:[#allocation5 + $0xfc8] sm:$0xff]
    %v562 = vld [vmem:[#allocation5 + $0xfd0] sm:$0xff]
    %v563 = vld [vmem:[#allocation5 + $0xfd8] sm:$0xff]
    %v564 = vld [vmem:[#allocation5 + $0xfe0] sm:$0xff]
    %v565 = vld [vmem:[#allocation5 + $0xfe8] sm:$0xff]
    %v566 = vld [vmem:[#allocation5 + $0xff0] sm:$0xff]
    %v567 = vld [vmem:[#allocation5 + $0xff8] sm:$0xff]
    %v568 = vld [vmem:[#allocation5 + $0x1000] sm:$0xff]
    %v569 = vld [vmem:[#allocation5 + $0x1008] sm:$0xff]
    %v570 = vld [vmem:[#allocation5 + $0x1010] sm:$0xff]
    %v571 = vld [vmem:[#allocation5 + $0x1018] sm:$0xff]
    %v572 = vld [vmem:[#allocation5 + $0x1020] sm:$0xff]
    %v573 = vld [vmem:[#allocation5 + $0x1028] sm:$0xff]
    %v574 = vld [vmem:[#allocation5 + $0x1030] sm:$0xff]
    %v575 = vld [vmem:[#allocation5 + $0x1038] sm:$0xff]
    %v576 = vld [vmem:[#allocation5 + $0x1040] sm:$0xff]
    %v577 = vld [vmem:[#allocation5 + $0x1048] sm:$0xff]
    %v578 = vld [vmem:[#allocation5 + $0x1050] sm:$0xff]
    %v579 = vld [vmem:[#allocation5 + $0x1058] sm:$0xff]
    %v580 = vld [vmem:[#allocation5 + $0x1060] sm:$0xff]
    %v581 = vld [vmem:[#allocation5 + $0x1068] sm:$0xff]
    %v582 = vld [vmem:[#allocation5 + $0x1070] sm:$0xff]
    %v583 = vld [vmem:[#allocation5 + $0x1078] sm:$0xff]
    %v584 = vld [vmem:[#allocation5 + $0x1080] sm:$0xff]
    %v585 = vld [vmem:[#allocation5 + $0x1088] sm:$0xff]
    %v586 = vld [vmem:[#allocation5 + $0x1090] sm:$0xff]
    %v587 = vld [vmem:[#allocation5 + $0x1098] sm:$0xff]
    %v588 = vld [vmem:[#allocation5 + $0x10a0] sm:$0xff]
    %v589 = vld [vmem:[#allocation5 + $0x10a8] sm:$0xff]
    %v590 = vld [vmem:[#allocation5 + $0x10b0] sm:$0xff]
    %v591 = vld [vmem:[#allocation5 + $0x10b8] sm:$0xff]
    %v592 = vld [vmem:[#allocation5 + $0x10c0] sm:$0xff]
    %v593 = vld [vmem:[#allocation5 + $0x10c8] sm:$0xff]
    %v594 = vld [vmem:[#allocation5 + $0x10d0] sm:$0xff]
    %v595 = vld [vmem:[#allocation5 + $0x10d8] sm:$0xff]
    %v596 = vld [vmem:[#allocation5 + $0x10e0] sm:$0xff]
    %v597 = vld [vmem:[#allocation5 + $0x10e8] sm:$0xff]
    %v598 = vld [vmem:[#allocation5 + $0x10f0] sm:$0xff]
    %v599 = vld [vmem:[#allocation5 + $0x10f8] sm:$0xff]
    %v600 = vld [vmem:[#allocation5 + $0x1100] sm:$0xff]
    %v601 = vld [vmem:[#allocation5 + $0x1108] sm:$0xff]
    %v602 = vld [vmem:[#allocation5 + $0x1110] sm:$0xff]
    %v603 = vld [vmem:[#allocation5 + $0x1118] sm:$0xff]
    %v604 = vld [vmem:[#allocation5 + $0x1120] sm:$0xff]
    %v605 = vld [vmem:[#allocation5 + $0x1128] sm:$0xff]
    %v606 = vld [vmem:[#allocation5 + $0x1130] sm:$0xff]
    %v607 = vld [vmem:[#allocation5 + $0x1138] sm:$0xff]
    %v608 = vld [vmem:[#allocation5 + $0x1140] sm:$0xff]
    %v609 = vld [vmem:[#allocation5 + $0x1148] sm:$0xff]
    %v610 = vld [vmem:[#allocation5 + $0x1150] sm:$0xff]
    %v611 = vld [vmem:[#allocation5 + $0x1158] sm:$0xff]
    %v612 = vld [vmem:[#allocation5 + $0x1160] sm:$0xff]
    %v613 = vld [vmem:[#allocation5 + $0x1168] sm:$0xff]
    %v614 = vld [vmem:[#allocation5 + $0x1170] sm:$0xff]
    %v615 = vld [vmem:[#allocation5 + $0x1178] sm:$0xff]
    %v616 = vld [vmem:[#allocation5 + $0x1180] sm:$0xff]
    %v617 = vld [vmem:[#allocation5 + $0x1188] sm:$0xff]
    %v618 = vld [vmem:[#allocation5 + $0x1190] sm:$0xff]
    %v619 = vld [vmem:[#allocation5 + $0x1198] sm:$0xff]
    %v620 = vld [vmem:[#allocation5 + $0x11a0] sm:$0xff]
    %v621 = vld [vmem:[#allocation5 + $0x11a8] sm:$0xff]
    %v622 = vld [vmem:[#allocation5 + $0x11b0] sm:$0xff]
    %v623 = vld [vmem:[#allocation5 + $0x11b8] sm:$0xff]
    %v624 = vld [vmem:[#allocation5 + $0x11c0] sm:$0xff]
    %v625 = vld [vmem:[#allocation5 + $0x11c8] sm:$0xff]
    %v626 = vld [vmem:[#allocation5 + $0x11d0] sm:$0xff]
    %v627 = vld [vmem:[#allocation5 + $0x11d8] sm:$0xff]
    %v628 = vld [vmem:[#allocation5 + $0x11e0] sm:$0xff]
    %v629 = vld [vmem:[#allocation5 + $0x11e8] sm:$0xff]
    %v630 = vld [vmem:[#allocation5 + $0x11f0] sm:$0xff]
    %v631 = vld [vmem:[#allocation5 + $0x11f8] sm:$0xff]
    %632 = vmatpush.msra.mxu0 %v146
    %633 = vmatpush.msra.mxu0 %v140
    %634 = vmatpush.msra.mxu0 %v134
    %635 = vmatpush.msra.mxu0 %v128
    %636 = vmatpush.msra.mxu0 %v122
    %637 = vmatpush.msra.mxu0 %v116
    %638 = vmatpush.msra.mxu0 %v110
    %639 = vmatpush.msra.mxu0 %v104
    %640 = vmatpush.msra.mxu0 %v98
    %641 = vmatpush.msra.mxu0 %v92
    %642 = vmatpush.msra.mxu0 %v86
    %643 = vmatpush.msra.mxu0 %v80
    %644 = vmatpush.msra.mxu0 %v74
    %645 = vmatpush.msra.mxu0 %v68
    %646 = vmatpush.msra.mxu0 %v62
    %647 = vmatpush.msra.mxu0 %v56
    %648 = vmatmul.f32.gmra.mxu0 %v44
    %v649 = vpop.f32.mrf.mxu0
    %v650 = vadd.f32 0.0, %v649
    %651 = vmatmul.f32.gmra.mxu0 %v50
    %v652 = vpop.f32.mrf.mxu0
    %v653 = vadd.f32 0.0, %v652
    %654 = vdwg.mxu0
    %655 = vmatpush.msra.mxu0 %v242
    %656 = vmatpush.msra.mxu0 %v236
    %657 = vmatpush.msra.mxu0 %v230
    %658 = vmatpush.msra.mxu0 %v224
    %659 = vmatpush.msra.mxu0 %v218
    %660 = vmatpush.msra.mxu0 %v212
    %661 = vmatpush.msra.mxu0 %v206
    %662 = vmatpush.msra.mxu0 %v200
    %663 = vmatpush.msra.mxu0 %v194
    %664 = vmatpush.msra.mxu0 %v188
    %665 = vmatpush.msra.mxu0 %v182
    %666 = vmatpush.msra.mxu0 %v176
    %667 = vmatpush.msra.mxu0 %v170
    %668 = vmatpush.msra.mxu0 %v164
    %669 = vmatpush.msra.mxu0 %v158
    %670 = vmatpush.msra.mxu0 %v152
    %671 = vmatmul.f32.gmra.mxu0 %v45
    %v672 = vpop.f32.mrf.mxu0
    %v673 = vadd.f32 %v650, %v672
    %674 = vmatmul.f32.gmra.mxu0 %v51
    %v675 = vpop.f32.mrf.mxu0
    %v676 = vadd.f32 %v653, %v675
    %677 = vdwg.mxu0
    %678 = vmatpush.msra.mxu0 %v338
    %679 = vmatpush.msra.mxu0 %v332
    %680 = vmatpush.msra.mxu0 %v326
    %681 = vmatpush.msra.mxu0 %v320
    %682 = vmatpush.msra.mxu0 %v314
    %683 = vmatpush.msra.mxu0 %v308
    %684 = vmatpush.msra.mxu0 %v302
    %685 = vmatpush.msra.mxu0 %v296
    %686 = vmatpush.msra.mxu0 %v290
    %687 = vmatpush.msra.mxu0 %v284
    %688 = vmatpush.msra.mxu0 %v278
    %689 = vmatpush.msra.mxu0 %v272
    %690 = vmatpush.msra.mxu0 %v266
    %691 = vmatpush.msra.mxu0 %v260
    %692 = vmatpush.msra.mxu0 %v254
    %693 = vmatpush.msra.mxu0 %v248
    %694 = vmatmul.f32.gmra.mxu0 %v46
    %v695 = vpop.f32.mrf.mxu0
    %v696 = vadd.f32 %v673, %v695
    %697 = vmatmul.f32.gmra.mxu0 %v52
    %v698 = vpop.f32.mrf.mxu0
    %v699 = vadd.f32 %v676, %v698
    %700 = vdwg.mxu0
    %701 = vmatpush.msra.mxu0 %v434
    %702 = vmatpush.msra.mxu0 %v428
    %703 = vmatpush.msra.mxu0 %v422
    %704 = vmatpush.msra.mxu0 %v416
    %705 = vmatpush.msra.mxu0 %v410
    %706 = vmatpush.msra.mxu0 %v404
    %707 = vmatpush.msra.mxu0 %v398
    %708 = vmatpush.msra.mxu0 %v392
    %709 = vmatpush.msra.mxu0 %v386
    %710 = vmatpush.msra.mxu0 %v380
    %711 = vmatpush.msra.mxu0 %v374
    %712 = vmatpush.msra.mxu0 %v368
    %713 = vmatpush.msra.mxu0 %v362
    %714 = vmatpush.msra.mxu0 %v356
    %715 = vmatpush.msra.mxu0 %v350
    %716 = vmatpush.msra.mxu0 %v344
    %717 = vmatmul.f32.gmra.mxu0 %v47
    %v718 = vpop.f32.mrf.mxu0
    %v719 = vadd.f32 %v696, %v718
    %720 = vmatmul.f32.gmra.mxu0 %v53
    %v721 = vpop.f32.mrf.mxu0
    %v722 = vadd.f32 %v699, %v721
    %723 = vdwg.mxu0
    %724 = vmatpush.msra.mxu0 %v530
    %725 = vmatpush.msra.mxu0 %v524
    %726 = vmatpush.msra.mxu0 %v518
    %727 = vmatpush.msra.mxu0 %v512
    %728 = vmatpush.msra.mxu0 %v506
    %729 = vmatpush.msra.mxu0 %v500
    %730 = vmatpush.msra.mxu0 %v494
    %731 = vmatpush.msra.mxu0 %v488
    %732 = vmatpush.msra.mxu0 %v482
    %733 = vmatpush.msra.mxu0 %v476
    %734 = vmatpush.msra.mxu0 %v470
    %735 = vmatpush.msra.mxu0 %v464
    %736 = vmatpush.msra.mxu0 %v458
    %737 = vmatpush.msra.mxu0 %v452
    %738 = vmatpush.msra.mxu0 %v446
    %739 = vmatpush.msra.mxu0 %v440
    %740 = vmatmul.f32.gmra.mxu0 %v48
    %v741 = vpop.f32.mrf.mxu0
    %v742 = vadd.f32 %v719, %v741
    %743 = vmatmul.f32.gmra.mxu0 %v54
    %v744 = vpop.f32.mrf.mxu0
    %v745 = vadd.f32 %v722, %v744
    %746 = vdwg.mxu0
    %747 = vmatpush.msra.mxu0 %v626
    %748 = vmatpush.msra.mxu0 %v620
    %749 = vmatpush.msra.mxu0 %v614
    %750 = vmatpush.msra.mxu0 %v608
    %751 = vmatpush.msra.mxu0 %v602
    %752 = vmatpush.msra.mxu0 %v596
    %753 = vmatpush.msra.mxu0 %v590
    %754 = vmatpush.msra.mxu0 %v584
    %755 = vmatpush.msra.mxu0 %v578
    %756 = vmatpush.msra.mxu0 %v572
    %757 = vmatpush.msra.mxu0 %v566
    %758 = vmatpush.msra.mxu0 %v560
    %759 = vmatpush.msra.mxu0 %v554
    %760 = vmatpush.msra.mxu0 %v548
    %761 = vmatpush.msra.mxu0 %v542
    %762 = vmatpush.msra.mxu0 %v536
    %763 = vmatmul.f32.gmra.mxu0 %v49
    %v764 = vpop.f32.mrf.mxu0
    %v765 = vadd.f32 %v742, %v764
    %766 = vmatmul.f32.gmra.mxu0 %v55
    %v767 = vpop.f32.mrf.mxu0
    %v768 = vadd.f32 %v745, %v767
    %769 = vdwg.mxu0
    %770 = vmatpush.msra.mxu0 %v147
    %771 = vmatpush.msra.mxu0 %v141
    %772 = vmatpush.msra.mxu0 %v135
    %773 = vmatpush.msra.mxu0 %v129
    %774 = vmatpush.msra.mxu0 %v123
    %775 = vmatpush.msra.mxu0 %v117
    %776 = vmatpush.msra.mxu0 %v111
    %777 = vmatpush.msra.mxu0 %v105
    %778 = vmatpush.msra.mxu0 %v99
    %779 = vmatpush.msra.mxu0 %v93
    %780 = vmatpush.msra.mxu0 %v87
    %781 = vmatpush.msra.mxu0 %v81
    %782 = vmatpush.msra.mxu0 %v75
    %783 = vmatpush.msra.mxu0 %v69
    %784 = vmatpush.msra.mxu0 %v63
    %785 = vmatpush.msra.mxu0 %v57
    %786 = vmatmul.f32.gmra.mxu0 %v44
    %v787 = vpop.f32.mrf.mxu0
    %v788 = vadd.f32 0.0, %v787
    %789 = vmatmul.f32.gmra.mxu0 %v50
    %v790 = vpop.f32.mrf.mxu0
    %v791 = vadd.f32 0.0, %v790
    %792 = vdwg.mxu0
    %793 = vmatpush.msra.mxu0 %v243
    %794 = vmatpush.msra.mxu0 %v237
    %795 = vmatpush.msra.mxu0 %v231
    %796 = vmatpush.msra.mxu0 %v225
    %797 = vmatpush.msra.mxu0 %v219
    %798 = vmatpush.msra.mxu0 %v213
    %799 = vmatpush.msra.mxu0 %v207
    %800 = vmatpush.msra.mxu0 %v201
    %801 = vmatpush.msra.mxu0 %v195
    %802 = vmatpush.msra.mxu0 %v189
    %803 = vmatpush.msra.mxu0 %v183
    %804 = vmatpush.msra.mxu0 %v177
    %805 = vmatpush.msra.mxu0 %v171
    %806 = vmatpush.msra.mxu0 %v165
    %807 = vmatpush.msra.mxu0 %v159
    %808 = vmatpush.msra.mxu0 %v153
    %809 = vmatmul.f32.gmra.mxu0 %v45
    %v810 = vpop.f32.mrf.mxu0
    %v811 = vadd.f32 %v788, %v810
    %812 = vmatmul.f32.gmra.mxu0 %v51
    %v813 = vpop.f32.mrf.mxu0
    %v814 = vadd.f32 %v791, %v813
    %815 = vdwg.mxu0
    %816 = vmatpush.msra.mxu0 %v339
    %817 = vmatpush.msra.mxu0 %v333
    %818 = vmatpush.msra.mxu0 %v327
    %819 = vmatpush.msra.mxu0 %v321
    %820 = vmatpush.msra.mxu0 %v315
    %821 = vmatpush.msra.mxu0 %v309
    %822 = vmatpush.msra.mxu0 %v303
    %823 = vmatpush.msra.mxu0 %v297
    %824 = vmatpush.msra.mxu0 %v291
    %825 = vmatpush.msra.mxu0 %v285
    %826 = vmatpush.msra.mxu0 %v279
    %827 = vmatpush.msra.mxu0 %v273
    %828 = vmatpush.msra.mxu0 %v267
    %829 = vmatpush.msra.mxu0 %v261
    %830 = vmatpush.msra.mxu0 %v255
    %831 = vmatpush.msra.mxu0 %v249
    %832 = vmatmul.f32.gmra.mxu0 %v46
    %v833 = vpop.f32.mrf.mxu0
    %v834 = vadd.f32 %v811, %v833
    %835 = vmatmul.f32.gmra.mxu0 %v52
    %v836 = vpop.f32.mrf.mxu0
    %v837 = vadd.f32 %v814, %v836
    %838 = vdwg.mxu0
    %839 = vmatpush.msra.mxu0 %v435
    %840 = vmatpush.msra.mxu0 %v429
    %841 = vmatpush.msra.mxu0 %v423
    %842 = vmatpush.msra.mxu0 %v417
    %843 = vmatpush.msra.mxu0 %v411
    %844 = vmatpush.msra.mxu0 %v405
    %845 = vmatpush.msra.mxu0 %v399
    %846 = vmatpush.msra.mxu0 %v393
    %847 = vmatpush.msra.mxu0 %v387
    %848 = vmatpush.msra.mxu0 %v381
    %849 = vmatpush.msra.mxu0 %v375
    %850 = vmatpush.msra.mxu0 %v369
    %851 = vmatpush.msra.mxu0 %v363
    %852 = vmatpush.msra.mxu0 %v357
    %853 = vmatpush.msra.mxu0 %v351
    %854 = vmatpush.msra.mxu0 %v345
    %855 = vmatmul.f32.gmra.mxu0 %v47
    %v856 = vpop.f32.mrf.mxu0
    %v857 = vadd.f32 %v834, %v856
    %858 = vmatmul.f32.gmra.mxu0 %v53
    %v859 = vpop.f32.mrf.mxu0
    %v860 = vadd.f32 %v837, %v859
    %861 = vdwg.mxu0
    %862 = vmatpush.msra.mxu0 %v531
    %863 = vmatpush.msra.mxu0 %v525
    %864 = vmatpush.msra.mxu0 %v519
    %865 = vmatpush.msra.mxu0 %v513
    %866 = vmatpush.msra.mxu0 %v507
    %867 = vmatpush.msra.mxu0 %v501
    %868 = vmatpush.msra.mxu0 %v495
    %869 = vmatpush.msra.mxu0 %v489
    %870 = vmatpush.msra.mxu0 %v483
    %871 = vmatpush.msra.mxu0 %v477
    %872 = vmatpush.msra.mxu0 %v471
    %873 = vmatpush.msra.mxu0 %v465
    %874 = vmatpush.msra.mxu0 %v459
    %875 = vmatpush.msra.mxu0 %v453
    %876 = vmatpush.msra.mxu0 %v447
    %877 = vmatpush.msra.mxu0 %v441
    %878 = vmatmul.f32.gmra.mxu0 %v48
    %v879 = vpop.f32.mrf.mxu0
    %v880 = vadd.f32 %v857, %v879
    %881 = vmatmul.f32.gmra.mxu0 %v54
    %v882 = vpop.f32.mrf.mxu0
    %v883 = vadd.f32 %v860, %v882
    %884 = vdwg.mxu0
    %885 = vmatpush.msra.mxu0 %v627
    %886 = vmatpush.msra.mxu0 %v621
    %887 = vmatpush.msra.mxu0 %v615
    %888 = vmatpush.msra.mxu0 %v609
    %889 = vmatpush.msra.mxu0 %v603
    %890 = vmatpush.msra.mxu0 %v597
    %891 = vmatpush.msra.mxu0 %v591
    %892 = vmatpush.msra.mxu0 %v585
    %893 = vmatpush.msra.mxu0 %v579
    %894 = vmatpush.msra.mxu0 %v573
    %895 = vmatpush.msra.mxu0 %v567
    %896 = vmatpush.msra.mxu0 %v561
    %897 = vmatpush.msra.mxu0 %v555
    %898 = vmatpush.msra.mxu0 %v549
    %899 = vmatpush.msra.mxu0 %v543
    %900 = vmatpush.msra.mxu0 %v537
    %901 = vmatmul.f32.gmra.mxu0 %v49
    %v902 = vpop.f32.mrf.mxu0
    %v903 = vadd.f32 %v880, %v902
    %904 = vmatmul.f32.gmra.mxu0 %v55
    %v905 = vpop.f32.mrf.mxu0
    %v906 = vadd.f32 %v883, %v905
    %907 = vdwg.mxu0
    %908 = vmatpush.msra.mxu0 %v148
    %909 = vmatpush.msra.mxu0 %v142
    %910 = vmatpush.msra.mxu0 %v136
    %911 = vmatpush.msra.mxu0 %v130
    %912 = vmatpush.msra.mxu0 %v124
    %913 = vmatpush.msra.mxu0 %v118
    %914 = vmatpush.msra.mxu0 %v112
    %915 = vmatpush.msra.mxu0 %v106
    %916 = vmatpush.msra.mxu0 %v100
    %917 = vmatpush.msra.mxu0 %v94
    %918 = vmatpush.msra.mxu0 %v88
    %919 = vmatpush.msra.mxu0 %v82
    %920 = vmatpush.msra.mxu0 %v76
    %921 = vmatpush.msra.mxu0 %v70
    %922 = vmatpush.msra.mxu0 %v64
    %923 = vmatpush.msra.mxu0 %v58
    %924 = vmatmul.f32.gmra.mxu0 %v44
    %v925 = vpop.f32.mrf.mxu0
    %v926 = vadd.f32 0.0, %v925
    %927 = vmatmul.f32.gmra.mxu0 %v50
    %v928 = vpop.f32.mrf.mxu0
    %v929 = vadd.f32 0.0, %v928
    %930 = vdwg.mxu0
    %931 = vmatpush.msra.mxu0 %v244
    %932 = vmatpush.msra.mxu0 %v238
    %933 = vmatpush.msra.mxu0 %v232
    %934 = vmatpush.msra.mxu0 %v226
    %935 = vmatpush.msra.mxu0 %v220
    %936 = vmatpush.msra.mxu0 %v214
    %937 = vmatpush.msra.mxu0 %v208
    %938 = vmatpush.msra.mxu0 %v202
    %939 = vmatpush.msra.mxu0 %v196
    %940 = vmatpush.msra.mxu0 %v190
    %941 = vmatpush.msra.mxu0 %v184
    %942 = vmatpush.msra.mxu0 %v178
    %943 = vmatpush.msra.mxu0 %v172
    %944 = vmatpush.msra.mxu0 %v166
    %945 = vmatpush.msra.mxu0 %v160
    %946 = vmatpush.msra.mxu0 %v154
    %947 = vmatmul.f32.gmra.mxu0 %v45
    %v948 = vpop.f32.mrf.mxu0
    %v949 = vadd.f32 %v926, %v948
    %950 = vmatmul.f32.gmra.mxu0 %v51
    %v951 = vpop.f32.mrf.mxu0
    %v952 = vadd.f32 %v929, %v951
    %953 = vdwg.mxu0
    %954 = vmatpush.msra.mxu0 %v340
    %955 = vmatpush.msra.mxu0 %v334
    %956 = vmatpush.msra.mxu0 %v328
    %957 = vmatpush.msra.mxu0 %v322
    %958 = vmatpush.msra.mxu0 %v316
    %959 = vmatpush.msra.mxu0 %v310
    %960 = vmatpush.msra.mxu0 %v304
    %961 = vmatpush.msra.mxu0 %v298
    %962 = vmatpush.msra.mxu0 %v292
    %963 = vmatpush.msra.mxu0 %v286
    %964 = vmatpush.msra.mxu0 %v280
    %965 = vmatpush.msra.mxu0 %v274
    %966 = vmatpush.msra.mxu0 %v268
    %967 = vmatpush.msra.mxu0 %v262
    %968 = vmatpush.msra.mxu0 %v256
    %969 = vmatpush.msra.mxu0 %v250
    %970 = vmatmul.f32.gmra.mxu0 %v46
    %v971 = vpop.f32.mrf.mxu0
    %v972 = vadd.f32 %v949, %v971
    %973 = vmatmul.f32.gmra.mxu0 %v52
    %v974 = vpop.f32.mrf.mxu0
    %v975 = vadd.f32 %v952, %v974
    %976 = vdwg.mxu0
    %977 = vmatpush.msra.mxu0 %v436
    %978 = vmatpush.msra.mxu0 %v430
    %979 = vmatpush.msra.mxu0 %v424
    %980 = vmatpush.msra.mxu0 %v418
    %981 = vmatpush.msra.mxu0 %v412
    %982 = vmatpush.msra.mxu0 %v406
    %983 = vmatpush.msra.mxu0 %v400
    %984 = vmatpush.msra.mxu0 %v394
    %985 = vmatpush.msra.mxu0 %v388
    %986 = vmatpush.msra.mxu0 %v382
    %987 = vmatpush.msra.mxu0 %v376
    %988 = vmatpush.msra.mxu0 %v370
    %989 = vmatpush.msra.mxu0 %v364
    %990 = vmatpush.msra.mxu0 %v358
    %991 = vmatpush.msra.mxu0 %v352
    %992 = vmatpush.msra.mxu0 %v346
    %993 = vmatmul.f32.gmra.mxu0 %v47
    %v994 = vpop.f32.mrf.mxu0
    %v995 = vadd.f32 %v972, %v994
    %996 = vmatmul.f32.gmra.mxu0 %v53
    %v997 = vpop.f32.mrf.mxu0
    %v998 = vadd.f32 %v975, %v997
    %999 = vdwg.mxu0
    %1000 = vmatpush.msra.mxu0 %v532
    %1001 = vmatpush.msra.mxu0 %v526
    %1002 = vmatpush.msra.mxu0 %v520
    %1003 = vmatpush.msra.mxu0 %v514
    %1004 = vmatpush.msra.mxu0 %v508
    %1005 = vmatpush.msra.mxu0 %v502
    %1006 = vmatpush.msra.mxu0 %v496
    %1007 = vmatpush.msra.mxu0 %v490
    %1008 = vmatpush.msra.mxu0 %v484
    %1009 = vmatpush.msra.mxu0 %v478
    %1010 = vmatpush.msra.mxu0 %v472
    %1011 = vmatpush.msra.mxu0 %v466
    %1012 = vmatpush.msra.mxu0 %v460
    %1013 = vmatpush.msra.mxu0 %v454
    %1014 = vmatpush.msra.mxu0 %v448
    %1015 = vmatpush.msra.mxu0 %v442
    %1016 = vmatmul.f32.gmra.mxu0 %v48
    %v1017 = vpop.f32.mrf.mxu0
    %v1018 = vadd.f32 %v995, %v1017
    %1019 = vmatmul.f32.gmra.mxu0 %v54
    %v1020 = vpop.f32.mrf.mxu0
    %v1021 = vadd.f32 %v998, %v1020
    %1022 = vdwg.mxu0
    %1023 = vmatpush.msra.mxu0 %v628
    %1024 = vmatpush.msra.mxu0 %v622
    %1025 = vmatpush.msra.mxu0 %v616
    %1026 = vmatpush.msra.mxu0 %v610
    %1027 = vmatpush.msra.mxu0 %v604
    %1028 = vmatpush.msra.mxu0 %v598
    %1029 = vmatpush.msra.mxu0 %v592
    %1030 = vmatpush.msra.mxu0 %v586
    %1031 = vmatpush.msra.mxu0 %v580
    %1032 = vmatpush.msra.mxu0 %v574
    %1033 = vmatpush.msra.mxu0 %v568
    %1034 = vmatpush.msra.mxu0 %v562
    %1035 = vmatpush.msra.mxu0 %v556
    %1036 = vmatpush.msra.mxu0 %v550
    %1037 = vmatpush.msra.mxu0 %v544
    %1038 = vmatpush.msra.mxu0 %v538
    %1039 = vmatmul.f32.gmra.mxu0 %v49
    %v1040 = vpop.f32.mrf.mxu0
    %v1041 = vadd.f32 %v1018, %v1040
    %1042 = vmatmul.f32.gmra.mxu0 %v55
    %v1043 = vpop.f32.mrf.mxu0
    %v1044 = vadd.f32 %v1021, %v1043
    %1045 = vdwg.mxu0
    %1046 = vmatpush.msra.mxu0 %v149
    %1047 = vmatpush.msra.mxu0 %v143
    %1048 = vmatpush.msra.mxu0 %v137
    %1049 = vmatpush.msra.mxu0 %v131
    %1050 = vmatpush.msra.mxu0 %v125
    %1051 = vmatpush.msra.mxu0 %v119
    %1052 = vmatpush.msra.mxu0 %v113
    %1053 = vmatpush.msra.mxu0 %v107
    %1054 = vmatpush.msra.mxu0 %v101
    %1055 = vmatpush.msra.mxu0 %v95
    %1056 = vmatpush.msra.mxu0 %v89
    %1057 = vmatpush.msra.mxu0 %v83
    %1058 = vmatpush.msra.mxu0 %v77
    %1059 = vmatpush.msra.mxu0 %v71
    %1060 = vmatpush.msra.mxu0 %v65
    %1061 = vmatpush.msra.mxu0 %v59
    %1062 = vmatmul.f32.gmra.mxu0 %v44
    %v1063 = vpop.f32.mrf.mxu0
    %v1064 = vadd.f32 0.0, %v1063
    %1065 = vmatmul.f32.gmra.mxu0 %v50
    %v1066 = vpop.f32.mrf.mxu0
    %v1067 = vadd.f32 0.0, %v1066
    %1068 = vdwg.mxu0
    %1069 = vmatpush.msra.mxu0 %v245
    %1070 = vmatpush.msra.mxu0 %v239
    %1071 = vmatpush.msra.mxu0 %v233
    %1072 = vmatpush.msra.mxu0 %v227
    %1073 = vmatpush.msra.mxu0 %v221
    %1074 = vmatpush.msra.mxu0 %v215
    %1075 = vmatpush.msra.mxu0 %v209
    %1076 = vmatpush.msra.mxu0 %v203
    %1077 = vmatpush.msra.mxu0 %v197
    %1078 = vmatpush.msra.mxu0 %v191
    %1079 = vmatpush.msra.mxu0 %v185
    %1080 = vmatpush.msra.mxu0 %v179
    %1081 = vmatpush.msra.mxu0 %v173
    %1082 = vmatpush.msra.mxu0 %v167
    %1083 = vmatpush.msra.mxu0 %v161
    %1084 = vmatpush.msra.mxu0 %v155
    %1085 = vmatmul.f32.gmra.mxu0 %v45
    %v1086 = vpop.f32.mrf.mxu0
    %v1087 = vadd.f32 %v1064, %v1086
    %1088 = vmatmul.f32.gmra.mxu0 %v51
    %v1089 = vpop.f32.mrf.mxu0
    %v1090 = vadd.f32 %v1067, %v1089
    %1091 = vdwg.mxu0
    %1092 = vmatpush.msra.mxu0 %v341
    %1093 = vmatpush.msra.mxu0 %v335
    %1094 = vmatpush.msra.mxu0 %v329
    %1095 = vmatpush.msra.mxu0 %v323
    %1096 = vmatpush.msra.mxu0 %v317
    %1097 = vmatpush.msra.mxu0 %v311
    %1098 = vmatpush.msra.mxu0 %v305
    %1099 = vmatpush.msra.mxu0 %v299
    %1100 = vmatpush.msra.mxu0 %v293
    %1101 = vmatpush.msra.mxu0 %v287
    %1102 = vmatpush.msra.mxu0 %v281
    %1103 = vmatpush.msra.mxu0 %v275
    %1104 = vmatpush.msra.mxu0 %v269
    %1105 = vmatpush.msra.mxu0 %v263
    %1106 = vmatpush.msra.mxu0 %v257
    %1107 = vmatpush.msra.mxu0 %v251
    %1108 = vmatmul.f32.gmra.mxu0 %v46
    %v1109 = vpop.f32.mrf.mxu0
    %v1110 = vadd.f32 %v1087, %v1109
    %1111 = vmatmul.f32.gmra.mxu0 %v52
    %v1112 = vpop.f32.mrf.mxu0
    %v1113 = vadd.f32 %v1090, %v1112
    %1114 = vdwg.mxu0
    %1115 = vmatpush.msra.mxu0 %v437
    %1116 = vmatpush.msra.mxu0 %v431
    %1117 = vmatpush.msra.mxu0 %v425
    %1118 = vmatpush.msra.mxu0 %v419
    %1119 = vmatpush.msra.mxu0 %v413
    %1120 = vmatpush.msra.mxu0 %v407
    %1121 = vmatpush.msra.mxu0 %v401
    %1122 = vmatpush.msra.mxu0 %v395
    %1123 = vmatpush.msra.mxu0 %v389
    %1124 = vmatpush.msra.mxu0 %v383
    %1125 = vmatpush.msra.mxu0 %v377
    %1126 = vmatpush.msra.mxu0 %v371
    %1127 = vmatpush.msra.mxu0 %v365
    %1128 = vmatpush.msra.mxu0 %v359
    %1129 = vmatpush.msra.mxu0 %v353
    %1130 = vmatpush.msra.mxu0 %v347
    %1131 = vmatmul.f32.gmra.mxu0 %v47
    %v1132 = vpop.f32.mrf.mxu0
    %v1133 = vadd.f32 %v1110, %v1132
    %1134 = vmatmul.f32.gmra.mxu0 %v53
    %v1135 = vpop.f32.mrf.mxu0
    %v1136 = vadd.f32 %v1113, %v1135
    %1137 = vdwg.mxu0
    %1138 = vmatpush.msra.mxu0 %v533
    %1139 = vmatpush.msra.mxu0 %v527
    %1140 = vmatpush.msra.mxu0 %v521
    %1141 = vmatpush.msra.mxu0 %v515
    %1142 = vmatpush.msra.mxu0 %v509
    %1143 = vmatpush.msra.mxu0 %v503
    %1144 = vmatpush.msra.mxu0 %v497
    %1145 = vmatpush.msra.mxu0 %v491
    %1146 = vmatpush.msra.mxu0 %v485
    %1147 = vmatpush.msra.mxu0 %v479
    %1148 = vmatpush.msra.mxu0 %v473
    %1149 = vmatpush.msra.mxu0 %v467
    %1150 = vmatpush.msra.mxu0 %v461
    %1151 = vmatpush.msra.mxu0 %v455
    %1152 = vmatpush.msra.mxu0 %v449
    %1153 = vmatpush.msra.mxu0 %v443
    %1154 = vmatmul.f32.gmra.mxu0 %v48
    %v1155 = vpop.f32.mrf.mxu0
    %v1156 = vadd.f32 %v1133, %v1155
    %1157 = vmatmul.f32.gmra.mxu0 %v54
    %v1158 = vpop.f32.mrf.mxu0
    %v1159 = vadd.f32 %v1136, %v1158
    %1160 = vdwg.mxu0
    %1161 = vmatpush.msra.mxu0 %v629
    %1162 = vmatpush.msra.mxu0 %v623
    %1163 = vmatpush.msra.mxu0 %v617
    %1164 = vmatpush.msra.mxu0 %v611
    %1165 = vmatpush.msra.mxu0 %v605
    %1166 = vmatpush.msra.mxu0 %v599
    %1167 = vmatpush.msra.mxu0 %v593
    %1168 = vmatpush.msra.mxu0 %v587
    %1169 = vmatpush.msra.mxu0 %v581
    %1170 = vmatpush.msra.mxu0 %v575
    %1171 = vmatpush.msra.mxu0 %v569
    %1172 = vmatpush.msra.mxu0 %v563
    %1173 = vmatpush.msra.mxu0 %v557
    %1174 = vmatpush.msra.mxu0 %v551
    %1175 = vmatpush.msra.mxu0 %v545
    %1176 = vmatpush.msra.mxu0 %v539
    %1177 = vmatmul.f32.gmra.mxu0 %v49
    %v1178 = vpop.f32.mrf.mxu0
    %v1179 = vadd.f32 %v1156, %v1178
    %1180 = vmatmul.f32.gmra.mxu0 %v55
    %v1181 = vpop.f32.mrf.mxu0
    %v1182 = vadd.f32 %v1159, %v1181
    %1183 = vdwg.mxu0
    %1184 = vmatpush.msra.mxu0 %v150
    %1185 = vmatpush.msra.mxu0 %v144
    %1186 = vmatpush.msra.mxu0 %v138
    %1187 = vmatpush.msra.mxu0 %v132
    %1188 = vmatpush.msra.mxu0 %v126
    %1189 = vmatpush.msra.mxu0 %v120
    %1190 = vmatpush.msra.mxu0 %v114
    %1191 = vmatpush.msra.mxu0 %v108
    %1192 = vmatpush.msra.mxu0 %v102
    %1193 = vmatpush.msra.mxu0 %v96
    %1194 = vmatpush.msra.mxu0 %v90
    %1195 = vmatpush.msra.mxu0 %v84
    %1196 = vmatpush.msra.mxu0 %v78
    %1197 = vmatpush.msra.mxu0 %v72
    %1198 = vmatpush.msra.mxu0 %v66
    %1199 = vmatpush.msra.mxu0 %v60
    %1200 = vmatmul.f32.gmra.mxu0 %v44
    %v1201 = vpop.f32.mrf.mxu0
    %v1202 = vadd.f32 0.0, %v1201
    %1203 = vmatmul.f32.gmra.mxu0 %v50
    %v1204 = vpop.f32.mrf.mxu0
    %v1205 = vadd.f32 0.0, %v1204
    %1206 = vdwg.mxu0
    %1207 = vmatpush.msra.mxu0 %v246
    %1208 = vmatpush.msra.mxu0 %v240
    %1209 = vmatpush.msra.mxu0 %v234
    %1210 = vmatpush.msra.mxu0 %v228
    %1211 = vmatpush.msra.mxu0 %v222
    %1212 = vmatpush.msra.mxu0 %v216
    %1213 = vmatpush.msra.mxu0 %v210
    %1214 = vmatpush.msra.mxu0 %v204
    %1215 = vmatpush.msra.mxu0 %v198
    %1216 = vmatpush.msra.mxu0 %v192
    %1217 = vmatpush.msra.mxu0 %v186
    %1218 = vmatpush.msra.mxu0 %v180
    %1219 = vmatpush.msra.mxu0 %v174
    %1220 = vmatpush.msra.mxu0 %v168
    %1221 = vmatpush.msra.mxu0 %v162
    %1222 = vmatpush.msra.mxu0 %v156
    %1223 = vmatmul.f32.gmra.mxu0 %v45
    %v1224 = vpop.f32.mrf.mxu0
    %v1225 = vadd.f32 %v1202, %v1224
    %1226 = vmatmul.f32.gmra.mxu0 %v51
    %v1227 = vpop.f32.mrf.mxu0
    %v1228 = vadd.f32 %v1205, %v1227
    %1229 = vdwg.mxu0
    %1230 = vmatpush.msra.mxu0 %v342
    %1231 = vmatpush.msra.mxu0 %v336
    %1232 = vmatpush.msra.mxu0 %v330
    %1233 = vmatpush.msra.mxu0 %v324
    %1234 = vmatpush.msra.mxu0 %v318
    %1235 = vmatpush.msra.mxu0 %v312
    %1236 = vmatpush.msra.mxu0 %v306
    %1237 = vmatpush.msra.mxu0 %v300
    %1238 = vmatpush.msra.mxu0 %v294
    %1239 = vmatpush.msra.mxu0 %v288
    %1240 = vmatpush.msra.mxu0 %v282
    %1241 = vmatpush.msra.mxu0 %v276
    %1242 = vmatpush.msra.mxu0 %v270
    %1243 = vmatpush.msra.mxu0 %v264
    %1244 = vmatpush.msra.mxu0 %v258
    %1245 = vmatpush.msra.mxu0 %v252
    %1246 = vmatmul.f32.gmra.mxu0 %v46
    %v1247 = vpop.f32.mrf.mxu0
    %v1248 = vadd.f32 %v1225, %v1247
    %1249 = vmatmul.f32.gmra.mxu0 %v52
    %v1250 = vpop.f32.mrf.mxu0
    %v1251 = vadd.f32 %v1228, %v1250
    %1252 = vdwg.mxu0
    %1253 = vmatpush.msra.mxu0 %v438
    %1254 = vmatpush.msra.mxu0 %v432
    %1255 = vmatpush.msra.mxu0 %v426
    %1256 = vmatpush.msra.mxu0 %v420
    %1257 = vmatpush.msra.mxu0 %v414
    %1258 = vmatpush.msra.mxu0 %v408
    %1259 = vmatpush.msra.mxu0 %v402
    %1260 = vmatpush.msra.mxu0 %v396
    %1261 = vmatpush.msra.mxu0 %v390
    %1262 = vmatpush.msra.mxu0 %v384
    %1263 = vmatpush.msra.mxu0 %v378
    %1264 = vmatpush.msra.mxu0 %v372
    %1265 = vmatpush.msra.mxu0 %v366
    %1266 = vmatpush.msra.mxu0 %v360
    %1267 = vmatpush.msra.mxu0 %v354
    %1268 = vmatpush.msra.mxu0 %v348
    %1269 = vmatmul.f32.gmra.mxu0 %v47
    %v1270 = vpop.f32.mrf.mxu0
    %v1271 = vadd.f32 %v1248, %v1270
    %1272 = vmatmul.f32.gmra.mxu0 %v53
    %v1273 = vpop.f32.mrf.mxu0
    %v1274 = vadd.f32 %v1251, %v1273
    %1275 = vdwg.mxu0
    %1276 = vmatpush.msra.mxu0 %v534
    %1277 = vmatpush.msra.mxu0 %v528
    %1278 = vmatpush.msra.mxu0 %v522
    %1279 = vmatpush.msra.mxu0 %v516
    %1280 = vmatpush.msra.mxu0 %v510
    %1281 = vmatpush.msra.mxu0 %v504
    %1282 = vmatpush.msra.mxu0 %v498
    %1283 = vmatpush.msra.mxu0 %v492
    %1284 = vmatpush.msra.mxu0 %v486
    %1285 = vmatpush.msra.mxu0 %v480
    %1286 = vmatpush.msra.mxu0 %v474
    %1287 = vmatpush.msra.mxu0 %v468
    %1288 = vmatpush.msra.mxu0 %v462
    %1289 = vmatpush.msra.mxu0 %v456
    %1290 = vmatpush.msra.mxu0 %v450
    %1291 = vmatpush.msra.mxu0 %v444
    %1292 = vmatmul.f32.gmra.mxu0 %v48
    %v1293 = vpop.f32.mrf.mxu0
    %v1294 = vadd.f32 %v1271, %v1293
    %1295 = vmatmul.f32.gmra.mxu0 %v54
    %v1296 = vpop.f32.mrf.mxu0
    %v1297 = vadd.f32 %v1274, %v1296
    %1298 = vdwg.mxu0
    %1299 = vmatpush.msra.mxu0 %v630
    %1300 = vmatpush.msra.mxu0 %v624
    %1301 = vmatpush.msra.mxu0 %v618
    %1302 = vmatpush.msra.mxu0 %v612
    %1303 = vmatpush.msra.mxu0 %v606
    %1304 = vmatpush.msra.mxu0 %v600
    %1305 = vmatpush.msra.mxu0 %v594
    %1306 = vmatpush.msra.mxu0 %v588
    %1307 = vmatpush.msra.mxu0 %v582
    %1308 = vmatpush.msra.mxu0 %v576
    %1309 = vmatpush.msra.mxu0 %v570
    %1310 = vmatpush.msra.mxu0 %v564
    %1311 = vmatpush.msra.mxu0 %v558
    %1312 = vmatpush.msra.mxu0 %v552
    %1313 = vmatpush.msra.mxu0 %v546
    %1314 = vmatpush.msra.mxu0 %v540
    %1315 = vmatmul.f32.gmra.mxu0 %v49
    %v1316 = vpop.f32.mrf.mxu0
    %v1317 = vadd.f32 %v1294, %v1316
    %1318 = vmatmul.f32.gmra.mxu0 %v55
    %v1319 = vpop.f32.mrf.mxu0
    %v1320 = vadd.f32 %v1297, %v1319
    %1321 = vdwg.mxu0
    %1322 = vmatpush.msra.mxu0 %v151
    %1323 = vmatpush.msra.mxu0 %v145
    %1324 = vmatpush.msra.mxu0 %v139
    %1325 = vmatpush.msra.mxu0 %v133
    %1326 = vmatpush.msra.mxu0 %v127
    %1327 = vmatpush.msra.mxu0 %v121
    %1328 = vmatpush.msra.mxu0 %v115
    %1329 = vmatpush.msra.mxu0 %v109
    %1330 = vmatpush.msra.mxu0 %v103
    %1331 = vmatpush.msra.mxu0 %v97
    %1332 = vmatpush.msra.mxu0 %v91
    %1333 = vmatpush.msra.mxu0 %v85
    %1334 = vmatpush.msra.mxu0 %v79
    %1335 = vmatpush.msra.mxu0 %v73
    %1336 = vmatpush.msra.mxu0 %v67
    %1337 = vmatpush.msra.mxu0 %v61
    %1338 = vmatmul.f32.gmra.mxu0 %v44
    %v1339 = vpop.f32.mrf.mxu0
    %v1340 = vadd.f32 0.0, %v1339
    %1341 = vmatmul.f32.gmra.mxu0 %v50
    %v1342 = vpop.f32.mrf.mxu0
    %v1343 = vadd.f32 0.0, %v1342
    %1344 = vdwg.mxu0
    %1345 = vmatpush.msra.mxu0 %v247
    %1346 = vmatpush.msra.mxu0 %v241
    %1347 = vmatpush.msra.mxu0 %v235
    %1348 = vmatpush.msra.mxu0 %v229
    %1349 = vmatpush.msra.mxu0 %v223
    %1350 = vmatpush.msra.mxu0 %v217
    %1351 = vmatpush.msra.mxu0 %v211
    %1352 = vmatpush.msra.mxu0 %v205
    %1353 = vmatpush.msra.mxu0 %v199
    %1354 = vmatpush.msra.mxu0 %v193
    %1355 = vmatpush.msra.mxu0 %v187
    %1356 = vmatpush.msra.mxu0 %v181
    %1357 = vmatpush.msra.mxu0 %v175
    %1358 = vmatpush.msra.mxu0 %v169
    %1359 = vmatpush.msra.mxu0 %v163
    %1360 = vmatpush.msra.mxu0 %v157
    %1361 = vmatmul.f32.gmra.mxu0 %v45
    %v1362 = vpop.f32.mrf.mxu0
    %v1363 = vadd.f32 %v1340, %v1362
    %1364 = vmatmul.f32.gmra.mxu0 %v51
    %v1365 = vpop.f32.mrf.mxu0
    %v1366 = vadd.f32 %v1343, %v1365
    %1367 = vdwg.mxu0
    %1368 = vmatpush.msra.mxu0 %v343
    %1369 = vmatpush.msra.mxu0 %v337
    %1370 = vmatpush.msra.mxu0 %v331
    %1371 = vmatpush.msra.mxu0 %v325
    %1372 = vmatpush.msra.mxu0 %v319
    %1373 = vmatpush.msra.mxu0 %v313
    %1374 = vmatpush.msra.mxu0 %v307
    %1375 = vmatpush.msra.mxu0 %v301
    %1376 = vmatpush.msra.mxu0 %v295
    %1377 = vmatpush.msra.mxu0 %v289
    %1378 = vmatpush.msra.mxu0 %v283
    %1379 = vmatpush.msra.mxu0 %v277
    %1380 = vmatpush.msra.mxu0 %v271
    %1381 = vmatpush.msra.mxu0 %v265
    %1382 = vmatpush.msra.mxu0 %v259
    %1383 = vmatpush.msra.mxu0 %v253
    %1384 = vmatmul.f32.gmra.mxu0 %v46
    %v1385 = vpop.f32.mrf.mxu0
    %v1386 = vadd.f32 %v1363, %v1385
    %1387 = vmatmul.f32.gmra.mxu0 %v52
    %v1388 = vpop.f32.mrf.mxu0
    %v1389 = vadd.f32 %v1366, %v1388
    %1390 = vdwg.mxu0
    %1391 = vmatpush.msra.mxu0 %v439
    %1392 = vmatpush.msra.mxu0 %v433
    %1393 = vmatpush.msra.mxu0 %v427
    %1394 = vmatpush.msra.mxu0 %v421
    %1395 = vmatpush.msra.mxu0 %v415
    %1396 = vmatpush.msra.mxu0 %v409
    %1397 = vmatpush.msra.mxu0 %v403
    %1398 = vmatpush.msra.mxu0 %v397
    %1399 = vmatpush.msra.mxu0 %v391
    %1400 = vmatpush.msra.mxu0 %v385
    %1401 = vmatpush.msra.mxu0 %v379
    %1402 = vmatpush.msra.mxu0 %v373
    %1403 = vmatpush.msra.mxu0 %v367
    %1404 = vmatpush.msra.mxu0 %v361
    %1405 = vmatpush.msra.mxu0 %v355
    %1406 = vmatpush.msra.mxu0 %v349
    %1407 = vmatmul.f32.gmra.mxu0 %v47
    %v1408 = vpop.f32.mrf.mxu0
    %v1409 = vadd.f32 %v1386, %v1408
    %1410 = vmatmul.f32.gmra.mxu0 %v53
    %v1411 = vpop.f32.mrf.mxu0
    %v1412 = vadd.f32 %v1389, %v1411
    %1413 = vdwg.mxu0
    %1414 = vmatpush.msra.mxu0 %v535
    %1415 = vmatpush.msra.mxu0 %v529
    %1416 = vmatpush.msra.mxu0 %v523
    %1417 = vmatpush.msra.mxu0 %v517
    %1418 = vmatpush.msra.mxu0 %v511
    %1419 = vmatpush.msra.mxu0 %v505
    %1420 = vmatpush.msra.mxu0 %v499
    %1421 = vmatpush.msra.mxu0 %v493
    %1422 = vmatpush.msra.mxu0 %v487
    %1423 = vmatpush.msra.mxu0 %v481
    %1424 = vmatpush.msra.mxu0 %v475
    %1425 = vmatpush.msra.mxu0 %v469
    %1426 = vmatpush.msra.mxu0 %v463
    %1427 = vmatpush.msra.mxu0 %v457
    %1428 = vmatpush.msra.mxu0 %v451
    %1429 = vmatpush.msra.mxu0 %v445
    %1430 = vmatmul.f32.gmra.mxu0 %v48
    %v1431 = vpop.f32.mrf.mxu0
    %v1432 = vadd.f32 %v1409, %v1431
    %1433 = vmatmul.f32.gmra.mxu0 %v54
    %v1434 = vpop.f32.mrf.mxu0
    %v1435 = vadd.f32 %v1412, %v1434
    %1436 = vdwg.mxu0
    %1437 = vmatpush.msra.mxu0 %v631
    %1438 = vmatpush.msra.mxu0 %v625
    %1439 = vmatpush.msra.mxu0 %v619
    %1440 = vmatpush.msra.mxu0 %v613
    %1441 = vmatpush.msra.mxu0 %v607
    %1442 = vmatpush.msra.mxu0 %v601
    %1443 = vmatpush.msra.mxu0 %v595
    %1444 = vmatpush.msra.mxu0 %v589
    %1445 = vmatpush.msra.mxu0 %v583
    %1446 = vmatpush.msra.mxu0 %v577
    %1447 = vmatpush.msra.mxu0 %v571
    %1448 = vmatpush.msra.mxu0 %v565
    %1449 = vmatpush.msra.mxu0 %v559
    %1450 = vmatpush.msra.mxu0 %v553
    %1451 = vmatpush.msra.mxu0 %v547
    %1452 = vmatpush.msra.mxu0 %v541
    %1453 = vmatmul.f32.gmra.mxu0 %v49
    %v1454 = vpop.f32.mrf.mxu0
    %v1455 = vadd.f32 %v1432, %v1454
    %1456 = vmatmul.f32.gmra.mxu0 %v55
    %v1457 = vpop.f32.mrf.mxu0
    %v1458 = vadd.f32 %v1435, %v1457
    %1459 = vdwg.mxu0
    %1460 = vst [vmem:[#allocation7] sm:$0xff] %v765
    %1461 = vst [vmem:[#allocation7 + $0x8] sm:$0xff] %v903
    %1462 = vst [vmem:[#allocation7 + $0x10] sm:$0xff] %v1041
    %1463 = vst [vmem:[#allocation7 + $0x18] sm:$0xff] %v1179
    %1464 = vst [vmem:[#allocation7 + $0x20] sm:$0xff] %v1317
    %1465 = vst [vmem:[#allocation7 + $0x28] sm:$0xff] %v1455
    %1466 = vst [vmem:[#allocation7 + $0x30] sm:$0xff] %v768
    %1467 = vst [vmem:[#allocation7 + $0x38] sm:$0xff] %v906
    %1468 = vst [vmem:[#allocation7 + $0x40] sm:$0xff] %v1044
    %1469 = vst [vmem:[#allocation7 + $0x48] sm:$0xff] %v1182
    %1470 = vst [vmem:[#allocation7 + $0x50] sm:$0xff] %v1320
    %1471 = vst [vmem:[#allocation7 + $0x58] sm:$0xff] %v1458
    // Predicated region
    $region18: #{tpu_custom_call.1} parent=1 // pred_check
      _
    $region19: #{tpu_custom_call.1} parent=1 // pred_check_branch
      %1473 = sbr.rel (0) target = $region21
    $region20: #{tpu_custom_call.1} parent=1 // pred_region
      %1475 = vsyncadd [#allocation4], 0
      %s1476 = sshll.u32 [#allocation7], 4
      %s1477 = int_to_ptr.vmem [resolvable:$true] %s1476
      %s1478 = sshll.u32 %s2, 4
      %s1479 = int_to_ptr.hbm [resolvable:$true] %s1478
      %1484 = dma.vmem_to_hbm [thread:$0]  %s1477, 1536, %s1479, [#allocation4], 768, 768, 48
    $region21: #{tpu_custom_call.1} parent=1 // pred_fallthru
      _
    // Predicated region
    $region22: #{tpu_custom_call.1} parent=1 // pred_check
      _
    $region23: #{tpu_custom_call.1} parent=1 // pred_check_branch
      %1486 = sbr.rel (0) target = $region25
    $region24: #{tpu_custom_call.1} parent=1 // pred_region
      %1488 = dma.done [#allocation4], 1536
    $region25: #{tpu_custom_call.1} parent=1 // pred_fallthru
      _
    %1489 = vsyncpa [#allocation3], 1
    %1490 = vsyncpa [#allocation6], 1
    %1491 = vsyncpa [#allocation4], 1

// kernel: tpu_custom_call.1
$region0: #{tpu_custom_call.1}
  #allocation0 [shape = 'u32[]', space=smem, size = 0x4, offset = 0x4, fixed_abs, tag = 'smem constant byte address 0x4 - core index']
  #allocation1 [shape = 'u32[72,128]{1,0:T(1,128)}', space=vmem, size = 0x9000, scoped, tag = 'internal scratch']
  %s0 = inlined_call_operand.hbm [shape: f32[16,768], index: 0, kind: input, shape index: {}]
  %s1 = inlined_call_operand.hbm [shape: f32[768,768], index: 1, kind: input, shape index: {}]
  %s2 = inlined_call_operand.hbm [shape: f32[16,768], index: 2, kind: output, shape index: {}]
  %s3 = sld [smem:[#allocation0]]
  $region26: #{tpu_custom_call.1} parent=0
    _
  %s5 = ssub.s32 1, %s3
  %s6 = scalar_select 0, %s5, %s3
  $region1: #{tpu_custom_call.1} parent=0
    #allocation2 [shape = 'u8[49152]{0}', space=vmem, size = 0xc000, scoped, tag = 'input window, operand 0, single buffered']
    #allocation3 [shape = 's32[1]{0}', space=sflag, size = 0x4, scoped, tag = 'scoped memory for tpu_custom_call.1']
    #allocation4 [shape = 's32[1]{0}', space=sflag, size = 0x4, scoped, tag = 'scoped memory for tpu_custom_call.1']
    #allocation5 [shape = 'u8[2359296]{0}', space=vmem, size = 0x240000, scoped, tag = 'input window, operand 1, single buffered']
    #allocation6 [shape = 's32[1]{0}', space=sflag, size = 0x4, scoped, tag = 'scoped memory for tpu_custom_call.1']
    #allocation7 [shape = 'u8[49152]{0}', space=vmem, size = 0xc000, scoped, tag = 'output window, operand 0, single buffered']
    %7 = vsyncpa [#allocation3], 0
    %8 = vsyncpa [#allocation6], 0
    %9 = vsyncpa [#allocation4], 0
    // Predicated region
    $region2: #{tpu_custom_call.1} parent=1 // pred_check
      _
    $region3: #{tpu_custom_call.1} parent=1 // pred_check_branch
      %11 = sbr.rel (0) target = $region5
    $region4: #{tpu_custom_call.1} parent=1 // pred_region
      %13 = vsyncadd [#allocation3], 0
      %s14 = sshll.u32 %s0, 4
      %s15 = int_to_ptr.hbm [resolvable:$true] %s14
      %s16 = sshll.u32 [#allocation2], 4
      %s17 = int_to_ptr.vmem [resolvable:$true] %s16
      %22 = dma.hbm_to_vmem [thread:$0]  %s15, 1536, %s17, [#allocation3], 768, 768, 48
    $region5: #{tpu_custom_call.1} parent=1 // pred_fallthru
      _
    // Predicated region
    $region6: #{tpu_custom_call.1} parent=1 // pred_check
      _
    $region7: #{tpu_custom_call.1} parent=1 // pred_check_branch
      %24 = sbr.rel (0) target = $region9
    $region8: #{tpu_custom_call.1} parent=1 // pred_region
      %26 = vsyncadd [#allocation6], 0
      %s27 = sshll.u32 %s1, 4
      %s28 = int_to_ptr.hbm [resolvable:$true] %s27
      %s29 = sshll.u32 [#allocation5], 4
      %s30 = int_to_ptr.vmem [resolvable:$true] %s29
      %35 = dma.hbm_to_vmem [thread:$0]  %s28, 73728, %s30, [#allocation6], 768, 768, 48
    $region9: #{tpu_custom_call.1} parent=1 // pred_fallthru
      _
    // Predicated region
    $region10: #{tpu_custom_call.1} parent=1 // pred_check
      _
    $region11: #{tpu_custom_call.1} parent=1 // pred_check_branch
      %37 = sbr.rel (0) target = $region13
    $region12: #{tpu_custom_call.1} parent=1 // pred_region
      %39 = dma.done [#allocation3], 1536
    $region13: #{tpu_custom_call.1} parent=1 // pred_fallthru
      _
    // Predicated region
    $region14: #{tpu_custom_call.1} parent=1 // pred_check
      _
    $region15: #{tpu_custom_call.1} parent=1 // pred_check_branch
      %41 = sbr.rel (0) target = $region17
    $region16: #{tpu_custom_call.1} parent=1 // pred_region
      %43 = dma.done [#allocation6], 73728
    $region17: #{tpu_custom_call.1} parent=1 // pred_fallthru
      _
    %v44 = vld [vmem:[#allocation2] sm:$0xff]
    %v45 = vld [vmem:[#allocation2 + $0x8] sm:$0xff]
    %v46 = vld [vmem:[#allocation2 + $0x10] sm:$0xff]
    %v47 = vld [vmem:[#allocation2 + $0x18] sm:$0xff]
    %v48 = vld [vmem:[#allocation2 + $0x20] sm:$0xff]
    %v49 = vld [vmem:[#allocation2 + $0x28] sm:$0xff]
    %v50 = vld [vmem:[#allocation2 + $0x30] sm:$0xff]
    %v51 = vld [vmem:[#allocation2 + $0x38] sm:$0xff]
    %v52 = vld [vmem:[#allocation2 + $0x40] sm:$0xff]
    %v53 = vld [vmem:[#allocation2 + $0x48] sm:$0xff]
    %v54 = vld [vmem:[#allocation2 + $0x50] sm:$0xff]
    %v55 = vld [vmem:[#allocation2 + $0x58] sm:$0xff]
    %v56 = vld [vmem:[#allocation5] sm:$0xff]
    %v57 = vld [vmem:[#allocation5 + $0x8] sm:$0xff]
    %v58 = vld [vmem:[#allocation5 + $0x10] sm:$0xff]
    %v59 = vld [vmem:[#allocation5 + $0x18] sm:$0xff]
    %v60 = vld [vmem:[#allocation5 + $0x20] sm:$0xff]
    %v61 = vld [vmem:[#allocation5 + $0x28] sm:$0xff]
    %v62 = vld [vmem:[#allocation5 + $0x30] sm:$0xff]
    %v63 = vld [vmem:[#allocation5 + $0x38] sm:$0xff]
    %v64 = vld [vmem:[#allocation5 + $0x40] sm:$0xff]
    %v65 = vld [vmem:[#allocation5 + $0x48] sm:$0xff]
    %v66 = vld [vmem:[#allocation5 + $0x50] sm:$0xff]
    %v67 = vld [vmem:[#allocation5 + $0x58] sm:$0xff]
    %v68 = vld [vmem:[#allocation5 + $0x60] sm:$0xff]
    %v69 = vld [vmem:[#allocation5 + $0x68] sm:$0xff]
    %v70 = vld [vmem:[#allocation5 + $0x70] sm:$0xff]
    %v71 = vld [vmem:[#allocation5 + $0x78] sm:$0xff]
    %v72 = vld [vmem:[#allocation5 + $0x80] sm:$0xff]
    %v73 = vld [vmem:[#allocation5 + $0x88] sm:$0xff]
    %v74 = vld [vmem:[#allocation5 + $0x90] sm:$0xff]
    %v75 = vld [vmem:[#allocation5 + $0x98] sm:$0xff]
    %v76 = vld [vmem:[#allocation5 + $0xa0] sm:$0xff]
    %v77 = vld [vmem:[#allocation5 + $0xa8] sm:$0xff]
    %v78 = vld [vmem:[#allocation5 + $0xb0] sm:$0xff]
    %v79 = vld [vmem:[#allocation5 + $0xb8] sm:$0xff]
    %v80 = vld [vmem:[#allocation5 + $0xc0] sm:$0xff]
    %v81 = vld [vmem:[#allocation5 + $0xc8] sm:$0xff]
    %v82 = vld [vmem:[#allocation5 + $0xd0] sm:$0xff]
    %v83 = vld [vmem:[#allocation5 + $0xd8] sm:$0xff]
    %v84 = vld [vmem:[#allocation5 + $0xe0] sm:$0xff]
    %v85 = vld [vmem:[#allocation5 + $0xe8] sm:$0xff]
    %v86 = vld [vmem:[#allocation5 + $0xf0] sm:$0xff]
    %v87 = vld [vmem:[#allocation5 + $0xf8] sm:$0xff]
    %v88 = vld [vmem:[#allocation5 + $0x100] sm:$0xff]
    %v89 = vld [vmem:[#allocation5 + $0x108] sm:$0xff]
    %v90 = vld [vmem:[#allocation5 + $0x110] sm:$0xff]
    %v91 = vld [vmem:[#allocation5 + $0x118] sm:$0xff]
    %v92 = vld [vmem:[#allocation5 + $0x120] sm:$0xff]
    %v93 = vld [vmem:[#allocation5 + $0x128] sm:$0xff]
    %v94 = vld [vmem:[#allocation5 + $0x130] sm:$0xff]
    %v95 = vld [vmem:[#allocation5 + $0x138] sm:$0xff]
    %v96 = vld [vmem:[#allocation5 + $0x140] sm:$0xff]
    %v97 = vld [vmem:[#allocation5 + $0x148] sm:$0xff]
    %v98 = vld [vmem:[#allocation5 + $0x150] sm:$0xff]
    %v99 = vld [vmem:[#allocation5 + $0x158] sm:$0xff]
    %v100 = vld [vmem:[#allocation5 + $0x160] sm:$0xff]
    %v101 = vld [vmem:[#allocation5 + $0x168] sm:$0xff]
    %v102 = vld [vmem:[#allocation5 + $0x170] sm:$0xff]
    %v103 = vld [vmem:[#allocation5 + $0x178] sm:$0xff]
    %v104 = vld [vmem:[#allocation5 + $0x180] sm:$0xff]
    %v105 = vld [vmem:[#allocation5 + $0x188] sm:$0xff]
    %v106 = vld [vmem:[#allocation5 + $0x190] sm:$0xff]
    %v107 = vld [vmem:[#allocation5 + $0x198] sm:$0xff]
    %v108 = vld [vmem:[#allocation5 + $0x1a0] sm:$0xff]
    %v109 = vld [vmem:[#allocation5 + $0x1a8] sm:$0xff]
    %v110 = vld [vmem:[#allocation5 + $0x1b0] sm:$0xff]
    %v111 = vld [vmem:[#allocation5 + $0x1b8] sm:$0xff]
    %v112 = vld [vmem:[#allocation5 + $0x1c0] sm:$0xff]
    %v113 = vld [vmem:[#allocation5 + $0x1c8] sm:$0xff]
    %v114 = vld [vmem:[#allocation5 + $0x1d0] sm:$0xff]
    %v115 = vld [vmem:[#allocation5 + $0x1d8] sm:$0xff]
    %v116 = vld [vmem:[#allocation5 + $0x1e0] sm:$0xff]
    %v117 = vld [vmem:[#allocation5 + $0x1e8] sm:$0xff]
    %v118 = vld [vmem:[#allocation5 + $0x1f0] sm:$0xff]
    %v119 = vld [vmem:[#allocation5 + $0x1f8] sm:$0xff]
    %v120 = vld [vmem:[#allocation5 + $0x200] sm:$0xff]
    %v121 = vld [vmem:[#allocation5 + $0x208] sm:$0xff]
    %v122 = vld [vmem:[#allocation5 + $0x210] sm:$0xff]
    %v123 = vld [vmem:[#allocation5 + $0x218] sm:$0xff]
    %v124 = vld [vmem:[#allocation5 + $0x220] sm:$0xff]
    %v125 = vld [vmem:[#allocation5 + $0x228] sm:$0xff]
    %v126 = vld [vmem:[#allocation5 + $0x230] sm:$0xff]
    %v127 = vld [vmem:[#allocation5 + $0x238] sm:$0xff]
    %v128 = vld [vmem:[#allocation5 + $0x240] sm:$0xff]
    %v129 = vld [vmem:[#allocation5 + $0x248] sm:$0xff]
    %v130 = vld [vmem:[#allocation5 + $0x250] sm:$0xff]
    %v131 = vld [vmem:[#allocation5 + $0x258] sm:$0xff]
    %v132 = vld [vmem:[#allocation5 + $0x260] sm:$0xff]
    %v133 = vld [vmem:[#allocation5 + $0x268] sm:$0xff]
    %v134 = vld [vmem:[#allocation5 + $0x270] sm:$0xff]
    %v135 = vld [vmem:[#allocation5 + $0x278] sm:$0xff]
    %v136 = vld [vmem:[#allocation5 + $0x280] sm:$0xff]
    %v137 = vld [vmem:[#allocation5 + $0x288] sm:$0xff]
    %v138 = vld [vmem:[#allocation5 + $0x290] sm:$0xff]
    %v139 = vld [vmem:[#allocation5 + $0x298] sm:$0xff]
    %v140 = vld [vmem:[#allocation5 + $0x2a0] sm:$0xff]
    %v141 = vld [vmem:[#allocation5 + $0x2a8] sm:$0xff]
    %v142 = vld [vmem:[#allocation5 + $0x2b0] sm:$0xff]
    %v143 = vld [vmem:[#allocation5 + $0x2b8] sm:$0xff]
    %v144 = vld [vmem:[#allocation5 + $0x2c0] sm:$0xff]
    %v145 = vld [vmem:[#allocation5 + $0x2c8] sm:$0xff]
    %v146 = vld [vmem:[#allocation5 + $0x2d0] sm:$0xff]
    %v147 = vld [vmem:[#allocation5 + $0x2d8] sm:$0xff]
    %v148 = vld [vmem:[#allocation5 + $0x2e0] sm:$0xff]
    %v149 = vld [vmem:[#allocation5 + $0x2e8] sm:$0xff]
    %v150 = vld [vmem:[#allocation5 + $0x2f0] sm:$0xff]
    %v151 = vld [vmem:[#allocation5 + $0x2f8] sm:$0xff]
    %v152 = vld [vmem:[#allocation5 + $0x300] sm:$0xff]
    %v153 = vld [vmem:[#allocation5 + $0x308] sm:$0xff]
    %v154 = vld [vmem:[#allocation5 + $0x310] sm:$0xff]
    %v155 = vld [vmem:[#allocation5 + $0x318] sm:$0xff]
    %v156 = vld [vmem:[#allocation5 + $0x320] sm:$0xff]
    %v157 = vld [vmem:[#allocation5 + $0x328] sm:$0xff]
    %v158 = vld [vmem:[#allocation5 + $0x330] sm:$0xff]
    %v159 = vld [vmem:[#allocation5 + $0x338] sm:$0xff]
    %v160 = vld [vmem:[#allocation5 + $0x340] sm:$0xff]
    %v161 = vld [vmem:[#allocation5 + $0x348] sm:$0xff]
    %v162 = vld [vmem:[#allocation5 + $0x350] sm:$0xff]
    %v163 = vld [vmem:[#allocation5 + $0x358] sm:$0xff]
    %v164 = vld [vmem:[#allocation5 + $0x360] sm:$0xff]
    %v165 = vld [vmem:[#allocation5 + $0x368] sm:$0xff]
    %v166 = vld [vmem:[#allocation5 + $0x370] sm:$0xff]
    %v167 = vld [vmem:[#allocation5 + $0x378] sm:$0xff]
    %v168 = vld [vmem:[#allocation5 + $0x380] sm:$0xff]
    %v169 = vld [vmem:[#allocation5 + $0x388] sm:$0xff]
    %v170 = vld [vmem:[#allocation5 + $0x390] sm:$0xff]
    %v171 = vld [vmem:[#allocation5 + $0x398] sm:$0xff]
    %v172 = vld [vmem:[#allocation5 + $0x3a0] sm:$0xff]
    %v173 = vld [vmem:[#allocation5 + $0x3a8] sm:$0xff]
    %v174 = vld [vmem:[#allocation5 + $0x3b0] sm:$0xff]
    %v175 = vld [vmem:[#allocation5 + $0x3b8] sm:$0xff]
    %v176 = vld [vmem:[#allocation5 + $0x3c0] sm:$0xff]
    %v177 = vld [vmem:[#allocation5 + $0x3c8] sm:$0xff]
    %v178 = vld [vmem:[#allocation5 + $0x3d0] sm:$0xff]
    %v179 = vld [vmem:[#allocation5 + $0x3d8] sm:$0xff]
    %v180 = vld [vmem:[#allocation5 + $0x3e0] sm:$0xff]
    %v181 = vld [vmem:[#allocation5 + $0x3e8] sm:$0xff]
    %v182 = vld [vmem:[#allocation5 + $0x3f0] sm:$0xff]
    %v183 = vld [vmem:[#allocation5 + $0x3f8] sm:$0xff]
    %v184 = vld [vmem:[#allocation5 + $0x400] sm:$0xff]
    %v185 = vld [vmem:[#allocation5 + $0x408] sm:$0xff]
    %v186 = vld [vmem:[#allocation5 + $0x410] sm:$0xff]
    %v187 = vld [vmem:[#allocation5 + $0x418] sm:$0xff]
    %v188 = vld [vmem:[#allocation5 + $0x420] sm:$0xff]
    %v189 = vld [vmem:[#allocation5 + $0x428] sm:$0xff]
    %v190 = vld [vmem:[#allocation5 + $0x430] sm:$0xff]
    %v191 = vld [vmem:[#allocation5 + $0x438] sm:$0xff]
    %v192 = vld [vmem:[#allocation5 + $0x440] sm:$0xff]
    %v193 = vld [vmem:[#allocation5 + $0x448] sm:$0xff]
    %v194 = vld [vmem:[#allocation5 + $0x450] sm:$0xff]
    %v195 = vld [vmem:[#allocation5 + $0x458] sm:$0xff]
    %v196 = vld [vmem:[#allocation5 + $0x460] sm:$0xff]
    %v197 = vld [vmem:[#allocation5 + $0x468] sm:$0xff]
    %v198 = vld [vmem:[#allocation5 + $0x470] sm:$0xff]
    %v199 = vld [vmem:[#allocation5 + $0x478] sm:$0xff]
    %v200 = vld [vmem:[#allocation5 + $0x480] sm:$0xff]
    %v201 = vld [vmem:[#allocation5 + $0x488] sm:$0xff]
    %v202 = vld [vmem:[#allocation5 + $0x490] sm:$0xff]
    %v203 = vld [vmem:[#allocation5 + $0x498] sm:$0xff]
    %v204 = vld [vmem:[#allocation5 + $0x4a0] sm:$0xff]
    %v205 = vld [vmem:[#allocation5 + $0x4a8] sm:$0xff]
    %v206 = vld [vmem:[#allocation5 + $0x4b0] sm:$0xff]
    %v207 = vld [vmem:[#allocation5 + $0x4b8] sm:$0xff]
    %v208 = vld [vmem:[#allocation5 + $0x4c0] sm:$0xff]
    %v209 = vld [vmem:[#allocation5 + $0x4c8] sm:$0xff]
    %v210 = vld [vmem:[#allocation5 + $0x4d0] sm:$0xff]
    %v211 = vld [vmem:[#allocation5 + $0x4d8] sm:$0xff]
    %v212 = vld [vmem:[#allocation5 + $0x4e0] sm:$0xff]
    %v213 = vld [vmem:[#allocation5 + $0x4e8] sm:$0xff]
    %v214 = vld [vmem:[#allocation5 + $0x4f0] sm:$0xff]
    %v215 = vld [vmem:[#allocation5 + $0x4f8] sm:$0xff]
    %v216 = vld [vmem:[#allocation5 + $0x500] sm:$0xff]
    %v217 = vld [vmem:[#allocation5 + $0x508] sm:$0xff]
    %v218 = vld [vmem:[#allocation5 + $0x510] sm:$0xff]
    %v219 = vld [vmem:[#allocation5 + $0x518] sm:$0xff]
    %v220 = vld [vmem:[#allocation5 + $0x520] sm:$0xff]
    %v221 = vld [vmem:[#allocation5 + $0x528] sm:$0xff]
    %v222 = vld [vmem:[#allocation5 + $0x530] sm:$0xff]
    %v223 = vld [vmem:[#allocation5 + $0x538] sm:$0xff]
    %v224 = vld [vmem:[#allocation5 + $0x540] sm:$0xff]
    %v225 = vld [vmem:[#allocation5 + $0x548] sm:$0xff]
    %v226 = vld [vmem:[#allocation5 + $0x550] sm:$0xff]
    %v227 = vld [vmem:[#allocation5 + $0x558] sm:$0xff]
    %v228 = vld [vmem:[#allocation5 + $0x560] sm:$0xff]
    %v229 = vld [vmem:[#allocation5 + $0x568] sm:$0xff]
    %v230 = vld [vmem:[#allocation5 + $0x570] sm:$0xff]
    %v231 = vld [vmem:[#allocation5 + $0x578] sm:$0xff]
    %v232 = vld [vmem:[#allocation5 + $0x580] sm:$0xff]
    %v233 = vld [vmem:[#allocation5 + $0x588] sm:$0xff]
    %v234 = vld [vmem:[#allocation5 + $0x590] sm:$0xff]
    %v235 = vld [vmem:[#allocation5 + $0x598] sm:$0xff]
    %v236 = vld [vmem:[#allocation5 + $0x5a0] sm:$0xff]
    %v237 = vld [vmem:[#allocation5 + $0x5a8] sm:$0xff]
    %v238 = vld [vmem:[#allocation5 + $0x5b0] sm:$0xff]
    %v239 = vld [vmem:[#allocation5 + $0x5b8] sm:$0xff]
    %v240 = vld [vmem:[#allocation5 + $0x5c0] sm:$0xff]
    %v241 = vld [vmem:[#allocation5 + $0x5c8] sm:$0xff]
    %v242 = vld [vmem:[#allocation5 + $0x5d0] sm:$0xff]
    %v243 = vld [vmem:[#allocation5 + $0x5d8] sm:$0xff]
    %v244 = vld [vmem:[#allocation5 + $0x5e0] sm:$0xff]
    %v245 = vld [vmem:[#allocation5 + $0x5e8] sm:$0xff]
    %v246 = vld [vmem:[#allocation5 + $0x5f0] sm:$0xff]
    %v247 = vld [vmem:[#allocation5 + $0x5f8] sm:$0xff]
    %v248 = vld [vmem:[#allocation5 + $0x600] sm:$0xff]
    %v249 = vld [vmem:[#allocation5 + $0x608] sm:$0xff]
    %v250 = vld [vmem:[#allocation5 + $0x610] sm:$0xff]
    %v251 = vld [vmem:[#allocation5 + $0x618] sm:$0xff]
    %v252 = vld [vmem:[#allocation5 + $0x620] sm:$0xff]
    %v253 = vld [vmem:[#allocation5 + $0x628] sm:$0xff]
    %v254 = vld [vmem:[#allocation5 + $0x630] sm:$0xff]
    %v255 = vld [vmem:[#allocation5 + $0x638] sm:$0xff]
    %v256 = vld [vmem:[#allocation5 + $0x640] sm:$0xff]
    %v257 = vld [vmem:[#allocation5 + $0x648] sm:$0xff]
    %v258 = vld [vmem:[#allocation5 + $0x650] sm:$0xff]
    %v259 = vld [vmem:[#allocation5 + $0x658] sm:$0xff]
    %v260 = vld [vmem:[#allocation5 + $0x660] sm:$0xff]
    %v261 = vld [vmem:[#allocation5 + $0x668] sm:$0xff]
    %v262 = vld [vmem:[#allocation5 + $0x670] sm:$0xff]
    %v263 = vld [vmem:[#allocation5 + $0x678] sm:$0xff]
    %v264 = vld [vmem:[#allocation5 + $0x680] sm:$0xff]
    %v265 = vld [vmem:[#allocation5 + $0x688] sm:$0xff]
    %v266 = vld [vmem:[#allocation5 + $0x690] sm:$0xff]
    %v267 = vld [vmem:[#allocation5 + $0x698] sm:$0xff]
    %v268 = vld [vmem:[#allocation5 + $0x6a0] sm:$0xff]
    %v269 = vld [vmem:[#allocation5 + $0x6a8] sm:$0xff]
    %v270 = vld [vmem:[#allocation5 + $0x6b0] sm:$0xff]
    %v271 = vld [vmem:[#allocation5 + $0x6b8] sm:$0xff]
    %v272 = vld [vmem:[#allocation5 + $0x6c0] sm:$0xff]
    %v273 = vld [vmem:[#allocation5 + $0x6c8] sm:$0xff]
    %v274 = vld [vmem:[#allocation5 + $0x6d0] sm:$0xff]
    %v275 = vld [vmem:[#allocation5 + $0x6d8] sm:$0xff]
    %v276 = vld [vmem:[#allocation5 + $0x6e0] sm:$0xff]
    %v277 = vld [vmem:[#allocation5 + $0x6e8] sm:$0xff]
    %v278 = vld [vmem:[#allocation5 + $0x6f0] sm:$0xff]
    %v279 = vld [vmem:[#allocation5 + $0x6f8] sm:$0xff]
    %v280 = vld [vmem:[#allocation5 + $0x700] sm:$0xff]
    %v281 = vld [vmem:[#allocation5 + $0x708] sm:$0xff]
    %v282 = vld [vmem:[#allocation5 + $0x710] sm:$0xff]
    %v283 = vld [vmem:[#allocation5 + $0x718] sm:$0xff]
    %v284 = vld [vmem:[#allocation5 + $0x720] sm:$0xff]
    %v285 = vld [vmem:[#allocation5 + $0x728] sm:$0xff]
    %v286 = vld [vmem:[#allocation5 + $0x730] sm:$0xff]
    %v287 = vld [vmem:[#allocation5 + $0x738] sm:$0xff]
    %v288 = vld [vmem:[#allocation5 + $0x740] sm:$0xff]
    %v289 = vld [vmem:[#allocation5 + $0x748] sm:$0xff]
    %v290 = vld [vmem:[#allocation5 + $0x750] sm:$0xff]
    %v291 = vld [vmem:[#allocation5 + $0x758] sm:$0xff]
    %v292 = vld [vmem:[#allocation5 + $0x760] sm:$0xff]
    %v293 = vld [vmem:[#allocation5 + $0x768] sm:$0xff]
    %v294 = vld [vmem:[#allocation5 + $0x770] sm:$0xff]
    %v295 = vld [vmem:[#allocation5 + $0x778] sm:$0xff]
    %v296 = vld [vmem:[#allocation5 + $0x780] sm:$0xff]
    %v297 = vld [vmem:[#allocation5 + $0x788] sm:$0xff]
    %v298 = vld [vmem:[#allocation5 + $0x790] sm:$0xff]
    %v299 = vld [vmem:[#allocation5 + $0x798] sm:$0xff]
    %v300 = vld [vmem:[#allocation5 + $0x7a0] sm:$0xff]
    %v301 = vld [vmem:[#allocation5 + $0x7a8] sm:$0xff]
    %v302 = vld [vmem:[#allocation5 + $0x7b0] sm:$0xff]
    %v303 = vld [vmem:[#allocation5 + $0x7b8] sm:$0xff]
    %v304 = vld [vmem:[#allocation5 + $0x7c0] sm:$0xff]
    %v305 = vld [vmem:[#allocation5 + $0x7c8] sm:$0xff]
    %v306 = vld [vmem:[#allocation5 + $0x7d0] sm:$0xff]
    %v307 = vld [vmem:[#allocation5 + $0x7d8] sm:$0xff]
    %v308 = vld [vmem:[#allocation5 + $0x7e0] sm:$0xff]
    %v309 = vld [vmem:[#allocation5 + $0x7e8] sm:$0xff]
    %v310 = vld [vmem:[#allocation5 + $0x7f0] sm:$0xff]
    %v311 = vld [vmem:[#allocation5 + $0x7f8] sm:$0xff]
    %v312 = vld [vmem:[#allocation5 + $0x800] sm:$0xff]
    %v313 = vld [vmem:[#allocation5 + $0x808] sm:$0xff]
    %v314 = vld [vmem:[#allocation5 + $0x810] sm:$0xff]
    %v315 = vld [vmem:[#allocation5 + $0x818] sm:$0xff]
    %v316 = vld [vmem:[#allocation5 + $0x820] sm:$0xff]
    %v317 = vld [vmem:[#allocation5 + $0x828] sm:$0xff]
    %v318 = vld [vmem:[#allocation5 + $0x830] sm:$0xff]
    %v319 = vld [vmem:[#allocation5 + $0x838] sm:$0xff]
    %v320 = vld [vmem:[#allocation5 + $0x840] sm:$0xff]
    %v321 = vld [vmem:[#allocation5 + $0x848] sm:$0xff]
    %v322 = vld [vmem:[#allocation5 + $0x850] sm:$0xff]
    %v323 = vld [vmem:[#allocation5 + $0x858] sm:$0xff]
    %v324 = vld [vmem:[#allocation5 + $0x860] sm:$0xff]
    %v325 = vld [vmem:[#allocation5 + $0x868] sm:$0xff]
    %v326 = vld [vmem:[#allocation5 + $0x870] sm:$0xff]
    %v327 = vld [vmem:[#allocation5 + $0x878] sm:$0xff]
    %v328 = vld [vmem:[#allocation5 + $0x880] sm:$0xff]
    %v329 = vld [vmem:[#allocation5 + $0x888] sm:$0xff]
    %v330 = vld [vmem:[#allocation5 + $0x890] sm:$0xff]
    %v331 = vld [vmem:[#allocation5 + $0x898] sm:$0xff]
    %v332 = vld [vmem:[#allocation5 + $0x8a0] sm:$0xff]
    %v333 = vld [vmem:[#allocation5 + $0x8a8] sm:$0xff]
    %v334 = vld [vmem:[#allocation5 + $0x8b0] sm:$0xff]
    %v335 = vld [vmem:[#allocation5 + $0x8b8] sm:$0xff]
    %v336 = vld [vmem:[#allocation5 + $0x8c0] sm:$0xff]
    %v337 = vld [vmem:[#allocation5 + $0x8c8] sm:$0xff]
    %v338 = vld [vmem:[#allocation5 + $0x8d0] sm:$0xff]
    %v339 = vld [vmem:[#allocation5 + $0x8d8] sm:$0xff]
    %v340 = vld [vmem:[#allocation5 + $0x8e0] sm:$0xff]
    %v341 = vld [vmem:[#allocation5 + $0x8e8] sm:$0xff]
    %v342 = vld [vmem:[#allocation5 + $0x8f0] sm:$0xff]
    %v343 = vld [vmem:[#allocation5 + $0x8f8] sm:$0xff]
    %v344 = vld [vmem:[#allocation5 + $0x900] sm:$0xff]
    %v345 = vld [vmem:[#allocation5 + $0x908] sm:$0xff]
    %v346 = vld [vmem:[#allocation5 + $0x910] sm:$0xff]
    %v347 = vld [vmem:[#allocation5 + $0x918] sm:$0xff]
    %v348 = vld [vmem:[#allocation5 + $0x920] sm:$0xff]
    %v349 = vld [vmem:[#allocation5 + $0x928] sm:$0xff]
    %v350 = vld [vmem:[#allocation5 + $0x930] sm:$0xff]
    %v351 = vld [vmem:[#allocation5 + $0x938] sm:$0xff]
    %v352 = vld [vmem:[#allocation5 + $0x940] sm:$0xff]
    %v353 = vld [vmem:[#allocation5 + $0x948] sm:$0xff]
    %v354 = vld [vmem:[#allocation5 + $0x950] sm:$0xff]
    %v355 = vld [vmem:[#allocation5 + $0x958] sm:$0xff]
    %v356 = vld [vmem:[#allocation5 + $0x960] sm:$0xff]
    %v357 = vld [vmem:[#allocation5 + $0x968] sm:$0xff]
    %v358 = vld [vmem:[#allocation5 + $0x970] sm:$0xff]
    %v359 = vld [vmem:[#allocation5 + $0x978] sm:$0xff]
    %v360 = vld [vmem:[#allocation5 + $0x980] sm:$0xff]
    %v361 = vld [vmem:[#allocation5 + $0x988] sm:$0xff]
    %v362 = vld [vmem:[#allocation5 + $0x990] sm:$0xff]
    %v363 = vld [vmem:[#allocation5 + $0x998] sm:$0xff]
    %v364 = vld [vmem:[#allocation5 + $0x9a0] sm:$0xff]
    %v365 = vld [vmem:[#allocation5 + $0x9a8] sm:$0xff]
    %v366 = vld [vmem:[#allocation5 + $0x9b0] sm:$0xff]
    %v367 = vld [vmem:[#allocation5 + $0x9b8] sm:$0xff]
    %v368 = vld [vmem:[#allocation5 + $0x9c0] sm:$0xff]
    %v369 = vld [vmem:[#allocation5 + $0x9c8] sm:$0xff]
    %v370 = vld [vmem:[#allocation5 + $0x9d0] sm:$0xff]
    %v371 = vld [vmem:[#allocation5 + $0x9d8] sm:$0xff]
    %v372 = vld [vmem:[#allocation5 + $0x9e0] sm:$0xff]
    %v373 = vld [vmem:[#allocation5 + $0x9e8] sm:$0xff]
    %v374 = vld [vmem:[#allocation5 + $0x9f0] sm:$0xff]
    %v375 = vld [vmem:[#allocation5 + $0x9f8] sm:$0xff]
    %v376 = vld [vmem:[#allocation5 + $0xa00] sm:$0xff]
    %v377 = vld [vmem:[#allocation5 + $0xa08] sm:$0xff]
    %v378 = vld [vmem:[#allocation5 + $0xa10] sm:$0xff]
    %v379 = vld [vmem:[#allocation5 + $0xa18] sm:$0xff]
    %v380 = vld [vmem:[#allocation5 + $0xa20] sm:$0xff]
    %v381 = vld [vmem:[#allocation5 + $0xa28] sm:$0xff]
    %v382 = vld [vmem:[#allocation5 + $0xa30] sm:$0xff]
    %v383 = vld [vmem:[#allocation5 + $0xa38] sm:$0xff]
    %v384 = vld [vmem:[#allocation5 + $0xa40] sm:$0xff]
    %v385 = vld [vmem:[#allocation5 + $0xa48] sm:$0xff]
    %v386 = vld [vmem:[#allocation5 + $0xa50] sm:$0xff]
    %v387 = vld [vmem:[#allocation5 + $0xa58] sm:$0xff]
    %v388 = vld [vmem:[#allocation5 + $0xa60] sm:$0xff]
    %v389 = vld [vmem:[#allocation5 + $0xa68] sm:$0xff]
    %v390 = vld [vmem:[#allocation5 + $0xa70] sm:$0xff]
    %v391 = vld [vmem:[#allocation5 + $0xa78] sm:$0xff]
    %v392 = vld [vmem:[#allocation5 + $0xa80] sm:$0xff]
    %v393 = vld [vmem:[#allocation5 + $0xa88] sm:$0xff]
    %v394 = vld [vmem:[#allocation5 + $0xa90] sm:$0xff]
    %v395 = vld [vmem:[#allocation5 + $0xa98] sm:$0xff]
    %v396 = vld [vmem:[#allocation5 + $0xaa0] sm:$0xff]
    %v397 = vld [vmem:[#allocation5 + $0xaa8] sm:$0xff]
    %v398 = vld [vmem:[#allocation5 + $0xab0] sm:$0xff]
    %v399 = vld [vmem:[#allocation5 + $0xab8] sm:$0xff]
    %v400 = vld [vmem:[#allocation5 + $0xac0] sm:$0xff]
    %v401 = vld [vmem:[#allocation5 + $0xac8] sm:$0xff]
    %v402 = vld [vmem:[#allocation5 + $0xad0] sm:$0xff]
    %v403 = vld [vmem:[#allocation5 + $0xad8] sm:$0xff]
    %v404 = vld [vmem:[#allocation5 + $0xae0] sm:$0xff]
    %v405 = vld [vmem:[#allocation5 + $0xae8] sm:$0xff]
    %v406 = vld [vmem:[#allocation5 + $0xaf0] sm:$0xff]
    %v407 = vld [vmem:[#allocation5 + $0xaf8] sm:$0xff]
    %v408 = vld [vmem:[#allocation5 + $0xb00] sm:$0xff]
    %v409 = vld [vmem:[#allocation5 + $0xb08] sm:$0xff]
    %v410 = vld [vmem:[#allocation5 + $0xb10] sm:$0xff]
    %v411 = vld [vmem:[#allocation5 + $0xb18] sm:$0xff]
    %v412 = vld [vmem:[#allocation5 + $0xb20] sm:$0xff]
    %v413 = vld [vmem:[#allocation5 + $0xb28] sm:$0xff]
    %v414 = vld [vmem:[#allocation5 + $0xb30] sm:$0xff]
    %v415 = vld [vmem:[#allocation5 + $0xb38] sm:$0xff]
    %v416 = vld [vmem:[#allocation5 + $0xb40] sm:$0xff]
    %v417 = vld [vmem:[#allocation5 + $0xb48] sm:$0xff]
    %v418 = vld [vmem:[#allocation5 + $0xb50] sm:$0xff]
    %v419 = vld [vmem:[#allocation5 + $0xb58] sm:$0xff]
    %v420 = vld [vmem:[#allocation5 + $0xb60] sm:$0xff]
    %v421 = vld [vmem:[#allocation5 + $0xb68] sm:$0xff]
    %v422 = vld [vmem:[#allocation5 + $0xb70] sm:$0xff]
    %v423 = vld [vmem:[#allocation5 + $0xb78] sm:$0xff]
    %v424 = vld [vmem:[#allocation5 + $0xb80] sm:$0xff]
    %v425 = vld [vmem:[#allocation5 + $0xb88] sm:$0xff]
    %v426 = vld [vmem:[#allocation5 + $0xb90] sm:$0xff]
    %v427 = vld [vmem:[#allocation5 + $0xb98] sm:$0xff]
    %v428 = vld [vmem:[#allocation5 + $0xba0] sm:$0xff]
    %v429 = vld [vmem:[#allocation5 + $0xba8] sm:$0xff]
    %v430 = vld [vmem:[#allocation5 + $0xbb0] sm:$0xff]
    %v431 = vld [vmem:[#allocation5 + $0xbb8] sm:$0xff]
    %v432 = vld [vmem:[#allocation5 + $0xbc0] sm:$0xff]
    %v433 = vld [vmem:[#allocation5 + $0xbc8] sm:$0xff]
    %v434 = vld [vmem:[#allocation5 + $0xbd0] sm:$0xff]
    %v435 = vld [vmem:[#allocation5 + $0xbd8] sm:$0xff]
    %v436 = vld [vmem:[#allocation5 + $0xbe0] sm:$0xff]
    %v437 = vld [vmem:[#allocation5 + $0xbe8] sm:$0xff]
    %v438 = vld [vmem:[#allocation5 + $0xbf0] sm:$0xff]
    %v439 = vld [vmem:[#allocation5 + $0xbf8] sm:$0xff]
    %v440 = vld [vmem:[#allocation5 + $0xc00] sm:$0xff]
    %v441 = vld [vmem:[#allocation5 + $0xc08] sm:$0xff]
    %v442 = vld [vmem:[#allocation5 + $0xc10] sm:$0xff]
    %v443 = vld [vmem:[#allocation5 + $0xc18] sm:$0xff]
    %v444 = vld [vmem:[#allocation5 + $0xc20] sm:$0xff]
    %v445 = vld [vmem:[#allocation5 + $0xc28] sm:$0xff]
    %v446 = vld [vmem:[#allocation5 + $0xc30] sm:$0xff]
    %v447 = vld [vmem:[#allocation5 + $0xc38] sm:$0xff]
    %v448 = vld [vmem:[#allocation5 + $0xc40] sm:$0xff]
    %v449 = vld [vmem:[#allocation5 + $0xc48] sm:$0xff]
    %v450 = vld [vmem:[#allocation5 + $0xc50] sm:$0xff]
    %v451 = vld [vmem:[#allocation5 + $0xc58] sm:$0xff]
    %v452 = vld [vmem:[#allocation5 + $0xc60] sm:$0xff]
    %v453 = vld [vmem:[#allocation5 + $0xc68] sm:$0xff]
    %v454 = vld [vmem:[#allocation5 + $0xc70] sm:$0xff]
    %v455 = vld [vmem:[#allocation5 + $0xc78] sm:$0xff]
    %v456 = vld [vmem:[#allocation5 + $0xc80] sm:$0xff]
    %v457 = vld [vmem:[#allocation5 + $0xc88] sm:$0xff]
    %v458 = vld [vmem:[#allocation5 + $0xc90] sm:$0xff]
    %v459 = vld [vmem:[#allocation5 + $0xc98] sm:$0xff]
    %v460 = vld [vmem:[#allocation5 + $0xca0] sm:$0xff]
    %v461 = vld [vmem:[#allocation5 + $0xca8] sm:$0xff]
    %v462 = vld [vmem:[#allocation5 + $0xcb0] sm:$0xff]
    %v463 = vld [vmem:[#allocation5 + $0xcb8] sm:$0xff]
    %v464 = vld [vmem:[#allocation5 + $0xcc0] sm:$0xff]
    %v465 = vld [vmem:[#allocation5 + $0xcc8] sm:$0xff]
    %v466 = vld [vmem:[#allocation5 + $0xcd0] sm:$0xff]
    %v467 = vld [vmem:[#allocation5 + $0xcd8] sm:$0xff]
    %v468 = vld [vmem:[#allocation5 + $0xce0] sm:$0xff]
    %v469 = vld [vmem:[#allocation5 + $0xce8] sm:$0xff]
    %v470 = vld [vmem:[#allocation5 + $0xcf0] sm:$0xff]
    %v471 = vld [vmem:[#allocation5 + $0xcf8] sm:$0xff]
    %v472 = vld [vmem:[#allocation5 + $0xd00] sm:$0xff]
    %v473 = vld [vmem:[#allocation5 + $0xd08] sm:$0xff]
    %v474 = vld [vmem:[#allocation5 + $0xd10] sm:$0xff]
    %v475 = vld [vmem:[#allocation5 + $0xd18] sm:$0xff]
    %v476 = vld [vmem:[#allocation5 + $0xd20] sm:$0xff]
    %v477 = vld [vmem:[#allocation5 + $0xd28] sm:$0xff]
    %v478 = vld [vmem:[#allocation5 + $0xd30] sm:$0xff]
    %v479 = vld [vmem:[#allocation5 + $0xd38] sm:$0xff]
    %v480 = vld [vmem:[#allocation5 + $0xd40] sm:$0xff]
    %v481 = vld [vmem:[#allocation5 + $0xd48] sm:$0xff]
    %v482 = vld [vmem:[#allocation5 + $0xd50] sm:$0xff]
    %v483 = vld [vmem:[#allocation5 + $0xd58] sm:$0xff]
    %v484 = vld [vmem:[#allocation5 + $0xd60] sm:$0xff]
    %v485 = vld [vmem:[#allocation5 + $0xd68] sm:$0xff]
    %v486 = vld [vmem:[#allocation5 + $0xd70] sm:$0xff]
    %v487 = vld [vmem:[#allocation5 + $0xd78] sm:$0xff]
    %v488 = vld [vmem:[#allocation5 + $0xd80] sm:$0xff]
    %v489 = vld [vmem:[#allocation5 + $0xd88] sm:$0xff]
    %v490 = vld [vmem:[#allocation5 + $0xd90] sm:$0xff]
    %v491 = vld [vmem:[#allocation5 + $0xd98] sm:$0xff]
    %v492 = vld [vmem:[#allocation5 + $0xda0] sm:$0xff]
    %v493 = vld [vmem:[#allocation5 + $0xda8] sm:$0xff]
    %v494 = vld [vmem:[#allocation5 + $0xdb0] sm:$0xff]
    %v495 = vld [vmem:[#allocation5 + $0xdb8] sm:$0xff]
    %v496 = vld [vmem:[#allocation5 + $0xdc0] sm:$0xff]
    %v497 = vld [vmem:[#allocation5 + $0xdc8] sm:$0xff]
    %v498 = vld [vmem:[#allocation5 + $0xdd0] sm:$0xff]
    %v499 = vld [vmem:[#allocation5 + $0xdd8] sm:$0xff]
    %v500 = vld [vmem:[#allocation5 + $0xde0] sm:$0xff]
    %v501 = vld [vmem:[#allocation5 + $0xde8] sm:$0xff]
    %v502 = vld [vmem:[#allocation5 + $0xdf0] sm:$0xff]
    %v503 = vld [vmem:[#allocation5 + $0xdf8] sm:$0xff]
    %v504 = vld [vmem:[#allocation5 + $0xe00] sm:$0xff]
    %v505 = vld [vmem:[#allocation5 + $0xe08] sm:$0xff]
    %v506 = vld [vmem:[#allocation5 + $0xe10] sm:$0xff]
    %v507 = vld [vmem:[#allocation5 + $0xe18] sm:$0xff]
    %v508 = vld [vmem:[#allocation5 + $0xe20] sm:$0xff]
    %v509 = vld [vmem:[#allocation5 + $0xe28] sm:$0xff]
    %v510 = vld [vmem:[#allocation5 + $0xe30] sm:$0xff]
    %v511 = vld [vmem:[#allocation5 + $0xe38] sm:$0xff]
    %v512 = vld [vmem:[#allocation5 + $0xe40] sm:$0xff]
    %v513 = vld [vmem:[#allocation5 + $0xe48] sm:$0xff]
    %v514 = vld [vmem:[#allocation5 + $0xe50] sm:$0xff]
    %v515 = vld [vmem:[#allocation5 + $0xe58] sm:$0xff]
    %v516 = vld [vmem:[#allocation5 + $0xe60] sm:$0xff]
    %v517 = vld [vmem:[#allocation5 + $0xe68] sm:$0xff]
    %v518 = vld [vmem:[#allocation5 + $0xe70] sm:$0xff]
    %v519 = vld [vmem:[#allocation5 + $0xe78] sm:$0xff]
    %v520 = vld [vmem:[#allocation5 + $0xe80] sm:$0xff]
    %v521 = vld [vmem:[#allocation5 + $0xe88] sm:$0xff]
    %v522 = vld [vmem:[#allocation5 + $0xe90] sm:$0xff]
    %v523 = vld [vmem:[#allocation5 + $0xe98] sm:$0xff]
    %v524 = vld [vmem:[#allocation5 + $0xea0] sm:$0xff]
    %v525 = vld [vmem:[#allocation5 + $0xea8] sm:$0xff]
    %v526 = vld [vmem:[#allocation5 + $0xeb0] sm:$0xff]
    %v527 = vld [vmem:[#allocation5 + $0xeb8] sm:$0xff]
    %v528 = vld [vmem:[#allocation5 + $0xec0] sm:$0xff]
    %v529 = vld [vmem:[#allocation5 + $0xec8] sm:$0xff]
    %v530 = vld [vmem:[#allocation5 + $0xed0] sm:$0xff]
    %v531 = vld [vmem:[#allocation5 + $0xed8] sm:$0xff]
    %v532 = vld [vmem:[#allocation5 + $0xee0] sm:$0xff]
    %v533 = vld [vmem:[#allocation5 + $0xee8] sm:$0xff]
    %v534 = vld [vmem:[#allocation5 + $0xef0] sm:$0xff]
    %v535 = vld [vmem:[#allocation5 + $0xef8] sm:$0xff]
    %v536 = vld [vmem:[#allocation5 + $0xf00] sm:$0xff]
    %v537 = vld [vmem:[#allocation5 + $0xf08] sm:$0xff]
    %v538 = vld [vmem:[#allocation5 + $0xf10] sm:$0xff]
    %v539 = vld [vmem:[#allocation5 + $0xf18] sm:$0xff]
    %v540 = vld [vmem:[#allocation5 + $0xf20] sm:$0xff]
    %v541 = vld [vmem:[#allocation5 + $0xf28] sm:$0xff]
    %v542 = vld [vmem:[#allocation5 + $0xf30] sm:$0xff]
    %v543 = vld [vmem:[#allocation5 + $0xf38] sm:$0xff]
    %v544 = vld [vmem:[#allocation5 + $0xf40] sm:$0xff]
    %v545 = vld [vmem:[#allocation5 + $0xf48] sm:$0xff]
    %v546 = vld [vmem:[#allocation5 + $0xf50] sm:$0xff]
    %v547 = vld [vmem:[#allocation5 + $0xf58] sm:$0xff]
    %v548 = vld [vmem:[#allocation5 + $0xf60] sm:$0xff]
    %v549 = vld [vmem:[#allocation5 + $0xf68] sm:$0xff]
    %v550 = vld [vmem:[#allocation5 + $0xf70] sm:$0xff]
    %v551 = vld [vmem:[#allocation5 + $0xf78] sm:$0xff]
    %v552 = vld [vmem:[#allocation5 + $0xf80] sm:$0xff]
    %v553 = vld [vmem:[#allocation5 + $0xf88] sm:$0xff]
    %v554 = vld [vmem:[#allocation5 + $0xf90] sm:$0xff]
    %v555 = vld [vmem:[#allocation5 + $0xf98] sm:$0xff]
    %v556 = vld [vmem:[#allocation5 + $0xfa0] sm:$0xff]
    %v557 = vld [vmem:[#allocation5 + $0xfa8] sm:$0xff]
    %v558 = vld [vmem:[#allocation5 + $0xfb0] sm:$0xff]
    %v559 = vld [vmem:[#allocation5 + $0xfb8] sm:$0xff]
    %v560 = vld [vmem:[#allocation5 + $0xfc0] sm:$0xff]
    %v561 = vld [vmem:[#allocation5 + $0xfc8] sm:$0xff]
    %v562 = vld [vmem:[#allocation5 + $0xfd0] sm:$0xff]
    %v563 = vld [vmem:[#allocation5 + $0xfd8] sm:$0xff]
    %v564 = vld [vmem:[#allocation5 + $0xfe0] sm:$0xff]
    %v565 = vld [vmem:[#allocation5 + $0xfe8] sm:$0xff]
    %v566 = vld [vmem:[#allocation5 + $0xff0] sm:$0xff]
    %v567 = vld [vmem:[#allocation5 + $0xff8] sm:$0xff]
    %v568 = vld [vmem:[#allocation5 + $0x1000] sm:$0xff]
    %v569 = vld [vmem:[#allocation5 + $0x1008] sm:$0xff]
    %v570 = vld [vmem:[#allocation5 + $0x1010] sm:$0xff]
    %v571 = vld [vmem:[#allocation5 + $0x1018] sm:$0xff]
    %v572 = vld [vmem:[#allocation5 + $0x1020] sm:$0xff]
    %v573 = vld [vmem:[#allocation5 + $0x1028] sm:$0xff]
    %v574 = vld [vmem:[#allocation5 + $0x1030] sm:$0xff]
    %v575 = vld [vmem:[#allocation5 + $0x1038] sm:$0xff]
    %v576 = vld [vmem:[#allocation5 + $0x1040] sm:$0xff]
    %v577 = vld [vmem:[#allocation5 + $0x1048] sm:$0xff]
    %v578 = vld [vmem:[#allocation5 + $0x1050] sm:$0xff]
    %v579 = vld [vmem:[#allocation5 + $0x1058] sm:$0xff]
    %v580 = vld [vmem:[#allocation5 + $0x1060] sm:$0xff]
    %v581 = vld [vmem:[#allocation5 + $0x1068] sm:$0xff]
    %v582 = vld [vmem:[#allocation5 + $0x1070] sm:$0xff]
    %v583 = vld [vmem:[#allocation5 + $0x1078] sm:$0xff]
    %v584 = vld [vmem:[#allocation5 + $0x1080] sm:$0xff]
    %v585 = vld [vmem:[#allocation5 + $0x1088] sm:$0xff]
    %v586 = vld [vmem:[#allocation5 + $0x1090] sm:$0xff]
    %v587 = vld [vmem:[#allocation5 + $0x1098] sm:$0xff]
    %v588 = vld [vmem:[#allocation5 + $0x10a0] sm:$0xff]
    %v589 = vld [vmem:[#allocation5 + $0x10a8] sm:$0xff]
    %v590 = vld [vmem:[#allocation5 + $0x10b0] sm:$0xff]
    %v591 = vld [vmem:[#allocation5 + $0x10b8] sm:$0xff]
    %v592 = vld [vmem:[#allocation5 + $0x10c0] sm:$0xff]
    %v593 = vld [vmem:[#allocation5 + $0x10c8] sm:$0xff]
    %v594 = vld [vmem:[#allocation5 + $0x10d0] sm:$0xff]
    %v595 = vld [vmem:[#allocation5 + $0x10d8] sm:$0xff]
    %v596 = vld [vmem:[#allocation5 + $0x10e0] sm:$0xff]
    %v597 = vld [vmem:[#allocation5 + $0x10e8] sm:$0xff]
    %v598 = vld [vmem:[#allocation5 + $0x10f0] sm:$0xff]
    %v599 = vld [vmem:[#allocation5 + $0x10f8] sm:$0xff]
    %v600 = vld [vmem:[#allocation5 + $0x1100] sm:$0xff]
    %v601 = vld [vmem:[#allocation5 + $0x1108] sm:$0xff]
    %v602 = vld [vmem:[#allocation5 + $0x1110] sm:$0xff]
    %v603 = vld [vmem:[#allocation5 + $0x1118] sm:$0xff]
    %v604 = vld [vmem:[#allocation5 + $0x1120] sm:$0xff]
    %v605 = vld [vmem:[#allocation5 + $0x1128] sm:$0xff]
    %v606 = vld [vmem:[#allocation5 + $0x1130] sm:$0xff]
    %v607 = vld [vmem:[#allocation5 + $0x1138] sm:$0xff]
    %v608 = vld [vmem:[#allocation5 + $0x1140] sm:$0xff]
    %v609 = vld [vmem:[#allocation5 + $0x1148] sm:$0xff]
    %v610 = vld [vmem:[#allocation5 + $0x1150] sm:$0xff]
    %v611 = vld [vmem:[#allocation5 + $0x1158] sm:$0xff]
    %v612 = vld [vmem:[#allocation5 + $0x1160] sm:$0xff]
    %v613 = vld [vmem:[#allocation5 + $0x1168] sm:$0xff]
    %v614 = vld [vmem:[#allocation5 + $0x1170] sm:$0xff]
    %v615 = vld [vmem:[#allocation5 + $0x1178] sm:$0xff]
    %v616 = vld [vmem:[#allocation5 + $0x1180] sm:$0xff]
    %v617 = vld [vmem:[#allocation5 + $0x1188] sm:$0xff]
    %v618 = vld [vmem:[#allocation5 + $0x1190] sm:$0xff]
    %v619 = vld [vmem:[#allocation5 + $0x1198] sm:$0xff]
    %v620 = vld [vmem:[#allocation5 + $0x11a0] sm:$0xff]
    %v621 = vld [vmem:[#allocation5 + $0x11a8] sm:$0xff]
    %v622 = vld [vmem:[#allocation5 + $0x11b0] sm:$0xff]
    %v623 = vld [vmem:[#allocation5 + $0x11b8] sm:$0xff]
    %v624 = vld [vmem:[#allocation5 + $0x11c0] sm:$0xff]
    %v625 = vld [vmem:[#allocation5 + $0x11c8] sm:$0xff]
    %v626 = vld [vmem:[#allocation5 + $0x11d0] sm:$0xff]
    %v627 = vld [vmem:[#allocation5 + $0x11d8] sm:$0xff]
    %v628 = vld [vmem:[#allocation5 + $0x11e0] sm:$0xff]
    %v629 = vld [vmem:[#allocation5 + $0x11e8] sm:$0xff]
    %v630 = vld [vmem:[#allocation5 + $0x11f0] sm:$0xff]
    %v631 = vld [vmem:[#allocation5 + $0x11f8] sm:$0xff]
    %632 = vmatpush.msra.mxu0 %v146
    %633 = vmatpush.msra.mxu0 %v140
    %634 = vmatpush.msra.mxu0 %v134
    %635 = vmatpush.msra.mxu0 %v128
    %636 = vmatpush.msra.mxu0 %v122
    %637 = vmatpush.msra.mxu0 %v116
    %638 = vmatpush.msra.mxu0 %v110
    %639 = vmatpush.msra.mxu0 %v104
    %640 = vmatpush.msra.mxu0 %v98
    %641 = vmatpush.msra.mxu0 %v92
    %642 = vmatpush.msra.mxu0 %v86
    %643 = vmatpush.msra.mxu0 %v80
    %644 = vmatpush.msra.mxu0 %v74
    %645 = vmatpush.msra.mxu0 %v68
    %646 = vmatpush.msra.mxu0 %v62
    %647 = vmatpush.msra.mxu0 %v56
    %648 = vmatmul.f32.gmra.mxu0 %v44
    %v649 = vpop.f32.mrf.mxu0
    %v650 = vadd.f32 0.0, %v649
    %651 = vmatmul.f32.gmra.mxu0 %v50
    %v652 = vpop.f32.mrf.mxu0
    %v653 = vadd.f32 0.0, %v652
    %654 = vdwg.mxu0
    %655 = vmatpush.msra.mxu0 %v242
    %656 = vmatpush.msra.mxu0 %v236
    %657 = vmatpush.msra.mxu0 %v230
    %658 = vmatpush.msra.mxu0 %v224
    %659 = vmatpush.msra.mxu0 %v218
    %660 = vmatpush.msra.mxu0 %v212
    %661 = vmatpush.msra.mxu0 %v206
    %662 = vmatpush.msra.mxu0 %v200
    %663 = vmatpush.msra.mxu0 %v194
    %664 = vmatpush.msra.mxu0 %v188
    %665 = vmatpush.msra.mxu0 %v182
    %666 = vmatpush.msra.mxu0 %v176
    %667 = vmatpush.msra.mxu0 %v170
    %668 = vmatpush.msra.mxu0 %v164
    %669 = vmatpush.msra.mxu0 %v158
    %670 = vmatpush.msra.mxu0 %v152
    %671 = vmatmul.f32.gmra.mxu0 %v45
    %v672 = vpop.f32.mrf.mxu0
    %v673 = vadd.f32 %v650, %v672
    %674 = vmatmul.f32.gmra.mxu0 %v51
    %v675 = vpop.f32.mrf.mxu0
    %v676 = vadd.f32 %v653, %v675
    %677 = vdwg.mxu0
    %678 = vmatpush.msra.mxu0 %v338
    %679 = vmatpush.msra.mxu0 %v332
    %680 = vmatpush.msra.mxu0 %v326
    %681 = vmatpush.msra.mxu0 %v320
    %682 = vmatpush.msra.mxu0 %v314
    %683 = vmatpush.msra.mxu0 %v308
    %684 = vmatpush.msra.mxu0 %v302
    %685 = vmatpush.msra.mxu0 %v296
    %686 = vmatpush.msra.mxu0 %v290
    %687 = vmatpush.msra.mxu0 %v284
    %688 = vmatpush.msra.mxu0 %v278
    %689 = vmatpush.msra.mxu0 %v272
    %690 = vmatpush.msra.mxu0 %v266
    %691 = vmatpush.msra.mxu0 %v260
    %692 = vmatpush.msra.mxu0 %v254
    %693 = vmatpush.msra.mxu0 %v248
    %694 = vmatmul.f32.gmra.mxu0 %v46
    %v695 = vpop.f32.mrf.mxu0
    %v696 = vadd.f32 %v673, %v695
    %697 = vmatmul.f32.gmra.mxu0 %v52
    %v698 = vpop.f32.mrf.mxu0
    %v699 = vadd.f32 %v676, %v698
    %700 = vdwg.mxu0
    %701 = vmatpush.msra.mxu0 %v434
    %702 = vmatpush.msra.mxu0 %v428
    %703 = vmatpush.msra.mxu0 %v422
    %704 = vmatpush.msra.mxu0 %v416
    %705 = vmatpush.msra.mxu0 %v410
    %706 = vmatpush.msra.mxu0 %v404
    %707 = vmatpush.msra.mxu0 %v398
    %708 = vmatpush.msra.mxu0 %v392
    %709 = vmatpush.msra.mxu0 %v386
    %710 = vmatpush.msra.mxu0 %v380
    %711 = vmatpush.msra.mxu0 %v374
    %712 = vmatpush.msra.mxu0 %v368
    %713 = vmatpush.msra.mxu0 %v362
    %714 = vmatpush.msra.mxu0 %v356
    %715 = vmatpush.msra.mxu0 %v350
    %716 = vmatpush.msra.mxu0 %v344
    %717 = vmatmul.f32.gmra.mxu0 %v47
    %v718 = vpop.f32.mrf.mxu0
    %v719 = vadd.f32 %v696, %v718
    %720 = vmatmul.f32.gmra.mxu0 %v53
    %v721 = vpop.f32.mrf.mxu0
    %v722 = vadd.f32 %v699, %v721
    %723 = vdwg.mxu0
    %724 = vmatpush.msra.mxu0 %v530
    %725 = vmatpush.msra.mxu0 %v524
    %726 = vmatpush.msra.mxu0 %v518
    %727 = vmatpush.msra.mxu0 %v512
    %728 = vmatpush.msra.mxu0 %v506
    %729 = vmatpush.msra.mxu0 %v500
    %730 = vmatpush.msra.mxu0 %v494
    %731 = vmatpush.msra.mxu0 %v488
    %732 = vmatpush.msra.mxu0 %v482
    %733 = vmatpush.msra.mxu0 %v476
    %734 = vmatpush.msra.mxu0 %v470
    %735 = vmatpush.msra.mxu0 %v464
    %736 = vmatpush.msra.mxu0 %v458
    %737 = vmatpush.msra.mxu0 %v452
    %738 = vmatpush.msra.mxu0 %v446
    %739 = vmatpush.msra.mxu0 %v440
    %740 = vmatmul.f32.gmra.mxu0 %v48
    %v741 = vpop.f32.mrf.mxu0
    %v742 = vadd.f32 %v719, %v741
    %743 = vmatmul.f32.gmra.mxu0 %v54
    %v744 = vpop.f32.mrf.mxu0
    %v745 = vadd.f32 %v722, %v744
    %746 = vdwg.mxu0
    %747 = vmatpush.msra.mxu0 %v626
    %748 = vmatpush.msra.mxu0 %v620
    %749 = vmatpush.msra.mxu0 %v614
    %750 = vmatpush.msra.mxu0 %v608
    %751 = vmatpush.msra.mxu0 %v602
    %752 = vmatpush.msra.mxu0 %v596
    %753 = vmatpush.msra.mxu0 %v590
    %754 = vmatpush.msra.mxu0 %v584
    %755 = vmatpush.msra.mxu0 %v578
    %756 = vmatpush.msra.mxu0 %v572
    %757 = vmatpush.msra.mxu0 %v566
    %758 = vmatpush.msra.mxu0 %v560
    %759 = vmatpush.msra.mxu0 %v554
    %760 = vmatpush.msra.mxu0 %v548
    %761 = vmatpush.msra.mxu0 %v542
    %762 = vmatpush.msra.mxu0 %v536
    %763 = vmatmul.f32.gmra.mxu0 %v49
    %v764 = vpop.f32.mrf.mxu0
    %v765 = vadd.f32 %v742, %v764
    %766 = vmatmul.f32.gmra.mxu0 %v55
    %v767 = vpop.f32.mrf.mxu0
    %v768 = vadd.f32 %v745, %v767
    %769 = vdwg.mxu0
    %770 = vmatpush.msra.mxu0 %v147
    %771 = vmatpush.msra.mxu0 %v141
    %772 = vmatpush.msra.mxu0 %v135
    %773 = vmatpush.msra.mxu0 %v129
    %774 = vmatpush.msra.mxu0 %v123
    %775 = vmatpush.msra.mxu0 %v117
    %776 = vmatpush.msra.mxu0 %v111
    %777 = vmatpush.msra.mxu0 %v105
    %778 = vmatpush.msra.mxu0 %v99
    %779 = vmatpush.msra.mxu0 %v93
    %780 = vmatpush.msra.mxu0 %v87
    %781 = vmatpush.msra.mxu0 %v81
    %782 = vmatpush.msra.mxu0 %v75
    %783 = vmatpush.msra.mxu0 %v69
    %784 = vmatpush.msra.mxu0 %v63
    %785 = vmatpush.msra.mxu0 %v57
    %786 = vmatmul.f32.gmra.mxu0 %v44
    %v787 = vpop.f32.mrf.mxu0
    %v788 = vadd.f32 0.0, %v787
    %789 = vmatmul.f32.gmra.mxu0 %v50
    %v790 = vpop.f32.mrf.mxu0
    %v791 = vadd.f32 0.0, %v790
    %792 = vdwg.mxu0
    %793 = vmatpush.msra.mxu0 %v243
    %794 = vmatpush.msra.mxu0 %v237
    %795 = vmatpush.msra.mxu0 %v231
    %796 = vmatpush.msra.mxu0 %v225
    %797 = vmatpush.msra.mxu0 %v219
    %798 = vmatpush.msra.mxu0 %v213
    %799 = vmatpush.msra.mxu0 %v207
    %800 = vmatpush.msra.mxu0 %v201
    %801 = vmatpush.msra.mxu0 %v195
    %802 = vmatpush.msra.mxu0 %v189
    %803 = vmatpush.msra.mxu0 %v183
    %804 = vmatpush.msra.mxu0 %v177
    %805 = vmatpush.msra.mxu0 %v171
    %806 = vmatpush.msra.mxu0 %v165
    %807 = vmatpush.msra.mxu0 %v159
    %808 = vmatpush.msra.mxu0 %v153
    %809 = vmatmul.f32.gmra.mxu0 %v45
    %v810 = vpop.f32.mrf.mxu0
    %v811 = vadd.f32 %v788, %v810
    %812 = vmatmul.f32.gmra.mxu0 %v51
    %v813 = vpop.f32.mrf.mxu0
    %v814 = vadd.f32 %v791, %v813
    %815 = vdwg.mxu0
    %816 = vmatpush.msra.mxu0 %v339
    %817 = vmatpush.msra.mxu0 %v333
    %818 = vmatpush.msra.mxu0 %v327
    %819 = vmatpush.msra.mxu0 %v321
    %820 = vmatpush.msra.mxu0 %v315
    %821 = vmatpush.msra.mxu0 %v309
    %822 = vmatpush.msra.mxu0 %v303
    %823 = vmatpush.msra.mxu0 %v297
    %824 = vmatpush.msra.mxu0 %v291
    %825 = vmatpush.msra.mxu0 %v285
    %826 = vmatpush.msra.mxu0 %v279
    %827 = vmatpush.msra.mxu0 %v273
    %828 = vmatpush.msra.mxu0 %v267
    %829 = vmatpush.msra.mxu0 %v261
    %830 = vmatpush.msra.mxu0 %v255
    %831 = vmatpush.msra.mxu0 %v249
    %832 = vmatmul.f32.gmra.mxu0 %v46
    %v833 = vpop.f32.mrf.mxu0
    %v834 = vadd.f32 %v811, %v833
    %835 = vmatmul.f32.gmra.mxu0 %v52
    %v836 = vpop.f32.mrf.mxu0
    %v837 = vadd.f32 %v814, %v836
    %838 = vdwg.mxu0
    %839 = vmatpush.msra.mxu0 %v435
    %840 = vmatpush.msra.mxu0 %v429
    %841 = vmatpush.msra.mxu0 %v423
    %842 = vmatpush.msra.mxu0 %v417
    %843 = vmatpush.msra.mxu0 %v411
    %844 = vmatpush.msra.mxu0 %v405
    %845 = vmatpush.msra.mxu0 %v399
    %846 = vmatpush.msra.mxu0 %v393
    %847 = vmatpush.msra.mxu0 %v387
    %848 = vmatpush.msra.mxu0 %v381
    %849 = vmatpush.msra.mxu0 %v375
    %850 = vmatpush.msra.mxu0 %v369
    %851 = vmatpush.msra.mxu0 %v363
    %852 = vmatpush.msra.mxu0 %v357
    %853 = vmatpush.msra.mxu0 %v351
    %854 = vmatpush.msra.mxu0 %v345
    %855 = vmatmul.f32.gmra.mxu0 %v47
    %v856 = vpop.f32.mrf.mxu0
    %v857 = vadd.f32 %v834, %v856
    %858 = vmatmul.f32.gmra.mxu0 %v53
    %v859 = vpop.f32.mrf.mxu0
    %v860 = vadd.f32 %v837, %v859
    %861 = vdwg.mxu0
    %862 = vmatpush.msra.mxu0 %v531
    %863 = vmatpush.msra.mxu0 %v525
    %864 = vmatpush.msra.mxu0 %v519
    %865 = vmatpush.msra.mxu0 %v513
    %866 = vmatpush.msra.mxu0 %v507
    %867 = vmatpush.msra.mxu0 %v501
    %868 = vmatpush.msra.mxu0 %v495
    %869 = vmatpush.msra.mxu0 %v489
    %870 = vmatpush.msra.mxu0 %v483
    %871 = vmatpush.msra.mxu0 %v477
    %872 = vmatpush.msra.mxu0 %v471
    %873 = vmatpush.msra.mxu0 %v465
    %874 = vmatpush.msra.mxu0 %v459
    %875 = vmatpush.msra.mxu0 %v453
    %876 = vmatpush.msra.mxu0 %v447
    %877 = vmatpush.msra.mxu0 %v441
    %878 = vmatmul.f32.gmra.mxu0 %v48
    %v879 = vpop.f32.mrf.mxu0
    %v880 = vadd.f32 %v857, %v879
    %881 = vmatmul.f32.gmra.mxu0 %v54
    %v882 = vpop.f32.mrf.mxu0
    %v883 = vadd.f32 %v860, %v882
    %884 = vdwg.mxu0
    %885 = vmatpush.msra.mxu0 %v627
    %886 = vmatpush.msra.mxu0 %v621
    %887 = vmatpush.msra.mxu0 %v615
    %888 = vmatpush.msra.mxu0 %v609
    %889 = vmatpush.msra.mxu0 %v603
    %890 = vmatpush.msra.mxu0 %v597
    %891 = vmatpush.msra.mxu0 %v591
    %892 = vmatpush.msra.mxu0 %v585
    %893 = vmatpush.msra.mxu0 %v579
    %894 = vmatpush.msra.mxu0 %v573
    %895 = vmatpush.msra.mxu0 %v567
    %896 = vmatpush.msra.mxu0 %v561
    %897 = vmatpush.msra.mxu0 %v555
    %898 = vmatpush.msra.mxu0 %v549
    %899 = vmatpush.msra.mxu0 %v543
    %900 = vmatpush.msra.mxu0 %v537
    %901 = vmatmul.f32.gmra.mxu0 %v49
    %v902 = vpop.f32.mrf.mxu0
    %v903 = vadd.f32 %v880, %v902
    %904 = vmatmul.f32.gmra.mxu0 %v55
    %v905 = vpop.f32.mrf.mxu0
    %v906 = vadd.f32 %v883, %v905
    %907 = vdwg.mxu0
    %908 = vmatpush.msra.mxu0 %v148
    %909 = vmatpush.msra.mxu0 %v142
    %910 = vmatpush.msra.mxu0 %v136
    %911 = vmatpush.msra.mxu0 %v130
    %912 = vmatpush.msra.mxu0 %v124
    %913 = vmatpush.msra.mxu0 %v118
    %914 = vmatpush.msra.mxu0 %v112
    %915 = vmatpush.msra.mxu0 %v106
    %916 = vmatpush.msra.mxu0 %v100
    %917 = vmatpush.msra.mxu0 %v94
    %918 = vmatpush.msra.mxu0 %v88
    %919 = vmatpush.msra.mxu0 %v82
    %920 = vmatpush.msra.mxu0 %v76
    %921 = vmatpush.msra.mxu0 %v70
    %922 = vmatpush.msra.mxu0 %v64
    %923 = vmatpush.msra.mxu0 %v58
    %924 = vmatmul.f32.gmra.mxu0 %v44
    %v925 = vpop.f32.mrf.mxu0
    %v926 = vadd.f32 0.0, %v925
    %927 = vmatmul.f32.gmra.mxu0 %v50
    %v928 = vpop.f32.mrf.mxu0
    %v929 = vadd.f32 0.0, %v928
    %930 = vdwg.mxu0
    %931 = vmatpush.msra.mxu0 %v244
    %932 = vmatpush.msra.mxu0 %v238
    %933 = vmatpush.msra.mxu0 %v232
    %934 = vmatpush.msra.mxu0 %v226
    %935 = vmatpush.msra.mxu0 %v220
    %936 = vmatpush.msra.mxu0 %v214
    %937 = vmatpush.msra.mxu0 %v208
    %938 = vmatpush.msra.mxu0 %v202
    %939 = vmatpush.msra.mxu0 %v196
    %940 = vmatpush.msra.mxu0 %v190
    %941 = vmatpush.msra.mxu0 %v184
    %942 = vmatpush.msra.mxu0 %v178
    %943 = vmatpush.msra.mxu0 %v172
    %944 = vmatpush.msra.mxu0 %v166
    %945 = vmatpush.msra.mxu0 %v160
    %946 = vmatpush.msra.mxu0 %v154
    %947 = vmatmul.f32.gmra.mxu0 %v45
    %v948 = vpop.f32.mrf.mxu0
    %v949 = vadd.f32 %v926, %v948
    %950 = vmatmul.f32.gmra.mxu0 %v51
    %v951 = vpop.f32.mrf.mxu0
    %v952 = vadd.f32 %v929, %v951
    %953 = vdwg.mxu0
    %954 = vmatpush.msra.mxu0 %v340
    %955 = vmatpush.msra.mxu0 %v334
    %956 = vmatpush.msra.mxu0 %v328
    %957 = vmatpush.msra.mxu0 %v322
    %958 = vmatpush.msra.mxu0 %v316
    %959 = vmatpush.msra.mxu0 %v310
    %960 = vmatpush.msra.mxu0 %v304
    %961 = vmatpush.msra.mxu0 %v298
    %962 = vmatpush.msra.mxu0 %v292
    %963 = vmatpush.msra.mxu0 %v286
    %964 = vmatpush.msra.mxu0 %v280
    %965 = vmatpush.msra.mxu0 %v274
    %966 = vmatpush.msra.mxu0 %v268
    %967 = vmatpush.msra.mxu0 %v262
    %968 = vmatpush.msra.mxu0 %v256
    %969 = vmatpush.msra.mxu0 %v250
    %970 = vmatmul.f32.gmra.mxu0 %v46
    %v971 = vpop.f32.mrf.mxu0
    %v972 = vadd.f32 %v949, %v971
    %973 = vmatmul.f32.gmra.mxu0 %v52
    %v974 = vpop.f32.mrf.mxu0
    %v975 = vadd.f32 %v952, %v974
    %976 = vdwg.mxu0
    %977 = vmatpush.msra.mxu0 %v436
    %978 = vmatpush.msra.mxu0 %v430
    %979 = vmatpush.msra.mxu0 %v424
    %980 = vmatpush.msra.mxu0 %v418
    %981 = vmatpush.msra.mxu0 %v412
    %982 = vmatpush.msra.mxu0 %v406
    %983 = vmatpush.msra.mxu0 %v400
    %984 = vmatpush.msra.mxu0 %v394
    %985 = vmatpush.msra.mxu0 %v388
    %986 = vmatpush.msra.mxu0 %v382
    %987 = vmatpush.msra.mxu0 %v376
    %988 = vmatpush.msra.mxu0 %v370
    %989 = vmatpush.msra.mxu0 %v364
    %990 = vmatpush.msra.mxu0 %v358
    %991 = vmatpush.msra.mxu0 %v352
    %992 = vmatpush.msra.mxu0 %v346
    %993 = vmatmul.f32.gmra.mxu0 %v47
    %v994 = vpop.f32.mrf.mxu0
    %v995 = vadd.f32 %v972, %v994
    %996 = vmatmul.f32.gmra.mxu0 %v53
    %v997 = vpop.f32.mrf.mxu0
    %v998 = vadd.f32 %v975, %v997
    %999 = vdwg.mxu0
    %1000 = vmatpush.msra.mxu0 %v532
    %1001 = vmatpush.msra.mxu0 %v526
    %1002 = vmatpush.msra.mxu0 %v520
    %1003 = vmatpush.msra.mxu0 %v514
    %1004 = vmatpush.msra.mxu0 %v508
    %1005 = vmatpush.msra.mxu0 %v502
    %1006 = vmatpush.msra.mxu0 %v496
    %1007 = vmatpush.msra.mxu0 %v490
    %1008 = vmatpush.msra.mxu0 %v484
    %1009 = vmatpush.msra.mxu0 %v478
    %1010 = vmatpush.msra.mxu0 %v472
    %1011 = vmatpush.msra.mxu0 %v466
    %1012 = vmatpush.msra.mxu0 %v460
    %1013 = vmatpush.msra.mxu0 %v454
    %1014 = vmatpush.msra.mxu0 %v448
    %1015 = vmatpush.msra.mxu0 %v442
    %1016 = vmatmul.f32.gmra.mxu0 %v48
    %v1017 = vpop.f32.mrf.mxu0
    %v1018 = vadd.f32 %v995, %v1017
    %1019 = vmatmul.f32.gmra.mxu0 %v54
    %v1020 = vpop.f32.mrf.mxu0
    %v1021 = vadd.f32 %v998, %v1020
    %1022 = vdwg.mxu0
    %1023 = vmatpush.msra.mxu0 %v628
    %1024 = vmatpush.msra.mxu0 %v622
    %1025 = vmatpush.msra.mxu0 %v616
    %1026 = vmatpush.msra.mxu0 %v610
    %1027 = vmatpush.msra.mxu0 %v604
    %1028 = vmatpush.msra.mxu0 %v598
    %1029 = vmatpush.msra.mxu0 %v592
    %1030 = vmatpush.msra.mxu0 %v586
    %1031 = vmatpush.msra.mxu0 %v580
    %1032 = vmatpush.msra.mxu0 %v574
    %1033 = vmatpush.msra.mxu0 %v568
    %1034 = vmatpush.msra.mxu0 %v562
    %1035 = vmatpush.msra.mxu0 %v556
    %1036 = vmatpush.msra.mxu0 %v550
    %1037 = vmatpush.msra.mxu0 %v544
    %1038 = vmatpush.msra.mxu0 %v538
    %1039 = vmatmul.f32.gmra.mxu0 %v49
    %v1040 = vpop.f32.mrf.mxu0
    %v1041 = vadd.f32 %v1018, %v1040
    %1042 = vmatmul.f32.gmra.mxu0 %v55
    %v1043 = vpop.f32.mrf.mxu0
    %v1044 = vadd.f32 %v1021, %v1043
    %1045 = vdwg.mxu0
    %1046 = vmatpush.msra.mxu0 %v149
    %1047 = vmatpush.msra.mxu0 %v143
    %1048 = vmatpush.msra.mxu0 %v137
    %1049 = vmatpush.msra.mxu0 %v131
    %1050 = vmatpush.msra.mxu0 %v125
    %1051 = vmatpush.msra.mxu0 %v119
    %1052 = vmatpush.msra.mxu0 %v113
    %1053 = vmatpush.msra.mxu0 %v107
    %1054 = vmatpush.msra.mxu0 %v101
    %1055 = vmatpush.msra.mxu0 %v95
    %1056 = vmatpush.msra.mxu0 %v89
    %1057 = vmatpush.msra.mxu0 %v83
    %1058 = vmatpush.msra.mxu0 %v77
    %1059 = vmatpush.msra.mxu0 %v71
    %1060 = vmatpush.msra.mxu0 %v65
    %1061 = vmatpush.msra.mxu0 %v59
    %1062 = vmatmul.f32.gmra.mxu0 %v44
    %v1063 = vpop.f32.mrf.mxu0
    %v1064 = vadd.f32 0.0, %v1063
    %1065 = vmatmul.f32.gmra.mxu0 %v50
    %v1066 = vpop.f32.mrf.mxu0
    %v1067 = vadd.f32 0.0, %v1066
    %1068 = vdwg.mxu0
    %1069 = vmatpush.msra.mxu0 %v245
    %1070 = vmatpush.msra.mxu0 %v239
    %1071 = vmatpush.msra.mxu0 %v233
    %1072 = vmatpush.msra.mxu0 %v227
    %1073 = vmatpush.msra.mxu0 %v221
    %1074 = vmatpush.msra.mxu0 %v215
    %1075 = vmatpush.msra.mxu0 %v209
    %1076 = vmatpush.msra.mxu0 %v203
    %1077 = vmatpush.msra.mxu0 %v197
    %1078 = vmatpush.msra.mxu0 %v191
    %1079 = vmatpush.msra.mxu0 %v185
    %1080 = vmatpush.msra.mxu0 %v179
    %1081 = vmatpush.msra.mxu0 %v173
    %1082 = vmatpush.msra.mxu0 %v167
    %1083 = vmatpush.msra.mxu0 %v161
    %1084 = vmatpush.msra.mxu0 %v155
    %1085 = vmatmul.f32.gmra.mxu0 %v45
    %v1086 = vpop.f32.mrf.mxu0
    %v1087 = vadd.f32 %v1064, %v1086
    %1088 = vmatmul.f32.gmra.mxu0 %v51
    %v1089 = vpop.f32.mrf.mxu0
    %v1090 = vadd.f32 %v1067, %v1089
    %1091 = vdwg.mxu0
    %1092 = vmatpush.msra.mxu0 %v341
    %1093 = vmatpush.msra.mxu0 %v335
    %1094 = vmatpush.msra.mxu0 %v329
    %1095 = vmatpush.msra.mxu0 %v323
    %1096 = vmatpush.msra.mxu0 %v317
    %1097 = vmatpush.msra.mxu0 %v311
    %1098 = vmatpush.msra.mxu0 %v305
    %1099 = vmatpush.msra.mxu0 %v299
    %1100 = vmatpush.msra.mxu0 %v293
    %1101 = vmatpush.msra.mxu0 %v287
    %1102 = vmatpush.msra.mxu0 %v281
    %1103 = vmatpush.msra.mxu0 %v275
    %1104 = vmatpush.msra.mxu0 %v269
    %1105 = vmatpush.msra.mxu0 %v263
    %1106 = vmatpush.msra.mxu0 %v257
    %1107 = vmatpush.msra.mxu0 %v251
    %1108 = vmatmul.f32.gmra.mxu0 %v46
    %v1109 = vpop.f32.mrf.mxu0
    %v1110 = vadd.f32 %v1087, %v1109
    %1111 = vmatmul.f32.gmra.mxu0 %v52
    %v1112 = vpop.f32.mrf.mxu0
    %v1113 = vadd.f32 %v1090, %v1112
    %1114 = vdwg.mxu0
    %1115 = vmatpush.msra.mxu0 %v437
    %1116 = vmatpush.msra.mxu0 %v431
    %1117 = vmatpush.msra.mxu0 %v425
    %1118 = vmatpush.msra.mxu0 %v419
    %1119 = vmatpush.msra.mxu0 %v413
    %1120 = vmatpush.msra.mxu0 %v407
    %1121 = vmatpush.msra.mxu0 %v401
    %1122 = vmatpush.msra.mxu0 %v395
    %1123 = vmatpush.msra.mxu0 %v389
    %1124 = vmatpush.msra.mxu0 %v383
    %1125 = vmatpush.msra.mxu0 %v377
    %1126 = vmatpush.msra.mxu0 %v371
    %1127 = vmatpush.msra.mxu0 %v365
    %1128 = vmatpush.msra.mxu0 %v359
    %1129 = vmatpush.msra.mxu0 %v353
    %1130 = vmatpush.msra.mxu0 %v347
    %1131 = vmatmul.f32.gmra.mxu0 %v47
    %v1132 = vpop.f32.mrf.mxu0
    %v1133 = vadd.f32 %v1110, %v1132
    %1134 = vmatmul.f32.gmra.mxu0 %v53
    %v1135 = vpop.f32.mrf.mxu0
    %v1136 = vadd.f32 %v1113, %v1135
    %1137 = vdwg.mxu0
    %1138 = vmatpush.msra.mxu0 %v533
    %1139 = vmatpush.msra.mxu0 %v527
    %1140 = vmatpush.msra.mxu0 %v521
    %1141 = vmatpush.msra.mxu0 %v515
    %1142 = vmatpush.msra.mxu0 %v509
    %1143 = vmatpush.msra.mxu0 %v503
    %1144 = vmatpush.msra.mxu0 %v497
    %1145 = vmatpush.msra.mxu0 %v491
    %1146 = vmatpush.msra.mxu0 %v485
    %1147 = vmatpush.msra.mxu0 %v479
    %1148 = vmatpush.msra.mxu0 %v473
    %1149 = vmatpush.msra.mxu0 %v467
    %1150 = vmatpush.msra.mxu0 %v461
    %1151 = vmatpush.msra.mxu0 %v455
    %1152 = vmatpush.msra.mxu0 %v449
    %1153 = vmatpush.msra.mxu0 %v443
    %1154 = vmatmul.f32.gmra.mxu0 %v48
    %v1155 = vpop.f32.mrf.mxu0
    %v1156 = vadd.f32 %v1133, %v1155
    %1157 = vmatmul.f32.gmra.mxu0 %v54
    %v1158 = vpop.f32.mrf.mxu0
    %v1159 = vadd.f32 %v1136, %v1158
    %1160 = vdwg.mxu0
    %1161 = vmatpush.msra.mxu0 %v629
    %1162 = vmatpush.msra.mxu0 %v623
    %1163 = vmatpush.msra.mxu0 %v617
    %1164 = vmatpush.msra.mxu0 %v611
    %1165 = vmatpush.msra.mxu0 %v605
    %1166 = vmatpush.msra.mxu0 %v599
    %1167 = vmatpush.msra.mxu0 %v593
    %1168 = vmatpush.msra.mxu0 %v587
    %1169 = vmatpush.msra.mxu0 %v581
    %1170 = vmatpush.msra.mxu0 %v575
    %1171 = vmatpush.msra.mxu0 %v569
    %1172 = vmatpush.msra.mxu0 %v563
    %1173 = vmatpush.msra.mxu0 %v557
    %1174 = vmatpush.msra.mxu0 %v551
    %1175 = vmatpush.msra.mxu0 %v545
    %1176 = vmatpush.msra.mxu0 %v539
    %1177 = vmatmul.f32.gmra.mxu0 %v49
    %v1178 = vpop.f32.mrf.mxu0
    %v1179 = vadd.f32 %v1156, %v1178
    %1180 = vmatmul.f32.gmra.mxu0 %v55
    %v1181 = vpop.f32.mrf.mxu0
    %v1182 = vadd.f32 %v1159, %v1181
    %1183 = vdwg.mxu0
    %1184 = vmatpush.msra.mxu0 %v150
    %1185 = vmatpush.msra.mxu0 %v144
    %1186 = vmatpush.msra.mxu0 %v138
    %1187 = vmatpush.msra.mxu0 %v132
    %1188 = vmatpush.msra.mxu0 %v126
    %1189 = vmatpush.msra.mxu0 %v120
    %1190 = vmatpush.msra.mxu0 %v114
    %1191 = vmatpush.msra.mxu0 %v108
    %1192 = vmatpush.msra.mxu0 %v102
    %1193 = vmatpush.msra.mxu0 %v96
    %1194 = vmatpush.msra.mxu0 %v90
    %1195 = vmatpush.msra.mxu0 %v84
    %1196 = vmatpush.msra.mxu0 %v78
    %1197 = vmatpush.msra.mxu0 %v72
    %1198 = vmatpush.msra.mxu0 %v66
    %1199 = vmatpush.msra.mxu0 %v60
    %1200 = vmatmul.f32.gmra.mxu0 %v44
    %v1201 = vpop.f32.mrf.mxu0
    %v1202 = vadd.f32 0.0, %v1201
    %1203 = vmatmul.f32.gmra.mxu0 %v50
    %v1204 = vpop.f32.mrf.mxu0
    %v1205 = vadd.f32 0.0, %v1204
    %1206 = vdwg.mxu0
    %1207 = vmatpush.msra.mxu0 %v246
    %1208 = vmatpush.msra.mxu0 %v240
    %1209 = vmatpush.msra.mxu0 %v234
    %1210 = vmatpush.msra.mxu0 %v228
    %1211 = vmatpush.msra.mxu0 %v222
    %1212 = vmatpush.msra.mxu0 %v216
    %1213 = vmatpush.msra.mxu0 %v210
    %1214 = vmatpush.msra.mxu0 %v204
    %1215 = vmatpush.msra.mxu0 %v198
    %1216 = vmatpush.msra.mxu0 %v192
    %1217 = vmatpush.msra.mxu0 %v186
    %1218 = vmatpush.msra.mxu0 %v180
    %1219 = vmatpush.msra.mxu0 %v174
    %1220 = vmatpush.msra.mxu0 %v168
    %1221 = vmatpush.msra.mxu0 %v162
    %1222 = vmatpush.msra.mxu0 %v156
    %1223 = vmatmul.f32.gmra.mxu0 %v45
    %v1224 = vpop.f32.mrf.mxu0
    %v1225 = vadd.f32 %v1202, %v1224
    %1226 = vmatmul.f32.gmra.mxu0 %v51
    %v1227 = vpop.f32.mrf.mxu0
    %v1228 = vadd.f32 %v1205, %v1227
    %1229 = vdwg.mxu0
    %1230 = vmatpush.msra.mxu0 %v342
    %1231 = vmatpush.msra.mxu0 %v336
    %1232 = vmatpush.msra.mxu0 %v330
    %1233 = vmatpush.msra.mxu0 %v324
    %1234 = vmatpush.msra.mxu0 %v318
    %1235 = vmatpush.msra.mxu0 %v312
    %1236 = vmatpush.msra.mxu0 %v306
    %1237 = vmatpush.msra.mxu0 %v300
    %1238 = vmatpush.msra.mxu0 %v294
    %1239 = vmatpush.msra.mxu0 %v288
    %1240 = vmatpush.msra.mxu0 %v282
    %1241 = vmatpush.msra.mxu0 %v276
    %1242 = vmatpush.msra.mxu0 %v270
    %1243 = vmatpush.msra.mxu0 %v264
    %1244 = vmatpush.msra.mxu0 %v258
    %1245 = vmatpush.msra.mxu0 %v252
    %1246 = vmatmul.f32.gmra.mxu0 %v46
    %v1247 = vpop.f32.mrf.mxu0
    %v1248 = vadd.f32 %v1225, %v1247
    %1249 = vmatmul.f32.gmra.mxu0 %v52
    %v1250 = vpop.f32.mrf.mxu0
    %v1251 = vadd.f32 %v1228, %v1250
    %1252 = vdwg.mxu0
    %1253 = vmatpush.msra.mxu0 %v438
    %1254 = vmatpush.msra.mxu0 %v432
    %1255 = vmatpush.msra.mxu0 %v426
    %1256 = vmatpush.msra.mxu0 %v420
    %1257 = vmatpush.msra.mxu0 %v414
    %1258 = vmatpush.msra.mxu0 %v408
    %1259 = vmatpush.msra.mxu0 %v402
    %1260 = vmatpush.msra.mxu0 %v396
    %1261 = vmatpush.msra.mxu0 %v390
    %1262 = vmatpush.msra.mxu0 %v384
    %1263 = vmatpush.msra.mxu0 %v378
    %1264 = vmatpush.msra.mxu0 %v372
    %1265 = vmatpush.msra.mxu0 %v366
    %1266 = vmatpush.msra.mxu0 %v360
    %1267 = vmatpush.msra.mxu0 %v354
    %1268 = vmatpush.msra.mxu0 %v348
    %1269 = vmatmul.f32.gmra.mxu0 %v47
    %v1270 = vpop.f32.mrf.mxu0
    %v1271 = vadd.f32 %v1248, %v1270
    %1272 = vmatmul.f32.gmra.mxu0 %v53
    %v1273 = vpop.f32.mrf.mxu0
    %v1274 = vadd.f32 %v1251, %v1273
    %1275 = vdwg.mxu0
    %1276 = vmatpush.msra.mxu0 %v534
    %1277 = vmatpush.msra.mxu0 %v528
    %1278 = vmatpush.msra.mxu0 %v522
    %1279 = vmatpush.msra.mxu0 %v516
    %1280 = vmatpush.msra.mxu0 %v510
    %1281 = vmatpush.msra.mxu0 %v504
    %1282 = vmatpush.msra.mxu0 %v498
    %1283 = vmatpush.msra.mxu0 %v492
    %1284 = vmatpush.msra.mxu0 %v486
    %1285 = vmatpush.msra.mxu0 %v480
    %1286 = vmatpush.msra.mxu0 %v474
    %1287 = vmatpush.msra.mxu0 %v468
    %1288 = vmatpush.msra.mxu0 %v462
    %1289 = vmatpush.msra.mxu0 %v456
    %1290 = vmatpush.msra.mxu0 %v450
    %1291 = vmatpush.msra.mxu0 %v444
    %1292 = vmatmul.f32.gmra.mxu0 %v48
    %v1293 = vpop.f32.mrf.mxu0
    %v1294 = vadd.f32 %v1271, %v1293
    %1295 = vmatmul.f32.gmra.mxu0 %v54
    %v1296 = vpop.f32.mrf.mxu0
    %v1297 = vadd.f32 %v1274, %v1296
    %1298 = vdwg.mxu0
    %1299 = vmatpush.msra.mxu0 %v630
    %1300 = vmatpush.msra.mxu0 %v624
    %1301 = vmatpush.msra.mxu0 %v618
    %1302 = vmatpush.msra.mxu0 %v612
    %1303 = vmatpush.msra.mxu0 %v606
    %1304 = vmatpush.msra.mxu0 %v600
    %1305 = vmatpush.msra.mxu0 %v594
    %1306 = vmatpush.msra.mxu0 %v588
    %1307 = vmatpush.msra.mxu0 %v582
    %1308 = vmatpush.msra.mxu0 %v576
    %1309 = vmatpush.msra.mxu0 %v570
    %1310 = vmatpush.msra.mxu0 %v564
    %1311 = vmatpush.msra.mxu0 %v558
    %1312 = vmatpush.msra.mxu0 %v552
    %1313 = vmatpush.msra.mxu0 %v546
    %1314 = vmatpush.msra.mxu0 %v540
    %1315 = vmatmul.f32.gmra.mxu0 %v49
    %v1316 = vpop.f32.mrf.mxu0
    %v1317 = vadd.f32 %v1294, %v1316
    %1318 = vmatmul.f32.gmra.mxu0 %v55
    %v1319 = vpop.f32.mrf.mxu0
    %v1320 = vadd.f32 %v1297, %v1319
    %1321 = vdwg.mxu0
    %1322 = vmatpush.msra.mxu0 %v151
    %1323 = vmatpush.msra.mxu0 %v145
    %1324 = vmatpush.msra.mxu0 %v139
    %1325 = vmatpush.msra.mxu0 %v133
    %1326 = vmatpush.msra.mxu0 %v127
    %1327 = vmatpush.msra.mxu0 %v121
    %1328 = vmatpush.msra.mxu0 %v115
    %1329 = vmatpush.msra.mxu0 %v109
    %1330 = vmatpush.msra.mxu0 %v103
    %1331 = vmatpush.msra.mxu0 %v97
    %1332 = vmatpush.msra.mxu0 %v91
    %1333 = vmatpush.msra.mxu0 %v85
    %1334 = vmatpush.msra.mxu0 %v79
    %1335 = vmatpush.msra.mxu0 %v73
    %1336 = vmatpush.msra.mxu0 %v67
    %1337 = vmatpush.msra.mxu0 %v61
    %1338 = vmatmul.f32.gmra.mxu0 %v44
    %v1339 = vpop.f32.mrf.mxu0
    %v1340 = vadd.f32 0.0, %v1339
    %1341 = vmatmul.f32.gmra.mxu0 %v50
    %v1342 = vpop.f32.mrf.mxu0
    %v1343 = vadd.f32 0.0, %v1342
    %1344 = vdwg.mxu0
    %1345 = vmatpush.msra.mxu0 %v247
    %1346 = vmatpush.msra.mxu0 %v241
    %1347 = vmatpush.msra.mxu0 %v235
    %1348 = vmatpush.msra.mxu0 %v229
    %1349 = vmatpush.msra.mxu0 %v223
    %1350 = vmatpush.msra.mxu0 %v217
    %1351 = vmatpush.msra.mxu0 %v211
    %1352 = vmatpush.msra.mxu0 %v205
    %1353 = vmatpush.msra.mxu0 %v199
    %1354 = vmatpush.msra.mxu0 %v193
    %1355 = vmatpush.msra.mxu0 %v187
    %1356 = vmatpush.msra.mxu0 %v181
    %1357 = vmatpush.msra.mxu0 %v175
    %1358 = vmatpush.msra.mxu0 %v169
    %1359 = vmatpush.msra.mxu0 %v163
    %1360 = vmatpush.msra.mxu0 %v157
    %1361 = vmatmul.f32.gmra.mxu0 %v45
    %v1362 = vpop.f32.mrf.mxu0
    %v1363 = vadd.f32 %v1340, %v1362
    %1364 = vmatmul.f32.gmra.mxu0 %v51
    %v1365 = vpop.f32.mrf.mxu0
    %v1366 = vadd.f32 %v1343, %v1365
    %1367 = vdwg.mxu0
    %1368 = vmatpush.msra.mxu0 %v343
    %1369 = vmatpush.msra.mxu0 %v337
    %1370 = vmatpush.msra.mxu0 %v331
    %1371 = vmatpush.msra.mxu0 %v325
    %1372 = vmatpush.msra.mxu0 %v319
    %1373 = vmatpush.msra.mxu0 %v313
    %1374 = vmatpush.msra.mxu0 %v307
    %1375 = vmatpush.msra.mxu0 %v301
    %1376 = vmatpush.msra.mxu0 %v295
    %1377 = vmatpush.msra.mxu0 %v289
    %1378 = vmatpush.msra.mxu0 %v283
    %1379 = vmatpush.msra.mxu0 %v277
    %1380 = vmatpush.msra.mxu0 %v271
    %1381 = vmatpush.msra.mxu0 %v265
    %1382 = vmatpush.msra.mxu0 %v259
    %1383 = vmatpush.msra.mxu0 %v253
    %1384 = vmatmul.f32.gmra.mxu0 %v46
    %v1385 = vpop.f32.mrf.mxu0
    %v1386 = vadd.f32 %v1363, %v1385
    %1387 = vmatmul.f32.gmra.mxu0 %v52
    %v1388 = vpop.f32.mrf.mxu0
    %v1389 = vadd.f32 %v1366, %v1388
    %1390 = vdwg.mxu0
    %1391 = vmatpush.msra.mxu0 %v439
    %1392 = vmatpush.msra.mxu0 %v433
    %1393 = vmatpush.msra.mxu0 %v427
    %1394 = vmatpush.msra.mxu0 %v421
    %1395 = vmatpush.msra.mxu0 %v415
    %1396 = vmatpush.msra.mxu0 %v409
    %1397 = vmatpush.msra.mxu0 %v403
    %1398 = vmatpush.msra.mxu0 %v397
    %1399 = vmatpush.msra.mxu0 %v391
    %1400 = vmatpush.msra.mxu0 %v385
    %1401 = vmatpush.msra.mxu0 %v379
    %1402 = vmatpush.msra.mxu0 %v373
    %1403 = vmatpush.msra.mxu0 %v367
    %1404 = vmatpush.msra.mxu0 %v361
    %1405 = vmatpush.msra.mxu0 %v355
    %1406 = vmatpush.msra.mxu0 %v349
    %1407 = vmatmul.f32.gmra.mxu0 %v47
    %v1408 = vpop.f32.mrf.mxu0
    %v1409 = vadd.f32 %v1386, %v1408
    %1410 = vmatmul.f32.gmra.mxu0 %v53
    %v1411 = vpop.f32.mrf.mxu0
    %v1412 = vadd.f32 %v1389, %v1411
    %1413 = vdwg.mxu0
    %1414 = vmatpush.msra.mxu0 %v535
    %1415 = vmatpush.msra.mxu0 %v529
    %1416 = vmatpush.msra.mxu0 %v523
    %1417 = vmatpush.msra.mxu0 %v517
    %1418 = vmatpush.msra.mxu0 %v511
    %1419 = vmatpush.msra.mxu0 %v505
    %1420 = vmatpush.msra.mxu0 %v499
    %1421 = vmatpush.msra.mxu0 %v493
    %1422 = vmatpush.msra.mxu0 %v487
    %1423 = vmatpush.msra.mxu0 %v481
    %1424 = vmatpush.msra.mxu0 %v475
    %1425 = vmatpush.msra.mxu0 %v469
    %1426 = vmatpush.msra.mxu0 %v463
    %1427 = vmatpush.msra.mxu0 %v457
    %1428 = vmatpush.msra.mxu0 %v451
    %1429 = vmatpush.msra.mxu0 %v445
    %1430 = vmatmul.f32.gmra.mxu0 %v48
    %v1431 = vpop.f32.mrf.mxu0
    %v1432 = vadd.f32 %v1409, %v1431
    %1433 = vmatmul.f32.gmra.mxu0 %v54
    %v1434 = vpop.f32.mrf.mxu0
    %v1435 = vadd.f32 %v1412, %v1434
    %1436 = vdwg.mxu0
    %1437 = vmatpush.msra.mxu0 %v631
    %1438 = vmatpush.msra.mxu0 %v625
    %1439 = vmatpush.msra.mxu0 %v619
    %1440 = vmatpush.msra.mxu0 %v613
    %1441 = vmatpush.msra.mxu0 %v607
    %1442 = vmatpush.msra.mxu0 %v601
    %1443 = vmatpush.msra.mxu0 %v595
    %1444 = vmatpush.msra.mxu0 %v589
    %1445 = vmatpush.msra.mxu0 %v583
    %1446 = vmatpush.msra.mxu0 %v577
    %1447 = vmatpush.msra.mxu0 %v571
    %1448 = vmatpush.msra.mxu0 %v565
    %1449 = vmatpush.msra.mxu0 %v559
    %1450 = vmatpush.msra.mxu0 %v553
    %1451 = vmatpush.msra.mxu0 %v547
    %1452 = vmatpush.msra.mxu0 %v541
    %1453 = vmatmul.f32.gmra.mxu0 %v49
    %v1454 = vpop.f32.mrf.mxu0
    %v1455 = vadd.f32 %v1432, %v1454
    %1456 = vmatmul.f32.gmra.mxu0 %v55
    %v1457 = vpop.f32.mrf.mxu0
    %v1458 = vadd.f32 %v1435, %v1457
    %1459 = vdwg.mxu0
    %1460 = vst [vmem:[#allocation7] sm:$0xff] %v765
    %1461 = vst [vmem:[#allocation7 + $0x8] sm:$0xff] %v903
    %1462 = vst [vmem:[#allocation7 + $0x10] sm:$0xff] %v1041
    %1463 = vst [vmem:[#allocation7 + $0x18] sm:$0xff] %v1179
    %1464 = vst [vmem:[#allocation7 + $0x20] sm:$0xff] %v1317
    %1465 = vst [vmem:[#allocation7 + $0x28] sm:$0xff] %v1455
    %1466 = vst [vmem:[#allocation7 + $0x30] sm:$0xff] %v768
    %1467 = vst [vmem:[#allocation7 + $0x38] sm:$0xff] %v906
    %1468 = vst [vmem:[#allocation7 + $0x40] sm:$0xff] %v1044
    %1469 = vst [vmem:[#allocation7 + $0x48] sm:$0xff] %v1182
    %1470 = vst [vmem:[#allocation7 + $0x50] sm:$0xff] %v1320
    %1471 = vst [vmem:[#allocation7 + $0x58] sm:$0xff] %v1458
    // Predicated region
    $region18: #{tpu_custom_call.1} parent=1 // pred_check
      _
    $region19: #{tpu_custom_call.1} parent=1 // pred_check_branch
      %1473 = sbr.rel (0) target = $region21
    $region20: #{tpu_custom_call.1} parent=1 // pred_region
      %1475 = vsyncadd [#allocation4], 0
      %s1476 = sshll.u32 [#allocation7], 4
      %s1477 = int_to_ptr.vmem [resolvable:$true] %s1476
      %s1478 = sshll.u32 %s2, 4
      %s1479 = int_to_ptr.hbm [resolvable:$true] %s1478
      %1484 = dma.vmem_to_hbm [thread:$0]  %s1477, 1536, %s1479, [#allocation4], 768, 768, 48
    $region21: #{tpu_custom_call.1} parent=1 // pred_fallthru
      _
    // Predicated region
    $region22: #{tpu_custom_call.1} parent=1 // pred_check
      _
    $region23: #{tpu_custom_call.1} parent=1 // pred_check_branch
      %1486 = sbr.rel (0) target = $region25
    $region24: #{tpu_custom_call.1} parent=1 // pred_region
      %1488 = dma.done [#allocation4], 1536
    $region25: #{tpu_custom_call.1} parent=1 // pred_fallthru
      _
    %1489 = vsyncpa [#allocation3], 1
    %1490 = vsyncpa [#allocation6], 1
    %1491 = vsyncpa [#allocation4], 1

</llo_original>
